<compile_context>
chip_gen: v5e
topology: v5e:2x2
jax: 0.10.0
libtpu: 0.0.40
codegen_flags: <defaults>
</compile_context>

<pallas_src>
import jax
import jax.numpy as jnp
from jax.experimental import pallas as pl
from jax.experimental.pallas import tpu as pltpu

# ---- model config (rubert-tiny style, small synthetic vocab/seq) ----
B, S = 2, 8              # batch, sequence length
D = 312                  # real hidden size (D_in of classifier)
NH, HD = 12, 26          # heads, real head dim (12 * 26 = 312)
FF = 600                 # real intermediate size
NL = 3                   # encoder layers
H_CLS, D_OUT = 32, 2     # classifier hidden / num labels
VOCAB, MAXPOS, NTYPES = 100, 64, 2
LN_EPS = 1e-12

# lane-dense padded sizes
DP = 384                 # 3 * 128 == NH * HDP
HDP = 32
FFP = 640                # 5 * 128
BS = B * S

NHD = NH * HDP           # 384  (concatenated padded heads)
QKV_W = 3 * NHD          # 1152 columns of the fused QKV weight
WA_COLS = QKV_W + DP + FFP   # 2176 = Wqkv | Wo | W1 slab width


def _gelu(x):
    # TODO(synk): HF 'gelu' is erf-based; tanh approximation used here.
    c = 0.7978845608028654
    return 0.5 * x * (1.0 + jnp.tanh(c * (x + 0.044715 * x * x * x)))


def _masked_layer_norm(x, g, b, dmask):
    # LayerNorm over the real D features of a lane-padded (rows, DP) tensor
    # whose padded lanes are zero; keeps padded lanes at zero (g, b are
    # zero-padded).
    mu = jnp.sum(x, axis=-1, keepdims=True) * (1.0 / D)
    diff = (x - mu) * dmask
    var = jnp.sum(diff * diff, axis=-1, keepdims=True) * (1.0 / D)
    return diff * jax.lax.rsqrt(var + LN_EPS) * g + b


# ----------------------- fused Pallas kernel -----------------------

def fused_bert_kernel(x0_ref, mask_ref, wa_ref, w2_ref, bias_ref,
                      cls1_ref, cls2_ref, out_ref, x_sc):
    l = pl.program_id(0)

    @pl.when(l == 0)
    def _():
        x_sc[...] = x0_ref[...]                      # embeddings -> resident x

    x = x_sc[...]                                    # (BS, DP) f32, padded lanes zero
    xb = x.astype(jnp.bfloat16)

    # ---- fused QKV projection: one (BS, DP) x (DP, 3*NH*HDP) GEMM ----
    qkv = jnp.dot(xb, wa_ref[:, 0:QKV_W],
                  preferred_element_type=jnp.float32) + bias_ref[0:1, :]

    def split_heads(base):                           # (BS, NHD) lanes -> (NH, BS, HDP)
        return jnp.stack(
            [qkv[:, base + n * HDP: base + (n + 1) * HDP] for n in range(NH)],
            axis=0)

    qh = split_heads(0)                              # 1/sqrt(HD) folded into Wq/bq
    kh = split_heads(NHD)
    vh = split_heads(2 * NHD)

    # ---- scores & softmax, batched over all NH heads and all BS tokens ----
    s = jnp.einsum('nqh,nkh->nqk', qh, kh,
                   preferred_element_type=jnp.float32)          # (NH, BS, BS)
    s = s + mask_ref[...]                            # batch-block + key-pad mask
    s = s - jnp.max(s, axis=-1, keepdims=True)
    p = jnp.exp(s)
    p = p * pl.reciprocal(jnp.sum(p, axis=-1, keepdims=True), approx=True)

    ctx = jnp.einsum('nqk,nkh->nqh', p, vh,
                     preferred_element_type=jnp.float32)        # (NH, BS, HDP)

    # back to token-major (BS, NH*HDP) lanes and fused output projection
    ctx_tok = jnp.concatenate([ctx[n] for n in range(NH)], axis=-1)
    attn = jnp.dot(ctx_tok.astype(jnp.bfloat16), wa_ref[:, QKV_W:QKV_W + DP],
                   preferred_element_type=jnp.float32) + bias_ref[1:2, 0:DP]

    lane = jax.lax.broadcasted_iota(jnp.int32, (1, DP), 1)
    dmask = (lane < D).astype(jnp.float32)           # mask of real hidden dims

    h1 = _masked_layer_norm(x + attn, bias_ref[2:3, 0:DP], bias_ref[3:4, 0:DP],
                            dmask)

    # ---- feed-forward ----
    ff = jnp.dot(h1.astype(jnp.bfloat16), wa_ref[:, QKV_W + DP:WA_COLS],
                 preferred_element_type=jnp.float32) + bias_ref[4:5, 0:FFP]
    ff = _gelu(ff)
    ff = jnp.dot(ff.astype(jnp.bfloat16), w2_ref[...],
                 preferred_element_type=jnp.float32) + bias_ref[5:6, 0:DP]
    xo = _masked_layer_norm(h1 + ff, bias_ref[6:7, 0:DP], bias_ref[7:8, 0:DP],
                            dmask)

    x_sc[...] = xo                                   # carry to next layer

    # ---- classifier head, fused into the last layer ----
    @pl.when(l == NL - 1)
    def _():
        cls = xo.reshape(B, S, DP)[:, 0, :]          # (B, DP) [CLS] rows
        h = jnp.dot(cls, cls1_ref[0:DP, :],
                    preferred_element_type=jnp.float32) + cls1_ref[DP:DP + 1, :]
        h = jnp.maximum(h, 0.0)                      # ReLU
        out_ref[...] = (jnp.dot(h, cls2_ref[0:H_CLS, :],
                                preferred_element_type=jnp.float32)
                        + cls2_ref[H_CLS:H_CLS + 1, :])


# ----------------------- pallas_call wrapper -----------------------

def run_fused_bert(x0, addmask, params):
    in_specs = [
        pl.BlockSpec((BS, DP), lambda l: (0, 0)),                 # embeddings
        pl.BlockSpec((1, BS, BS), lambda l: (0, 0, 0)),           # additive mask
        pl.BlockSpec((None, DP, WA_COLS), lambda l: (l, 0, 0)),   # {Wqkv|Wo|W1} slab
        pl.BlockSpec((None, FFP, DP), lambda l: (l, 0, 0)),       # W2
        pl.BlockSpec((None, 8, QKV_W), lambda l: (l, 0, 0)),      # biases / LN rows
        pl.BlockSpec((DP + 8, H_CLS), lambda l: (0, 0)),          # cls W1|b1
        pl.BlockSpec((H_CLS + 8, D_OUT), lambda l: (0, 0)),       # cls W2|b2
    ]
    return pl.pallas_call(
        fused_bert_kernel,
        out_shape=jax.ShapeDtypeStruct((B, D_OUT), jnp.float32),
        grid=(NL,),
        in_specs=in_specs,
        out_specs=pl.BlockSpec((B, D_OUT), lambda l: (0, 0)),
        scratch_shapes=[pltpu.VMEM((BS, DP), jnp.float32)],       # resident activations
        compiler_params=pltpu.CompilerParams(
            dimension_semantics=("arbitrary",),                   # layers are sequential
            vmem_limit_bytes=32 * 1024 * 1024),
    )(x0, addmask, params["wa"], params["w2"], params["bias"],
      params["cls1"], params["cls2"])


# ----------------------- parameters -----------------------

def _dense(key, din, dout):
    k1, k2 = jax.random.split(key)
    return (jax.random.normal(k1, (din, dout), jnp.float32) * 0.02,
            jax.random.normal(k2, (dout,), jnp.float32) * 0.02)


def init_params(key):
    keys = jax.random.split(key, 5 + NL)
    p = {
        "word_emb": jax.random.normal(keys[0], (VOCAB, D), jnp.float32) * 0.02,
        "pos_emb": jax.random.normal(keys[1], (MAXPOS, D), jnp.float32) * 0.02,
        "type_emb": jax.random.normal(keys[2], (NTYPES, D), jnp.float32) * 0.02,
        "emb_g": jnp.ones((D,), jnp.float32),
        "emb_b": jnp.zeros((D,), jnp.float32),
    }
    scale = 1.0 / (HD ** 0.5)

    def pad2(w, r, c):
        return jnp.pad(w, ((0, r - w.shape[0]), (0, c - w.shape[1])))

    def heads_cols(w):   # (D, D) -> (DP, NH*HDP): out[d, n*HDP+h] = w[d, n*HD+h]
        w3 = w.reshape(D, NH, HD)
        w3 = jnp.pad(w3, ((0, DP - D), (0, 0), (0, HDP - HD)))
        return w3.reshape(DP, NHD)

    def heads_rows(w):   # Wo (D, D) -> (NH*HDP, DP): out[n*HDP+h, d] = w[n*HD+h, d]
        w3 = w.reshape(NH, HD, D)
        w3 = jnp.pad(w3, ((0, 0), (0, HDP - HD), (0, DP - D)))
        return w3.reshape(NHD, DP)

    def heads_vec(b):    # (D,) -> (NH*HDP,)
        return jnp.pad(b.reshape(NH, HD), ((0, 0), (0, HDP - HD))).reshape(NHD)

    wa_list, w2_list, bias_list = [], [], []
    for li in range(NL):
        lk = jax.random.split(keys[3 + li], 6)
        wq, bq = _dense(lk[0], D, D)
        wk, bk = _dense(lk[1], D, D)
        wv, bv = _dense(lk[2], D, D)
        wo, bo = _dense(lk[3], D, D)
        w1, b1 = _dense(lk[4], D, FF)
        w2, b2 = _dense(lk[5], FF, D)

        # coalesced bf16 weight slab: [ Wqkv (1152) | Wo (384) | W1 (640) ]
        wqkv = jnp.concatenate([heads_cols(wq) * scale,      # fold 1/sqrt(HD) into Q
                                heads_cols(wk),
                                heads_cols(wv)], axis=1)      # (DP, 1152)
        wa = jnp.concatenate([wqkv, heads_rows(wo), pad2(w1, DP, FFP)], axis=1)
        wa_list.append(wa.astype(jnp.bfloat16))               # (DP, 2176)
        w2_list.append(pad2(w2, FFP, DP).astype(jnp.bfloat16))

        # coalesced f32 bias / LayerNorm slab, lane-dense rows (zero-padded).
        bias = jnp.zeros((8, QKV_W), jnp.float32)
        bias = bias.at[0, :].set(jnp.concatenate(
            [heads_vec(bq) * scale, heads_vec(bk), heads_vec(bv)]))
        bias = bias.at[1, :D].set(bo)
        bias = bias.at[2, :D].set(1.0)        # attn-LN gamma (real dims only)
        # row 3: attn-LN beta = 0
        bias = bias.at[4, :FF].set(b1)
        bias = bias.at[5, :D].set(b2)
        bias = bias.at[6, :D].set(1.0)        # out-LN gamma
        # row 7: out-LN beta = 0
        bias_list.append(bias)

    p["wa"] = jnp.stack(wa_list)       # (NL, DP, 2176) bf16
    p["w2"] = jnp.stack(w2_list)       # (NL, FFP, DP)  bf16
    p["bias"] = jnp.stack(bias_list)   # (NL, 8, 1152)  f32

    cw1, cb1 = _dense(keys[3 + NL], D, H_CLS)
    cw2, cb2 = _dense(keys[4 + NL], H_CLS, D_OUT)
    cls1 = jnp.zeros((DP + 8, H_CLS), jnp.float32)
    cls1 = cls1.at[:D, :].set(cw1)
    cls1 = cls1.at[DP, :].set(cb1)
    cls2 = jnp.zeros((H_CLS + 8, D_OUT), jnp.float32)
    cls2 = cls2.at[:H_CLS, :].set(cw2)
    cls2 = cls2.at[H_CLS, :].set(cb2)
    p["cls1"], p["cls2"] = cls1, cls2
    return p


# ----------------------- glue (embeddings) + forward -----------------------

def _plain_ln(x, g, b):
    mu = jnp.mean(x, axis=-1, keepdims=True)
    var = jnp.mean((x - mu) ** 2, axis=-1, keepdims=True)
    return (x - mu) * jax.lax.rsqrt(var + LN_EPS) * g + b


def bert_classifier_forward(params, input_ids, attention_mask):
    # Embedding gathers + embedding LayerNorm stay in plain JAX (glue).
    we = params["word_emb"][input_ids]                  # (B, S, D)
    pe = params["pos_emb"][:S][None, :, :]              # (1, S, D)
    te = params["type_emb"][0][None, None, :]           # (1, 1, D); token_type_ids = 0
    x = _plain_ln(we + pe + te, params["emb_g"], params["emb_b"])
    x = jnp.pad(x, ((0, 0), (0, 0), (0, DP - D))).reshape(BS, DP)   # lane-pad + flatten

    # Additive mask over flattened B*S keys: HF (1-mask)*-1e4 for padded keys
    # within the same sequence, -1e9 for cross-sequence pairs (exp -> exactly 0),
    # so the single 16x16 score block reproduces per-batch attention.
    am = attention_mask.astype(jnp.float32).reshape(BS)
    batch_id = jnp.repeat(jnp.arange(B), S)
    same = batch_id[:, None] == batch_id[None, :]
    addmask = jnp.where(same, (1.0 - am)[None, :] * -10000.0, -1.0e9)[None, :, :]

    return run_fused_bert(x, addmask, params)            # (B, D_OUT)


if __name__ == "__main__":
    key = jax.random.PRNGKey(0)
    k_param, k_ids = jax.random.split(key)
    params = init_params(k_param)

    input_ids = jax.random.randint(k_ids, (B, S), 0, VOCAB, dtype=jnp.int32)
    attention_mask = jnp.array([[1] * S,
                                [1] * (S - 2) + [0, 0]], dtype=jnp.int32)

    logits = bert_classifier_forward(params, input_ids, attention_mask)
    jax.block_until_ready(logits)
    assert logits.shape == (B, D_OUT)
    print("KERNEL_OK")
</pallas_src>

<mosaic_0001>
module attributes {stable_mosaic.version = 11 : i64} {
  func.func @fused_bert_kernel(%arg0: i32, %arg1: memref<16x384xf32, #tpu.memory_space<vmem>>, %arg2: memref<1x16x16xf32, #tpu.memory_space<vmem>>, %arg3: memref<1x384x2176xbf16, #tpu.memory_space<vmem>>, %arg4: memref<1x640x384xbf16, #tpu.memory_space<vmem>>, %arg5: memref<1x8x1152xf32, #tpu.memory_space<vmem>>, %arg6: memref<392x32xf32, #tpu.memory_space<vmem>>, %arg7: memref<40x2xf32, #tpu.memory_space<vmem>>, %arg8: memref<2x2xf32, #tpu.memory_space<vmem>>, %arg9: memref<16x384xf32, #tpu.memory_space<vmem>>) attributes {dimension_semantics = [#tpu.dimension_semantics<arbitrary>], iteration_bounds = array<i64: 3>, scalar_prefetch = 0 : i64, scratch_operands = 1 : i64, tpu.core_type = #tpu.core_type<tc>, window_params = [{pipeline_mode = #tpu.pipeline_mode<synchronous>, transform_indices = @transform_0, window_bounds = array<i64: 16, 384>}, {pipeline_mode = #tpu.pipeline_mode<synchronous>, transform_indices = @transform_1, window_bounds = array<i64: 1, 16, 16>}, {transform_indices = @transform_2, window_bounds = array<i64: 1, 384, 2176>}, {transform_indices = @transform_3, window_bounds = array<i64: 1, 640, 384>}, {transform_indices = @transform_4, window_bounds = array<i64: 1, 8, 1152>}, {pipeline_mode = #tpu.pipeline_mode<synchronous>, transform_indices = @transform_5, window_bounds = array<i64: 392, 32>}, {pipeline_mode = #tpu.pipeline_mode<synchronous>, transform_indices = @transform_6, window_bounds = array<i64: 40, 2>}, {pipeline_mode = #tpu.pipeline_mode<synchronous>, transform_indices = @transform_7, window_bounds = array<i64: 2, 2>}]} {
    %c0_i32 = arith.constant 0 : i32
    %0 = arith.cmpi eq, %arg0, %c0_i32 : i32
    %1 = arith.extui %0 : i1 to i32
    %c0_i32_0 = arith.constant 0 : i32
    %2 = arith.cmpi ne, %1, %c0_i32_0 : i32
    scf.if %2 {
      %c0_56 = arith.constant 0 : index
      %c0_57 = arith.constant 0 : index
      %227 = vector.load %arg1[%c0_56, %c0_57] : memref<16x384xf32, #tpu.memory_space<vmem>>, vector<16x384xf32>
      %c0_58 = arith.constant 0 : index
      %c0_59 = arith.constant 0 : index
      %228 = vector.load %arg9[%c0_58, %c0_59] : memref<16x384xf32, #tpu.memory_space<vmem>>, vector<16x384xf32>
      tpu.vector_store %arg9[%c0_58, %c0_59], %227 {strides = array<i32>} : memref<16x384xf32, #tpu.memory_space<vmem>>, vector<16x384xf32>,
    } else {
    }
    %c0 = arith.constant 0 : index
    %c0_1 = arith.constant 0 : index
    %3 = vector.load %arg9[%c0, %c0_1] : memref<16x384xf32, #tpu.memory_space<vmem>>, vector<16x384xf32>
    %4 = arith.truncf %3 : vector<16x384xf32> to vector<16x384xbf16>
    %c0_2 = arith.constant 0 : index
    %c0_3 = arith.constant 0 : index
    %c0_4 = arith.constant 0 : index
    %5 = vector.load %arg3[%c0_2, %c0_3, %c0_4] : memref<1x384x2176xbf16, #tpu.memory_space<vmem>>, vector<1x384x1152xbf16>
    %6 = vector.shape_cast %5 : vector<1x384x1152xbf16> to vector<384x1152xbf16>
    %cst = arith.constant dense<0.000000e+00> : vector<16x1152xf32>
    %7 = tpu.matmul %4, %6, %cst {dimension_numbers = #tpu.dot_dimension_numbers<[1], [0], [0], [1], [0, 0, 1, 1], [], []>} : vector<16x384xbf16>, vector<384x1152xbf16>, vector<16x1152xf32> -> vector<16x1152xf32>
    %c0_5 = arith.constant 0 : index
    %c0_6 = arith.constant 0 : index
    %c0_7 = arith.constant 0 : index
    %8 = vector.load %arg5[%c0_5, %c0_6, %c0_7] : memref<1x8x1152xf32, #tpu.memory_space<vmem>>, vector<1x1x1152xf32>
    %9 = vector.shape_cast %8 : vector<1x1x1152xf32> to vector<1x1152xf32>
    %10 = vector.broadcast %9 : vector<1x1152xf32> to vector<16x1152xf32>
    %11 = arith.addf %7, %10 : vector<16x1152xf32>
    %12 = vector.extract_strided_slice %11 {offsets = [0, 0], sizes = [16, 32], strides = [1, 1]} : vector<16x1152xf32> to vector<16x32xf32>
    %13 = vector.extract_strided_slice %11 {offsets = [0, 32], sizes = [16, 32], strides = [1, 1]} : vector<16x1152xf32> to vector<16x32xf32>
    %14 = vector.extract_strided_slice %11 {offsets = [0, 64], sizes = [16, 32], strides = [1, 1]} : vector<16x1152xf32> to vector<16x32xf32>
    %15 = vector.extract_strided_slice %11 {offsets = [0, 96], sizes = [16, 32], strides = [1, 1]} : vector<16x1152xf32> to vector<16x32xf32>
    %16 = vector.extract_strided_slice %11 {offsets = [0, 128], sizes = [16, 32], strides = [1, 1]} : vector<16x1152xf32> to vector<16x32xf32>
    %17 = vector.extract_strided_slice %11 {offsets = [0, 160], sizes = [16, 32], strides = [1, 1]} : vector<16x1152xf32> to vector<16x32xf32>
    %18 = vector.extract_strided_slice %11 {offsets = [0, 192], sizes = [16, 32], strides = [1, 1]} : vector<16x1152xf32> to vector<16x32xf32>
    %19 = vector.extract_strided_slice %11 {offsets = [0, 224], sizes = [16, 32], strides = [1, 1]} : vector<16x1152xf32> to vector<16x32xf32>
    %20 = vector.extract_strided_slice %11 {offsets = [0, 256], sizes = [16, 32], strides = [1, 1]} : vector<16x1152xf32> to vector<16x32xf32>
    %21 = vector.extract_strided_slice %11 {offsets = [0, 288], sizes = [16, 32], strides = [1, 1]} : vector<16x1152xf32> to vector<16x32xf32>
    %22 = vector.extract_strided_slice %11 {offsets = [0, 320], sizes = [16, 32], strides = [1, 1]} : vector<16x1152xf32> to vector<16x32xf32>
    %23 = vector.extract_strided_slice %11 {offsets = [0, 352], sizes = [16, 32], strides = [1, 1]} : vector<16x1152xf32> to vector<16x32xf32>
    %24 = vector.shape_cast %12 : vector<16x32xf32> to vector<1x16x32xf32>
    %25 = vector.shape_cast %13 : vector<16x32xf32> to vector<1x16x32xf32>
    %26 = vector.shape_cast %14 : vector<16x32xf32> to vector<1x16x32xf32>
    %27 = vector.shape_cast %15 : vector<16x32xf32> to vector<1x16x32xf32>
    %28 = vector.shape_cast %16 : vector<16x32xf32> to vector<1x16x32xf32>
    %29 = vector.shape_cast %17 : vector<16x32xf32> to vector<1x16x32xf32>
    %30 = vector.shape_cast %18 : vector<16x32xf32> to vector<1x16x32xf32>
    %31 = vector.shape_cast %19 : vector<16x32xf32> to vector<1x16x32xf32>
    %32 = vector.shape_cast %20 : vector<16x32xf32> to vector<1x16x32xf32>
    %33 = vector.shape_cast %21 : vector<16x32xf32> to vector<1x16x32xf32>
    %34 = vector.shape_cast %22 : vector<16x32xf32> to vector<1x16x32xf32>
    %35 = vector.shape_cast %23 : vector<16x32xf32> to vector<1x16x32xf32>
    %36 = tpu.concatenate %24, %25, %26, %27, %28, %29, %30, %31, %32, %33, %34, %35 in 0 : vector<1x16x32xf32>, vector<1x16x32xf32>, vector<1x16x32xf32>, vector<1x16x32xf32>, vector<1x16x32xf32>, vector<1x16x32xf32>, vector<1x16x32xf32>, vector<1x16x32xf32>, vector<1x16x32xf32>, vector<1x16x32xf32>, vector<1x16x32xf32>, vector<1x16x32xf32> -> vector<12x16x32xf32>
    %37 = vector.extract_strided_slice %11 {offsets = [0, 384], sizes = [16, 32], strides = [1, 1]} : vector<16x1152xf32> to vector<16x32xf32>
    %38 = vector.extract_strided_slice %11 {offsets = [0, 416], sizes = [16, 32], strides = [1, 1]} : vector<16x1152xf32> to vector<16x32xf32>
    %39 = vector.extract_strided_slice %11 {offsets = [0, 448], sizes = [16, 32], strides = [1, 1]} : vector<16x1152xf32> to vector<16x32xf32>
    %40 = vector.extract_strided_slice %11 {offsets = [0, 480], sizes = [16, 32], strides = [1, 1]} : vector<16x1152xf32> to vector<16x32xf32>
    %41 = vector.extract_strided_slice %11 {offsets = [0, 512], sizes = [16, 32], strides = [1, 1]} : vector<16x1152xf32> to vector<16x32xf32>
    %42 = vector.extract_strided_slice %11 {offsets = [0, 544], sizes = [16, 32], strides = [1, 1]} : vector<16x1152xf32> to vector<16x32xf32>
    %43 = vector.extract_strided_slice %11 {offsets = [0, 576], sizes = [16, 32], strides = [1, 1]} : vector<16x1152xf32> to vector<16x32xf32>
    %44 = vector.extract_strided_slice %11 {offsets = [0, 608], sizes = [16, 32], strides = [1, 1]} : vector<16x1152xf32> to vector<16x32xf32>
    %45 = vector.extract_strided_slice %11 {offsets = [0, 640], sizes = [16, 32], strides = [1, 1]} : vector<16x1152xf32> to vector<16x32xf32>
    %46 = vector.extract_strided_slice %11 {offsets = [0, 672], sizes = [16, 32], strides = [1, 1]} : vector<16x1152xf32> to vector<16x32xf32>
    %47 = vector.extract_strided_slice %11 {offsets = [0, 704], sizes = [16, 32], strides = [1, 1]} : vector<16x1152xf32> to vector<16x32xf32>
    %48 = vector.extract_strided_slice %11 {offsets = [0, 736], sizes = [16, 32], strides = [1, 1]} : vector<16x1152xf32> to vector<16x32xf32>
    %49 = vector.shape_cast %37 : vector<16x32xf32> to vector<1x16x32xf32>
    %50 = vector.shape_cast %38 : vector<16x32xf32> to vector<1x16x32xf32>
    %51 = vector.shape_cast %39 : vector<16x32xf32> to vector<1x16x32xf32>
    %52 = vector.shape_cast %40 : vector<16x32xf32> to vector<1x16x32xf32>
    %53 = vector.shape_cast %41 : vector<16x32xf32> to vector<1x16x32xf32>
    %54 = vector.shape_cast %42 : vector<16x32xf32> to vector<1x16x32xf32>
    %55 = vector.shape_cast %43 : vector<16x32xf32> to vector<1x16x32xf32>
    %56 = vector.shape_cast %44 : vector<16x32xf32> to vector<1x16x32xf32>
    %57 = vector.shape_cast %45 : vector<16x32xf32> to vector<1x16x32xf32>
    %58 = vector.shape_cast %46 : vector<16x32xf32> to vector<1x16x32xf32>
    %59 = vector.shape_cast %47 : vector<16x32xf32> to vector<1x16x32xf32>
    %60 = vector.shape_cast %48 : vector<16x32xf32> to vector<1x16x32xf32>
    %61 = tpu.concatenate %49, %50, %51, %52, %53, %54, %55, %56, %57, %58, %59, %60 in 0 : vector<1x16x32xf32>, vector<1x16x32xf32>, vector<1x16x32xf32>, vector<1x16x32xf32>, vector<1x16x32xf32>, vector<1x16x32xf32>, vector<1x16x32xf32>, vector<1x16x32xf32>, vector<1x16x32xf32>, vector<1x16x32xf32>, vector<1x16x32xf32>, vector<1x16x32xf32> -> vector<12x16x32xf32>
    %62 = vector.extract_strided_slice %11 {offsets = [0, 768], sizes = [16, 32], strides = [1, 1]} : vector<16x1152xf32> to vector<16x32xf32>
    %63 = vector.extract_strided_slice %11 {offsets = [0, 800], sizes = [16, 32], strides = [1, 1]} : vector<16x1152xf32> to vector<16x32xf32>
    %64 = vector.extract_strided_slice %11 {offsets = [0, 832], sizes = [16, 32], strides = [1, 1]} : vector<16x1152xf32> to vector<16x32xf32>
    %65 = vector.extract_strided_slice %11 {offsets = [0, 864], sizes = [16, 32], strides = [1, 1]} : vector<16x1152xf32> to vector<16x32xf32>
    %66 = vector.extract_strided_slice %11 {offsets = [0, 896], sizes = [16, 32], strides = [1, 1]} : vector<16x1152xf32> to vector<16x32xf32>
    %67 = vector.extract_strided_slice %11 {offsets = [0, 928], sizes = [16, 32], strides = [1, 1]} : vector<16x1152xf32> to vector<16x32xf32>
    %68 = vector.extract_strided_slice %11 {offsets = [0, 960], sizes = [16, 32], strides = [1, 1]} : vector<16x1152xf32> to vector<16x32xf32>
    %69 = vector.extract_strided_slice %11 {offsets = [0, 992], sizes = [16, 32], strides = [1, 1]} : vector<16x1152xf32> to vector<16x32xf32>
    %70 = vector.extract_strided_slice %11 {offsets = [0, 1024], sizes = [16, 32], strides = [1, 1]} : vector<16x1152xf32> to vector<16x32xf32>
    %71 = vector.extract_strided_slice %11 {offsets = [0, 1056], sizes = [16, 32], strides = [1, 1]} : vector<16x1152xf32> to vector<16x32xf32>
    %72 = vector.extract_strided_slice %11 {offsets = [0, 1088], sizes = [16, 32], strides = [1, 1]} : vector<16x1152xf32> to vector<16x32xf32>
    %73 = vector.extract_strided_slice %11 {offsets = [0, 1120], sizes = [16, 32], strides = [1, 1]} : vector<16x1152xf32> to vector<16x32xf32>
    %74 = vector.shape_cast %62 : vector<16x32xf32> to vector<1x16x32xf32>
    %75 = vector.shape_cast %63 : vector<16x32xf32> to vector<1x16x32xf32>
    %76 = vector.shape_cast %64 : vector<16x32xf32> to vector<1x16x32xf32>
    %77 = vector.shape_cast %65 : vector<16x32xf32> to vector<1x16x32xf32>
    %78 = vector.shape_cast %66 : vector<16x32xf32> to vector<1x16x32xf32>
    %79 = vector.shape_cast %67 : vector<16x32xf32> to vector<1x16x32xf32>
    %80 = vector.shape_cast %68 : vector<16x32xf32> to vector<1x16x32xf32>
    %81 = vector.shape_cast %69 : vector<16x32xf32> to vector<1x16x32xf32>
    %82 = vector.shape_cast %70 : vector<16x32xf32> to vector<1x16x32xf32>
    %83 = vector.shape_cast %71 : vector<16x32xf32> to vector<1x16x32xf32>
    %84 = vector.shape_cast %72 : vector<16x32xf32> to vector<1x16x32xf32>
    %85 = vector.shape_cast %73 : vector<16x32xf32> to vector<1x16x32xf32>
    %86 = tpu.concatenate %74, %75, %76, %77, %78, %79, %80, %81, %82, %83, %84, %85 in 0 : vector<1x16x32xf32>, vector<1x16x32xf32>, vector<1x16x32xf32>, vector<1x16x32xf32>, vector<1x16x32xf32>, vector<1x16x32xf32>, vector<1x16x32xf32>, vector<1x16x32xf32>, vector<1x16x32xf32>, vector<1x16x32xf32>, vector<1x16x32xf32>, vector<1x16x32xf32> -> vector<12x16x32xf32>
    "tpu.trace_start"() <{level = 10 : i32, message = "nqh,nkh->nqk"}> : () -> ()
    %cst_8 = arith.constant dense<0.000000e+00> : vector<12x16x16xf32>
    %87 = tpu.matmul %36, %61, %cst_8 {dimension_numbers = #tpu.dot_dimension_numbers<[2], [2], [1], [1], [0, 0, 0, 1, 1, 1], [0], [0]>} : vector<12x16x32xf32>, vector<12x16x32xf32>, vector<12x16x16xf32> -> vector<12x16x16xf32>
    "tpu.trace_stop"() : () -> ()
    %c0_9 = arith.constant 0 : index
    %c0_10 = arith.constant 0 : index
    %c0_11 = arith.constant 0 : index
    %88 = vector.load %arg2[%c0_9, %c0_10, %c0_11] : memref<1x16x16xf32, #tpu.memory_space<vmem>>, vector<1x16x16xf32>
    %89 = vector.broadcast %88 : vector<1x16x16xf32> to vector<12x16x16xf32>
    %90 = arith.addf %87, %89 : vector<12x16x16xf32>
    %cst_12 = arith.constant dense<0xFF800000> : vector<12x16xf32>
    %91 = vector.multi_reduction <maximumf>, %90, %cst_12 [2] : vector<12x16x16xf32> to vector<12x16xf32>
    %92 = vector.shape_cast %91 : vector<12x16xf32> to vector<12x16x1xf32>
    %93 = vector.broadcast %92 : vector<12x16x1xf32> to vector<12x16x16xf32>
    %94 = arith.subf %90, %93 : vector<12x16x16xf32>
    %95 = math.exp %94 : vector<12x16x16xf32>
    %cst_13 = arith.constant dense<0.000000e+00> : vector<12x16xf32>
    %96 = vector.multi_reduction <add>, %95, %cst_13 [2] : vector<12x16x16xf32> to vector<12x16xf32>
    %97 = vector.shape_cast %96 : vector<12x16xf32> to vector<12x16x1xf32>
    %98 = tpu.reciprocal %97 {approx = true} : vector<12x16x1xf32> -> vector<12x16x1xf32>
    %99 = vector.broadcast %98 : vector<12x16x1xf32> to vector<12x16x16xf32>
    %100 = arith.mulf %95, %99 : vector<12x16x16xf32>
    "tpu.trace_start"() <{level = 10 : i32, message = "nqk,nkh->nqh"}> : () -> ()
    %cst_14 = arith.constant dense<0.000000e+00> : vector<12x16x32xf32>
    %101 = tpu.matmul %100, %86, %cst_14 {dimension_numbers = #tpu.dot_dimension_numbers<[2], [1], [1], [2], [0, 0, 0, 1, 1, 2], [0], [0]>} : vector<12x16x16xf32>, vector<12x16x32xf32>, vector<12x16x32xf32> -> vector<12x16x32xf32>
    "tpu.trace_stop"() : () -> ()
    %102 = vector.extract_strided_slice %101 {offsets = [0, 0, 0], sizes = [1, 16, 32], strides = [1, 1, 1]} : vector<12x16x32xf32> to vector<1x16x32xf32>
    %103 = vector.shape_cast %102 : vector<1x16x32xf32> to vector<16x32xf32>
    %104 = vector.extract_strided_slice %101 {offsets = [1, 0, 0], sizes = [1, 16, 32], strides = [1, 1, 1]} : vector<12x16x32xf32> to vector<1x16x32xf32>
    %105 = vector.shape_cast %104 : vector<1x16x32xf32> to vector<16x32xf32>
    %106 = vector.extract_strided_slice %101 {offsets = [2, 0, 0], sizes = [1, 16, 32], strides = [1, 1, 1]} : vector<12x16x32xf32> to vector<1x16x32xf32>
    %107 = vector.shape_cast %106 : vector<1x16x32xf32> to vector<16x32xf32>
    %108 = vector.extract_strided_slice %101 {offsets = [3, 0, 0], sizes = [1, 16, 32], strides = [1, 1, 1]} : vector<12x16x32xf32> to vector<1x16x32xf32>
    %109 = vector.shape_cast %108 : vector<1x16x32xf32> to vector<16x32xf32>
    %110 = vector.extract_strided_slice %101 {offsets = [4, 0, 0], sizes = [1, 16, 32], strides = [1, 1, 1]} : vector<12x16x32xf32> to vector<1x16x32xf32>
    %111 = vector.shape_cast %110 : vector<1x16x32xf32> to vector<16x32xf32>
    %112 = vector.extract_strided_slice %101 {offsets = [5, 0, 0], sizes = [1, 16, 32], strides = [1, 1, 1]} : vector<12x16x32xf32> to vector<1x16x32xf32>
    %113 = vector.shape_cast %112 : vector<1x16x32xf32> to vector<16x32xf32>
    %114 = vector.extract_strided_slice %101 {offsets = [6, 0, 0], sizes = [1, 16, 32], strides = [1, 1, 1]} : vector<12x16x32xf32> to vector<1x16x32xf32>
    %115 = vector.shape_cast %114 : vector<1x16x32xf32> to vector<16x32xf32>
    %116 = vector.extract_strided_slice %101 {offsets = [7, 0, 0], sizes = [1, 16, 32], strides = [1, 1, 1]} : vector<12x16x32xf32> to vector<1x16x32xf32>
    %117 = vector.shape_cast %116 : vector<1x16x32xf32> to vector<16x32xf32>
    %118 = vector.extract_strided_slice %101 {offsets = [8, 0, 0], sizes = [1, 16, 32], strides = [1, 1, 1]} : vector<12x16x32xf32> to vector<1x16x32xf32>
    %119 = vector.shape_cast %118 : vector<1x16x32xf32> to vector<16x32xf32>
    %120 = vector.extract_strided_slice %101 {offsets = [9, 0, 0], sizes = [1, 16, 32], strides = [1, 1, 1]} : vector<12x16x32xf32> to vector<1x16x32xf32>
    %121 = vector.shape_cast %120 : vector<1x16x32xf32> to vector<16x32xf32>
    %122 = vector.extract_strided_slice %101 {offsets = [10, 0, 0], sizes = [1, 16, 32], strides = [1, 1, 1]} : vector<12x16x32xf32> to vector<1x16x32xf32>
    %123 = vector.shape_cast %122 : vector<1x16x32xf32> to vector<16x32xf32>
    %124 = vector.extract_strided_slice %101 {offsets = [11, 0, 0], sizes = [1, 16, 32], strides = [1, 1, 1]} : vector<12x16x32xf32> to vector<1x16x32xf32>
    %125 = vector.shape_cast %124 : vector<1x16x32xf32> to vector<16x32xf32>
    %126 = tpu.concatenate %103, %105, %107, %109, %111, %113, %115, %117, %119, %121, %123, %125 in 1 : vector<16x32xf32>, vector<16x32xf32>, vector<16x32xf32>, vector<16x32xf32>, vector<16x32xf32>, vector<16x32xf32>, vector<16x32xf32>, vector<16x32xf32>, vector<16x32xf32>, vector<16x32xf32>, vector<16x32xf32>, vector<16x32xf32> -> vector<16x384xf32>
    %127 = arith.truncf %126 : vector<16x384xf32> to vector<16x384xbf16>
    %c0_15 = arith.constant 0 : index
    %c0_16 = arith.constant 0 : index
    %c1152 = arith.constant 1152 : index
    %128 = vector.load %arg3[%c0_15, %c0_16, %c1152] : memref<1x384x2176xbf16, #tpu.memory_space<vmem>>, vector<1x384x384xbf16>
    %129 = vector.shape_cast %128 : vector<1x384x384xbf16> to vector<384x384xbf16>
    %cst_17 = arith.constant dense<0.000000e+00> : vector<16x384xf32>
    %130 = tpu.matmul %127, %129, %cst_17 {dimension_numbers = #tpu.dot_dimension_numbers<[1], [0], [0], [1], [0, 0, 1, 1], [], []>} : vector<16x384xbf16>, vector<384x384xbf16>, vector<16x384xf32> -> vector<16x384xf32>
    %c0_18 = arith.constant 0 : index
    %c1 = arith.constant 1 : index
    %c0_19 = arith.constant 0 : index
    %131 = vector.load %arg5[%c0_18, %c1, %c0_19] : memref<1x8x1152xf32, #tpu.memory_space<vmem>>, vector<1x1x384xf32>
    %132 = vector.shape_cast %131 : vector<1x1x384xf32> to vector<1x384xf32>
    %133 = vector.broadcast %132 : vector<1x384xf32> to vector<16x384xf32>
    %134 = arith.addf %130, %133 : vector<16x384xf32>
    %135 = tpu.iota {dimensions = array<i32: 1>} : vector<1x384xi32>
    %c312_i32 = arith.constant 312 : i32
    %136 = vector.broadcast %c312_i32 : i32 to vector<1x384xi32>
    %137 = arith.cmpi slt, %135, %136 : vector<1x384xi32>
    %138 = arith.extui %137 : vector<1x384xi1> to vector<1x384xi32>
    %139 = arith.sitofp %138 : vector<1x384xi32> to vector<1x384xf32>
    %140 = arith.addf %3, %134 : vector<16x384xf32>
    %c0_20 = arith.constant 0 : index
    %c2 = arith.constant 2 : index
    %c0_21 = arith.constant 0 : index
    %141 = vector.load %arg5[%c0_20, %c2, %c0_21] : memref<1x8x1152xf32, #tpu.memory_space<vmem>>, vector<1x1x384xf32>
    %142 = vector.shape_cast %141 : vector<1x1x384xf32> to vector<1x384xf32>
    %c0_22 = arith.constant 0 : index
    %c3 = arith.constant 3 : index
    %c0_23 = arith.constant 0 : index
    %143 = vector.load %arg5[%c0_22, %c3, %c0_23] : memref<1x8x1152xf32, #tpu.memory_space<vmem>>, vector<1x1x384xf32>
    %144 = vector.shape_cast %143 : vector<1x1x384xf32> to vector<1x384xf32>
    %cst_24 = arith.constant dense<0.000000e+00> : vector<16xf32>
    %145 = vector.multi_reduction <add>, %140, %cst_24 [1] : vector<16x384xf32> to vector<16xf32>
    %146 = vector.shape_cast %145 : vector<16xf32> to vector<16x1xf32>
    %cst_25 = arith.constant 0.00320512825 : f32
    %147 = vector.broadcast %cst_25 : f32 to vector<16x1xf32>
    %148 = arith.mulf %146, %147 : vector<16x1xf32>
    %149 = vector.broadcast %148 : vector<16x1xf32> to vector<16x384xf32>
    %150 = arith.subf %140, %149 : vector<16x384xf32>
    %151 = vector.broadcast %139 : vector<1x384xf32> to vector<16x384xf32>
    %152 = arith.mulf %150, %151 : vector<16x384xf32>
    %153 = arith.mulf %152, %152 : vector<16x384xf32>
    %cst_26 = arith.constant dense<0.000000e+00> : vector<16xf32>
    %154 = vector.multi_reduction <add>, %153, %cst_26 [1] : vector<16x384xf32> to vector<16xf32>
    %155 = vector.shape_cast %154 : vector<16xf32> to vector<16x1xf32>
    %cst_27 = arith.constant 0.00320512825 : f32
    %156 = vector.broadcast %cst_27 : f32 to vector<16x1xf32>
    %157 = arith.mulf %155, %156 : vector<16x1xf32>
    %cst_28 = arith.constant 9.99999996E-13 : f32
    %158 = vector.broadcast %cst_28 : f32 to vector<16x1xf32>
    %159 = arith.addf %157, %158 : vector<16x1xf32>
    %160 = math.rsqrt %159 : vector<16x1xf32>
    %161 = vector.broadcast %160 : vector<16x1xf32> to vector<16x384xf32>
    %162 = arith.mulf %152, %161 : vector<16x384xf32>
    %163 = vector.broadcast %142 : vector<1x384xf32> to vector<16x384xf32>
    %164 = arith.mulf %162, %163 : vector<16x384xf32>
    %165 = vector.broadcast %144 : vector<1x384xf32> to vector<16x384xf32>
    %166 = arith.addf %164, %165 : vector<16x384xf32>
    %167 = arith.truncf %166 : vector<16x384xf32> to vector<16x384xbf16>
    %c0_29 = arith.constant 0 : index
    %c0_30 = arith.constant 0 : index
    %c1536 = arith.constant 1536 : index
    %168 = vector.load %arg3[%c0_29, %c0_30, %c1536] : memref<1x384x2176xbf16, #tpu.memory_space<vmem>>, vector<1x384x640xbf16>
    %169 = vector.shape_cast %168 : vector<1x384x640xbf16> to vector<384x640xbf16>
    %cst_31 = arith.constant dense<0.000000e+00> : vector<16x640xf32>
    %170 = tpu.matmul %167, %169, %cst_31 {dimension_numbers = #tpu.dot_dimension_numbers<[1], [0], [0], [1], [0, 0, 1, 1], [], []>} : vector<16x384xbf16>, vector<384x640xbf16>, vector<16x640xf32> -> vector<16x640xf32>
    %c0_32 = arith.constant 0 : index
    %c4 = arith.constant 4 : index
    %c0_33 = arith.constant 0 : index
    %171 = vector.load %arg5[%c0_32, %c4, %c0_33] : memref<1x8x1152xf32, #tpu.memory_space<vmem>>, vector<1x1x640xf32>
    %172 = vector.shape_cast %171 : vector<1x1x640xf32> to vector<1x640xf32>
    %173 = vector.broadcast %172 : vector<1x640xf32> to vector<16x640xf32>
    %174 = arith.addf %170, %173 : vector<16x640xf32>
    %cst_34 = arith.constant 5.000000e-01 : f32
    %175 = vector.broadcast %cst_34 : f32 to vector<16x640xf32>
    %176 = arith.mulf %175, %174 : vector<16x640xf32>
    %cst_35 = arith.constant 4.471500e-02 : f32
    %177 = vector.broadcast %cst_35 : f32 to vector<16x640xf32>
    %178 = arith.mulf %177, %174 : vector<16x640xf32>
    %179 = arith.mulf %178, %174 : vector<16x640xf32>
    %180 = arith.mulf %179, %174 : vector<16x640xf32>
    %181 = arith.addf %174, %180 : vector<16x640xf32>
    %cst_36 = arith.constant 0.797884583 : f32
    %182 = vector.broadcast %cst_36 : f32 to vector<16x640xf32>
    %183 = arith.mulf %182, %181 : vector<16x640xf32>
    %184 = math.tanh %183 : vector<16x640xf32>
    %cst_37 = arith.constant 1.000000e+00 : f32
    %185 = vector.broadcast %cst_37 : f32 to vector<16x640xf32>
    %186 = arith.addf %185, %184 : vector<16x640xf32>
    %187 = arith.mulf %176, %186 : vector<16x640xf32>
    %188 = arith.truncf %187 : vector<16x640xf32> to vector<16x640xbf16>
    %c0_38 = arith.constant 0 : index
    %c0_39 = arith.constant 0 : index
    %c0_40 = arith.constant 0 : index
    %189 = vector.load %arg4[%c0_38, %c0_39, %c0_40] : memref<1x640x384xbf16, #tpu.memory_space<vmem>>, vector<1x640x384xbf16>
    %190 = vector.shape_cast %189 : vector<1x640x384xbf16> to vector<640x384xbf16>
    %cst_41 = arith.constant dense<0.000000e+00> : vector<16x384xf32>
    %191 = tpu.matmul %188, %190, %cst_41 {dimension_numbers = #tpu.dot_dimension_numbers<[1], [0], [0], [1], [0, 0, 1, 1], [], []>} : vector<16x640xbf16>, vector<640x384xbf16>, vector<16x384xf32> -> vector<16x384xf32>
    %c0_42 = arith.constant 0 : index
    %c5 = arith.constant 5 : index
    %c0_43 = arith.constant 0 : index
    %192 = vector.load %arg5[%c0_42, %c5, %c0_43] : memref<1x8x1152xf32, #tpu.memory_space<vmem>>, vector<1x1x384xf32>
    %193 = vector.shape_cast %192 : vector<1x1x384xf32> to vector<1x384xf32>
    %194 = vector.broadcast %193 : vector<1x384xf32> to vector<16x384xf32>
    %195 = arith.addf %191, %194 : vector<16x384xf32>
    %196 = arith.addf %166, %195 : vector<16x384xf32>
    %c0_44 = arith.constant 0 : index
    %c6 = arith.constant 6 : index
    %c0_45 = arith.constant 0 : index
    %197 = vector.load %arg5[%c0_44, %c6, %c0_45] : memref<1x8x1152xf32, #tpu.memory_space<vmem>>, vector<1x1x384xf32>
    %198 = vector.shape_cast %197 : vector<1x1x384xf32> to vector<1x384xf32>
    %c0_46 = arith.constant 0 : index
    %c7 = arith.constant 7 : index
    %c0_47 = arith.constant 0 : index
    %199 = vector.load %arg5[%c0_46, %c7, %c0_47] : memref<1x8x1152xf32, #tpu.memory_space<vmem>>, vector<1x1x384xf32>
    %200 = vector.shape_cast %199 : vector<1x1x384xf32> to vector<1x384xf32>
    %cst_48 = arith.constant dense<0.000000e+00> : vector<16xf32>
    %201 = vector.multi_reduction <add>, %196, %cst_48 [1] : vector<16x384xf32> to vector<16xf32>
    %202 = vector.shape_cast %201 : vector<16xf32> to vector<16x1xf32>
    %cst_49 = arith.constant 0.00320512825 : f32
    %203 = vector.broadcast %cst_49 : f32 to vector<16x1xf32>
    %204 = arith.mulf %202, %203 : vector<16x1xf32>
    %205 = vector.broadcast %204 : vector<16x1xf32> to vector<16x384xf32>
    %206 = arith.subf %196, %205 : vector<16x384xf32>
    %207 = vector.broadcast %139 : vector<1x384xf32> to vector<16x384xf32>
    %208 = arith.mulf %206, %207 : vector<16x384xf32>
    %209 = arith.mulf %208, %208 : vector<16x384xf32>
    %cst_50 = arith.constant dense<0.000000e+00> : vector<16xf32>
    %210 = vector.multi_reduction <add>, %209, %cst_50 [1] : vector<16x384xf32> to vector<16xf32>
    %211 = vector.shape_cast %210 : vector<16xf32> to vector<16x1xf32>
    %cst_51 = arith.constant 0.00320512825 : f32
    %212 = vector.broadcast %cst_51 : f32 to vector<16x1xf32>
    %213 = arith.mulf %211, %212 : vector<16x1xf32>
    %cst_52 = arith.constant 9.99999996E-13 : f32
    %214 = vector.broadcast %cst_52 : f32 to vector<16x1xf32>
    %215 = arith.addf %213, %214 : vector<16x1xf32>
    %216 = math.rsqrt %215 : vector<16x1xf32>
    %217 = vector.broadcast %216 : vector<16x1xf32> to vector<16x384xf32>
    %218 = arith.mulf %208, %217 : vector<16x384xf32>
    %219 = vector.broadcast %198 : vector<1x384xf32> to vector<16x384xf32>
    %220 = arith.mulf %218, %219 : vector<16x384xf32>
    %221 = vector.broadcast %200 : vector<1x384xf32> to vector<16x384xf32>
    %222 = arith.addf %220, %221 : vector<16x384xf32>
    %c0_53 = arith.constant 0 : index
    %c0_54 = arith.constant 0 : index
    %223 = vector.load %arg9[%c0_53, %c0_54] : memref<16x384xf32, #tpu.memory_space<vmem>>, vector<16x384xf32>
    tpu.vector_store %arg9[%c0_53, %c0_54], %222 {strides = array<i32>} : memref<16x384xf32, #tpu.memory_space<vmem>>, vector<16x384xf32>,
    %c2_i32 = arith.constant 2 : i32
    %224 = arith.cmpi eq, %arg0, %c2_i32 : i32
    %225 = arith.extui %224 : i1 to i32
    %c0_i32_55 = arith.constant 0 : i32
    %226 = arith.cmpi ne, %225, %c0_i32_55 : i32
    scf.if %226 {
      %227 = vector.shape_cast %222 : vector<16x384xf32> to vector<2x8x384xf32>
      %228 = vector.extract_strided_slice %227 {offsets = [0, 0, 0], sizes = [2, 1, 384], strides = [1, 1, 1]} : vector<2x8x384xf32> to vector<2x1x384xf32>
      %229 = vector.shape_cast %228 : vector<2x1x384xf32> to vector<2x384xf32>
      %c0_56 = arith.constant 0 : index
      %c0_57 = arith.constant 0 : index
      %230 = vector.load %arg6[%c0_56, %c0_57] : memref<392x32xf32, #tpu.memory_space<vmem>>, vector<384x32xf32>
      %cst_58 = arith.constant dense<0.000000e+00> : vector<2x32xf32>
      %231 = tpu.matmul %229, %230, %cst_58 {dimension_numbers = #tpu.dot_dimension_numbers<[1], [0], [0], [1], [0, 0, 1, 1], [], []>} : vector<2x384xf32>, vector<384x32xf32>, vector<2x32xf32> -> vector<2x32xf32>
      %c384 = arith.constant 384 : index
      %c0_59 = arith.constant 0 : index
      %232 = vector.load %arg6[%c384, %c0_59] : memref<392x32xf32, #tpu.memory_space<vmem>>, vector<1x32xf32>
      %233 = vector.broadcast %232 : vector<1x32xf32> to vector<2x32xf32>
      %234 = arith.addf %231, %233 : vector<2x32xf32>
      %cst_60 = arith.constant 0.000000e+00 : f32
      %235 = vector.broadcast %cst_60 : f32 to vector<2x32xf32>
      %236 = arith.maximumf %234, %235 : vector<2x32xf32>
      %c0_61 = arith.constant 0 : index
      %c0_62 = arith.constant 0 : index
      %237 = vector.load %arg7[%c0_61, %c0_62] : memref<40x2xf32, #tpu.memory_space<vmem>>, vector<32x2xf32>
      %cst_63 = arith.constant dense<0.000000e+00> : vector<2x2xf32>
      %238 = tpu.matmul %236, %237, %cst_63 {dimension_numbers = #tpu.dot_dimension_numbers<[1], [0], [0], [1], [0, 0, 1, 1], [], []>} : vector<2x32xf32>, vector<32x2xf32>, vector<2x2xf32> -> vector<2x2xf32>
      %c32 = arith.constant 32 : index
      %c0_64 = arith.constant 0 : index
      %239 = vector.load %arg7[%c32, %c0_64] : memref<40x2xf32, #tpu.memory_space<vmem>>, vector<1x2xf32>
      %240 = vector.broadcast %239 : vector<1x2xf32> to vector<2x2xf32>
      %241 = arith.addf %238, %240 : vector<2x2xf32>
      %c0_65 = arith.constant 0 : index
      %c0_66 = arith.constant 0 : index
      %242 = vector.load %arg8[%c0_65, %c0_66] : memref<2x2xf32, #tpu.memory_space<vmem>>, vector<2x2xf32>
      tpu.vector_store %arg8[%c0_65, %c0_66], %241 {strides = array<i32>} : memref<2x2xf32, #tpu.memory_space<vmem>>, vector<2x2xf32>,
    } else {
    }
    return
  }
  func.func @transform_0(%arg0: i32) -> (i32, i32) {
    %c0_i32 = arith.constant 0 : i32
    %c0_i32_0 = arith.constant 0 : i32
    %c0_i32_1 = arith.constant 0 : i32
    return %c0_i32, %c0_i32_0 : i32, i32
  }
  func.func @transform_1(%arg0: i32) -> (i32, i32, i32) {
    %c0_i32 = arith.constant 0 : i32
    %c0_i32_0 = arith.constant 0 : i32
    %c0_i32_1 = arith.constant 0 : i32
    %c0_i32_2 = arith.constant 0 : i32
    return %c0_i32, %c0_i32_0, %c0_i32_1 : i32, i32, i32
  }
  func.func @transform_2(%arg0: i32) -> (i32, i32, i32) {
    %c0_i32 = arith.constant 0 : i32
    %c0_i32_0 = arith.constant 0 : i32
    %c0_i32_1 = arith.constant 0 : i32
    return %arg0, %c0_i32, %c0_i32_0 : i32, i32, i32
  }
  func.func @transform_3(%arg0: i32) -> (i32, i32, i32) {
    %c0_i32 = arith.constant 0 : i32
    %c0_i32_0 = arith.constant 0 : i32
    %c0_i32_1 = arith.constant 0 : i32
    return %arg0, %c0_i32, %c0_i32_0 : i32, i32, i32
  }
  func.func @transform_4(%arg0: i32) -> (i32, i32, i32) {
    %c0_i32 = arith.constant 0 : i32
    %c0_i32_0 = arith.constant 0 : i32
    %c0_i32_1 = arith.constant 0 : i32
    return %arg0, %c0_i32, %c0_i32_0 : i32, i32, i32
  }
  func.func @transform_5(%arg0: i32) -> (i32, i32) {
    %c0_i32 = arith.constant 0 : i32
    %c0_i32_0 = arith.constant 0 : i32
    %c0_i32_1 = arith.constant 0 : i32
    return %c0_i32, %c0_i32_0 : i32, i32
  }
  func.func @transform_6(%arg0: i32) -> (i32, i32) {
    %c0_i32 = arith.constant 0 : i32
    %c0_i32_0 = arith.constant 0 : i32
    %c0_i32_1 = arith.constant 0 : i32
    return %c0_i32, %c0_i32_0 : i32, i32
  }
  func.func @transform_7(%arg0: i32) -> (i32, i32) {
    %c0_i32 = arith.constant 0 : i32
    %c0_i32_0 = arith.constant 0 : i32
    %c0_i32_1 = arith.constant 0 : i32
    return %c0_i32, %c0_i32_0 : i32, i32
  }
}

</mosaic_0001>

<llo_original>
// kernel: tpu_custom_call.1
$region0: #{tpu_custom_call.1}
  #allocation0 [shape = 'u32[]', space=smem, size = 0x4, offset = 0x4, fixed_abs, tag = 'smem constant byte address 0x4 - core index']
  #allocation1 [shape = 'u32[72,128]{1,0:T(1,128)}', space=vmem, size = 0x9000, scoped, tag = 'internal scratch']
  #allocation2 [shape = 'f32[16,384]{1,0:T(8,128)}', space=vmem, size = 0x6000, scoped, tag = 'scratch operand']
  %s0 = inlined_call_operand.hbm [shape: f32[16,384], index: 0, kind: input, shape index: {}]
  %s1 = inlined_call_operand.hbm [shape: f32[1,16,16], index: 1, kind: input, shape index: {}]
  %s2 = inlined_call_operand.hbm [shape: bf16[3,384,2176], index: 2, kind: input, shape index: {}]
  %s3 = inlined_call_operand.hbm [shape: bf16[3,640,384], index: 3, kind: input, shape index: {}]
  %s4 = inlined_call_operand.hbm [shape: f32[3,8,1152], index: 4, kind: input, shape index: {}]
  %s5 = inlined_call_operand.vmem [shape: f32[392,32], index: 5, kind: input, shape index: {}]
  %s6 = inlined_call_operand.vmem [shape: f32[40,2], index: 6, kind: input, shape index: {}]
  %s7 = inlined_call_operand.hbm [shape: f32[2,2], index: 7, kind: output, shape index: {}]
  %s8 = sld [smem:[#allocation0]]
  $region89: #{tpu_custom_call.1} parent=0
    _
  %s10 = ssub.s32 1, %s8
  %s11 = scalar_select 0, %s10, %s8
  $region1: #{tpu_custom_call.1} parent=0
    #allocation3 [shape = 'u8[24576]{0}', space=vmem, size = 0x6000, scoped, tag = 'input window, operand 0, single buffered']
    #allocation4 [shape = 's32[2]{0}', space=sflag, size = 0x8, scoped, tag = 'scoped memory for tpu_custom_call.1']
    #allocation5 [shape = 's32[2]{0}', space=sflag, size = 0x8, scoped, tag = 'scoped memory for tpu_custom_call.1']
    #allocation6 [shape = 'u8[8192]{0}', space=vmem, size = 0x2000, scoped, tag = 'input window, operand 1, single buffered']
    #allocation7 [shape = 's32[1]{0}', space=sflag, size = 0x4, scoped, tag = 'scoped memory for tpu_custom_call.1']
    #allocation8 [shape = 'u8[3342336]{0}', space=vmem, size = 0x330000, scoped, tag = 'input window, operand 2']
    #allocation9 [shape = 'u8[983040]{0}', space=vmem, size = 0xf0000, scoped, tag = 'input window, operand 3']
    #allocation10 [shape = 'u8[73728]{0}', space=vmem, size = 0x12000, scoped, tag = 'input window, operand 4']
    #allocation11 [shape = 'u8[1024]{0}', space=vmem, size = 0x400, scoped, tag = 'output window, operand 0, single buffered']
    %12 = vsyncpa [#allocation4], 0
    %13 = vsyncpa [#allocation7], 0
    %14 = vsyncpa [#allocation5], 0
    loop: start=0, step=1, limit=5
    $region2: #{tpu_custom_call.1} parent=1 // loop_pre_header
      _
    $region3: #{tpu_custom_call.1} parent=1 // loop_header
      %s16 = sphi 0, %s20
      %p17 = scmp.ge.s32.totalorder %s16, 5
      %s24 = sphi 0, %s24
      %s26 = sphi 0, %s24
      %s27 = sphi 0, %s26
      %s41 = sphi 0, %s27
      %s45 = sphi 0, %s45
      %s47 = sphi 0, %s45
      %s48 = sphi 0, %s47
      %s62 = sphi 0, %s48
      %s68 = sphi 0, %s70
      %s71 = sphi 0, %s68
      %s72 = sphi 0, %s71
      %s88 = sphi 0, %s72
      %s94 = sphi 0, %s96
      %s97 = sphi 0, %s94
      %s98 = sphi 0, %s97
      %s114 = sphi 0, %s98
      %s120 = sphi 0, %s122
      %s123 = sphi 0, %s120
      %s124 = sphi 0, %s123
      %s140 = sphi 0, %s124
      %s144 = sphi 0, %s144
      %s146 = sphi 0, %s144
      %s147 = sphi 0, %s146
      %s161 = sphi 0, %s147
      %s165 = sphi 0, %s165
      %s167 = sphi 0, %s165
      %s168 = sphi 0, %s167
      %s182 = sphi 0, %s168
      %s186 = sphi 0, %s186
      %s188 = sphi 0, %s186
      %s189 = sphi 0, %s188
      %s203 = sphi 0, %s189
    $region4: #{tpu_custom_call.1} parent=1 // loop_header_branch
      %19 = sbr.rel (%p17) target = $region8
    $region5: #{tpu_custom_call.1} parent=1 // loop_body
      %s21 = ssub.s32 %s16, 1
      %s22 = ssub.s32 %s16, 2
      %s23 = sadd.s32 %s16, 1
      %s25 = sadd.s32 %s24, 1
      %p28 = scmp.eq.s32.totalorder %s16, 2
      %p29 = scmp.ne.s32.totalorder %s24, %s26
      %p30 = scmp.eq.s32.totalorder %s16, 0
      %p31 = por %p29, %p30
      %p32 = scmp.ne.s32.totalorder %s24, %s26
      %p33 = scmp.eq.s32.totalorder %s21, 2
      %p34 = por %p32, %p33
      %p35 = scmp.ne.s32.totalorder %s26, %s27
      %p36 = scmp.eq.s32.totalorder %s21, 0
      %p37 = por %p35, %p36
      %p38 = scmp.ne.s32.totalorder %s26, %s27
      %p39 = scmp.eq.s32.totalorder %s22, 2
      %p40 = por %p38, %p39
      %p42 = scmp.ne.s32.totalorder %s27, %s41
      %p43 = scmp.eq.s32.totalorder %s22, 0
      %p44 = por %p42, %p43
      %s46 = sadd.s32 %s45, 1
      %p49 = scmp.eq.s32.totalorder %s16, 2
      %p50 = scmp.ne.s32.totalorder %s45, %s47
      %p51 = scmp.eq.s32.totalorder %s16, 0
      %p52 = por %p50, %p51
      %p53 = scmp.ne.s32.totalorder %s45, %s47
      %p54 = scmp.eq.s32.totalorder %s21, 2
      %p55 = por %p53, %p54
      %p56 = scmp.ne.s32.totalorder %s47, %s48
      %p57 = scmp.eq.s32.totalorder %s21, 0
      %p58 = por %p56, %p57
      %p59 = scmp.ne.s32.totalorder %s47, %s48
      %p60 = scmp.eq.s32.totalorder %s22, 2
      %p61 = por %p59, %p60
      %p63 = scmp.ne.s32.totalorder %s48, %s62
      %p64 = scmp.eq.s32.totalorder %s22, 0
      %p65 = por %p63, %p64
      %s66 = ssub.s32 %s16, %s23
      %p67 = scmp.eq.s32.totalorder %s66, 0
      %s69 = sadd.s32 %s68, 1
      %s70 = scalar_select %p67, %s68, %s69
      %p73 = pneg %p67
      %p74 = scmp.eq.s32.totalorder %s16, 2
      %p75 = por %p73, %p74
      %p76 = scmp.ne.s32.totalorder %s68, %s71
      %p77 = scmp.eq.s32.totalorder %s16, 0
      %p78 = por %p76, %p77
      %p79 = scmp.ne.s32.totalorder %s68, %s71
      %p80 = scmp.eq.s32.totalorder %s21, 2
      %p81 = por %p79, %p80
      %p82 = scmp.ne.s32.totalorder %s71, %s72
      %p83 = scmp.eq.s32.totalorder %s21, 0
      %p84 = por %p82, %p83
      %p85 = scmp.ne.s32.totalorder %s71, %s72
      %p86 = scmp.eq.s32.totalorder %s22, 2
      %p87 = por %p85, %p86
      %p89 = scmp.ne.s32.totalorder %s72, %s88
      %p90 = scmp.eq.s32.totalorder %s22, 0
      %p91 = por %p89, %p90
      %s92 = ssub.s32 %s16, %s23
      %p93 = scmp.eq.s32.totalorder %s92, 0
      %s95 = sadd.s32 %s94, 1
      %s96 = scalar_select %p93, %s94, %s95
      %p99 = pneg %p93
      %p100 = scmp.eq.s32.totalorder %s16, 2
      %p101 = por %p99, %p100
      %p102 = scmp.ne.s32.totalorder %s94, %s97
      %p103 = scmp.eq.s32.totalorder %s16, 0
      %p104 = por %p102, %p103
      %p105 = scmp.ne.s32.totalorder %s94, %s97
      %p106 = scmp.eq.s32.totalorder %s21, 2
      %p107 = por %p105, %p106
      %p108 = scmp.ne.s32.totalorder %s97, %s98
      %p109 = scmp.eq.s32.totalorder %s21, 0
      %p110 = por %p108, %p109
      %p111 = scmp.ne.s32.totalorder %s97, %s98
      %p112 = scmp.eq.s32.totalorder %s22, 2
      %p113 = por %p111, %p112
      %p115 = scmp.ne.s32.totalorder %s98, %s114
      %p116 = scmp.eq.s32.totalorder %s22, 0
      %p117 = por %p115, %p116
      %s118 = ssub.s32 %s16, %s23
      %p119 = scmp.eq.s32.totalorder %s118, 0
      %s121 = sadd.s32 %s120, 1
      %s122 = scalar_select %p119, %s120, %s121
      %p125 = pneg %p119
      %p126 = scmp.eq.s32.totalorder %s16, 2
      %p127 = por %p125, %p126
      %p128 = scmp.ne.s32.totalorder %s120, %s123
      %p129 = scmp.eq.s32.totalorder %s16, 0
      %p130 = por %p128, %p129
      %p131 = scmp.ne.s32.totalorder %s120, %s123
      %p132 = scmp.eq.s32.totalorder %s21, 2
      %p133 = por %p131, %p132
      %p134 = scmp.ne.s32.totalorder %s123, %s124
      %p135 = scmp.eq.s32.totalorder %s21, 0
      %p136 = por %p134, %p135
      %p137 = scmp.ne.s32.totalorder %s123, %s124
      %p138 = scmp.eq.s32.totalorder %s22, 2
      %p139 = por %p137, %p138
      %p141 = scmp.ne.s32.totalorder %s124, %s140
      %p142 = scmp.eq.s32.totalorder %s22, 0
      %p143 = por %p141, %p142
      %s145 = sadd.s32 %s144, 1
      %p148 = scmp.eq.s32.totalorder %s16, 2
      %p149 = scmp.ne.s32.totalorder %s144, %s146
      %p150 = scmp.eq.s32.totalorder %s16, 0
      %p151 = por %p149, %p150
      %p152 = scmp.ne.s32.totalorder %s144, %s146
      %p153 = scmp.eq.s32.totalorder %s21, 2
      %p154 = por %p152, %p153
      %p155 = scmp.ne.s32.totalorder %s146, %s147
      %p156 = scmp.eq.s32.totalorder %s21, 0
      %p157 = por %p155, %p156
      %p158 = scmp.ne.s32.totalorder %s146, %s147
      %p159 = scmp.eq.s32.totalorder %s22, 2
      %p160 = por %p158, %p159
      %p162 = scmp.ne.s32.totalorder %s147, %s161
      %p163 = scmp.eq.s32.totalorder %s22, 0
      %p164 = por %p162, %p163
      %s166 = sadd.s32 %s165, 1
      %p169 = scmp.eq.s32.totalorder %s16, 2
      %p170 = scmp.ne.s32.totalorder %s165, %s167
      %p171 = scmp.eq.s32.totalorder %s16, 0
      %p172 = por %p170, %p171
      %p173 = scmp.ne.s32.totalorder %s165, %s167
      %p174 = scmp.eq.s32.totalorder %s21, 2
      %p175 = por %p173, %p174
      %p176 = scmp.ne.s32.totalorder %s167, %s168
      %p177 = scmp.eq.s32.totalorder %s21, 0
      %p178 = por %p176, %p177
      %p179 = scmp.ne.s32.totalorder %s167, %s168
      %p180 = scmp.eq.s32.totalorder %s22, 2
      %p181 = por %p179, %p180
      %p183 = scmp.ne.s32.totalorder %s168, %s182
      %p184 = scmp.eq.s32.totalorder %s22, 0
      %p185 = por %p183, %p184
      %s187 = sadd.s32 %s186, 1
      %p190 = scmp.eq.s32.totalorder %s16, 2
      %p191 = scmp.ne.s32.totalorder %s186, %s188
      %p192 = scmp.eq.s32.totalorder %s16, 0
      %p193 = por %p191, %p192
      %p194 = scmp.ne.s32.totalorder %s186, %s188
      %p195 = scmp.eq.s32.totalorder %s21, 2
      %p196 = por %p194, %p195
      %p197 = scmp.ne.s32.totalorder %s188, %s189
      %p198 = scmp.eq.s32.totalorder %s21, 0
      %p199 = por %p197, %p198
      %p200 = scmp.ne.s32.totalorder %s188, %s189
      %p201 = scmp.eq.s32.totalorder %s22, 2
      %p202 = por %p200, %p201
      %p204 = scmp.ne.s32.totalorder %s189, %s203
      %p205 = scmp.eq.s32.totalorder %s22, 0
      %p206 = por %p204, %p205
      %p207 = scmp.le.s32.totalorder 1, %s16
      %p208 = scmp.lt.s32.totalorder %s16, 4
      %p209 = pnand %p207, %p208
      %p210 = pneg %p209
      // Predicated region
      $region9: #{tpu_custom_call.1} parent=5 // pred_check
        _
      $region10: #{tpu_custom_call.1} parent=5 // pred_check_branch
        %212 = sbr.rel (%p209) target = $region12
      $region11: #{tpu_custom_call.1} parent=5 // pred_region
        %s213 = ssub.s32 %s16, 1
        // Predicated region
        $region13: #{tpu_custom_call.1} parent=11 // pred_check
          %p214 = pneg %p37
        $region14: #{tpu_custom_call.1} parent=11 // pred_check_branch
          %216 = sbr.rel (%p214) target = $region16
        $region15: #{tpu_custom_call.1} parent=11 // pred_region
          %218 = vsyncadd [#allocation4], 0
          %s219 = sshll.u32 %s0, 4
          %s220 = int_to_ptr.hbm [resolvable:$true] %s219
          %s221 = sshll.u32 [#allocation3], 4
          %s222 = int_to_ptr.vmem [resolvable:$true] %s221
          %227 = dma.hbm_to_vmem [thread:$0]  %s220, 768, %s222, [#allocation4], 384, 384, 24
        $region16: #{tpu_custom_call.1} parent=11 // pred_fallthru
          _
        // Predicated region
        $region17: #{tpu_custom_call.1} parent=11 // pred_check
          %p228 = pneg %p58
        $region18: #{tpu_custom_call.1} parent=11 // pred_check_branch
          %230 = sbr.rel (%p228) target = $region20
        $region19: #{tpu_custom_call.1} parent=11 // pred_region
          %232 = vsyncadd [#allocation7], 0
          %s233 = sshll.u32 %s1, 4
          %s234 = int_to_ptr.hbm [resolvable:$true] %s233
          %s235 = sshll.u32 [#allocation6], 4
          %s236 = int_to_ptr.vmem [resolvable:$true] %s235
          %241 = dma.hbm_to_vmem [thread:$0]  %s234, 256, %s236, [#allocation7], 128, 128, 8
        $region20: #{tpu_custom_call.1} parent=11 // pred_fallthru
          _
        // Predicated region
        $region21: #{tpu_custom_call.1} parent=11 // pred_check
          %p242 = pneg %p157
        $region22: #{tpu_custom_call.1} parent=11 // pred_check_branch
          %244 = sbr.rel (%p242) target = $region24
        $region23: #{tpu_custom_call.1} parent=11 // pred_region
          _
        $region24: #{tpu_custom_call.1} parent=11 // pred_fallthru
          _
        // Predicated region
        $region25: #{tpu_custom_call.1} parent=11 // pred_check
          %p245 = pneg %p178
        $region26: #{tpu_custom_call.1} parent=11 // pred_check_branch
          %247 = sbr.rel (%p245) target = $region28
        $region27: #{tpu_custom_call.1} parent=11 // pred_region
          _
        $region28: #{tpu_custom_call.1} parent=11 // pred_fallthru
          _
      $region12: #{tpu_custom_call.1} parent=5 // pred_fallthru
        _
      %p248 = scmp.lt.s32.totalorder %s16, 3
      // Predicated region
      $region29: #{tpu_custom_call.1} parent=5 // pred_check
        %p249 = pneg %p248
      $region30: #{tpu_custom_call.1} parent=5 // pred_check_branch
        %251 = sbr.rel (%p249) target = $region32
      $region31: #{tpu_custom_call.1} parent=5 // pred_region
        // Predicated region
        $region33: #{tpu_custom_call.1} parent=31 // pred_check
          %p252 = pneg %p78
        $region34: #{tpu_custom_call.1} parent=31 // pred_check_branch
          %254 = sbr.rel (%p252) target = $region36
        $region35: #{tpu_custom_call.1} parent=31 // pred_region
          %s255 = sand.u32 %s16, 1
          %s256 = scalar_lea.sflag [#allocation4], %s255
          %s257 = sand.u32 %s68, 1
          %s258 = smul.addr %s257, 3264
          %s259 = scalar_lea.vmem [#allocation8], %s258
          %261 = vsyncadd %s256, 0
          %s262 = smul.addr %s16, 816
          %s263 = smul.addr %s262, 4
          %s264 = scalar_lea.hbm %s2, %s263
          %s265 = sshll.u32 %s264, 4
          %s266 = int_to_ptr.hbm [resolvable:$true] %s265
          %s267 = sshll.u32 %s259, 4
          %s268 = int_to_ptr.vmem [resolvable:$true] %s267
          %273 = dma.hbm_to_vmem [thread:$0]  %s266, 52224, %s268, %s256, 1088, 1088, 68
        $region36: #{tpu_custom_call.1} parent=31 // pred_fallthru
          _
        // Predicated region
        $region37: #{tpu_custom_call.1} parent=31 // pred_check
          %p274 = pneg %p104
        $region38: #{tpu_custom_call.1} parent=31 // pred_check_branch
          %276 = sbr.rel (%p274) target = $region40
        $region39: #{tpu_custom_call.1} parent=31 // pred_region
          %s277 = sand.u32 %s16, 1
          %s278 = scalar_lea.sflag [#allocation4], %s277
          %s279 = sand.u32 %s94, 1
          %s280 = smul.addr %s279, 960
          %s281 = scalar_lea.vmem [#allocation9], %s280
          %283 = vsyncadd %s278, 0
          %s284 = smul.addr %s16, 240
          %s285 = smul.addr %s284, 4
          %s286 = scalar_lea.hbm %s3, %s285
          %s287 = sshll.u32 %s286, 4
          %s288 = int_to_ptr.hbm [resolvable:$true] %s287
          %s289 = sshll.u32 %s281, 4
          %s290 = int_to_ptr.vmem [resolvable:$true] %s289
          %295 = dma.hbm_to_vmem [thread:$0]  %s288, 15360, %s290, %s278, 192, 192, 12
        $region40: #{tpu_custom_call.1} parent=31 // pred_fallthru
          _
        // Predicated region
        $region41: #{tpu_custom_call.1} parent=31 // pred_check
          %p296 = pneg %p130
        $region42: #{tpu_custom_call.1} parent=31 // pred_check_branch
          %298 = sbr.rel (%p296) target = $region44
        $region43: #{tpu_custom_call.1} parent=31 // pred_region
          %s299 = sand.u32 %s16, 1
          %s300 = scalar_lea.sflag [#allocation4], %s299
          %s301 = sand.u32 %s120, 1
          %s302 = smul.addr %s301, 72
          %s303 = scalar_lea.vmem [#allocation10], %s302
          %305 = vsyncadd %s300, 0
          %s306 = smul.addr %s16, 9
          %s307 = smul.addr %s306, 8
          %s308 = scalar_lea.hbm %s4, %s307
          %s310 = sshll.u32 %s308, 4
          %s311 = int_to_ptr.hbm [resolvable:$true] %s310
          %s312 = sshll.u32 %s303, 4
          %s313 = int_to_ptr.vmem [resolvable:$true] %s312
          %315 = dma.hbm_to_vmem [thread:$0]  %s311, 1152, %s313, %s300
        $region44: #{tpu_custom_call.1} parent=31 // pred_fallthru
          _
      $region32: #{tpu_custom_call.1} parent=5 // pred_fallthru
        _
      %p316 = scmp.le.s32.totalorder 1, %s16
      %p317 = scmp.lt.s32.totalorder %s16, 4
      %p318 = pnand %p316, %p317
      %p319 = pneg %p318
      // Predicated region
      $region45: #{tpu_custom_call.1} parent=5 // pred_check
        _
      $region46: #{tpu_custom_call.1} parent=5 // pred_check_branch
        %321 = sbr.rel (%p318) target = $region48
      $region47: #{tpu_custom_call.1} parent=5 // pred_region
        %s322 = ssub.s32 %s16, 1
        // Predicated region
        $region49: #{tpu_custom_call.1} parent=47 // pred_check
          %p323 = pneg %p37
        $region50: #{tpu_custom_call.1} parent=47 // pred_check_branch
          %325 = sbr.rel (%p323) target = $region52
        $region51: #{tpu_custom_call.1} parent=47 // pred_region
          %327 = dma.done [#allocation4], 768
        $region52: #{tpu_custom_call.1} parent=47 // pred_fallthru
          _
        // Predicated region
        $region53: #{tpu_custom_call.1} parent=47 // pred_check
          %p328 = pneg %p58
        $region54: #{tpu_custom_call.1} parent=47 // pred_check_branch
          %330 = sbr.rel (%p328) target = $region56
        $region55: #{tpu_custom_call.1} parent=47 // pred_region
          %332 = dma.done [#allocation7], 256
        $region56: #{tpu_custom_call.1} parent=47 // pred_fallthru
          _
        %s333 = sand.u32 %s21, 1
        %s334 = scalar_lea.sflag [#allocation4], %s333
        %s335 = sand.u32 %s71, 1
        %s336 = smul.addr %s335, 3264
        %s337 = scalar_lea.vmem [#allocation8], %s336
        // Predicated region
        $region57: #{tpu_custom_call.1} parent=47 // pred_check
          %p338 = pneg %p84
        $region58: #{tpu_custom_call.1} parent=47 // pred_check_branch
          %340 = sbr.rel (%p338) target = $region60
        $region59: #{tpu_custom_call.1} parent=47 // pred_region
          %342 = dma.done %s334, 52224
        $region60: #{tpu_custom_call.1} parent=47 // pred_fallthru
          _
        %s343 = sand.u32 %s21, 1
        %s344 = scalar_lea.sflag [#allocation4], %s343
        %s345 = sand.u32 %s97, 1
        %s346 = smul.addr %s345, 960
        %s347 = scalar_lea.vmem [#allocation9], %s346
        // Predicated region
        $region61: #{tpu_custom_call.1} parent=47 // pred_check
          %p348 = pneg %p110
        $region62: #{tpu_custom_call.1} parent=47 // pred_check_branch
          %350 = sbr.rel (%p348) target = $region64
        $region63: #{tpu_custom_call.1} parent=47 // pred_region
          %352 = dma.done %s344, 15360
        $region64: #{tpu_custom_call.1} parent=47 // pred_fallthru
          _
        %s353 = sand.u32 %s21, 1
        %s354 = scalar_lea.sflag [#allocation4], %s353
        %s355 = sand.u32 %s123, 1
        %s356 = smul.addr %s355, 72
        %s357 = scalar_lea.vmem [#allocation10], %s356
        // Predicated region
        $region65: #{tpu_custom_call.1} parent=47 // pred_check
          %p358 = pneg %p136
        $region66: #{tpu_custom_call.1} parent=47 // pred_check_branch
          %360 = sbr.rel (%p358) target = $region68
        $region67: #{tpu_custom_call.1} parent=47 // pred_region
          %362 = dma.done %s354, 1152
        $region68: #{tpu_custom_call.1} parent=47 // pred_fallthru
          _
        %p363 = pneg %p37
        %p364 = pneg %p34
        %p365 = pneg %p58
        %p366 = pneg %p55
        %s367 = sand.u32 %s21, 1
        %s368 = scalar_lea.sflag [#allocation4], %s367
        %s369 = sand.u32 %s71, 1
        %s370 = smul.addr %s369, 3264
        %s371 = scalar_lea.vmem [#allocation8], %s370
        %p372 = pneg %p84
        %p373 = pneg %p81
        %s374 = sand.u32 %s21, 1
        %s375 = scalar_lea.sflag [#allocation4], %s374
        %s376 = sand.u32 %s97, 1
        %s377 = smul.addr %s376, 960
        %s378 = scalar_lea.vmem [#allocation9], %s377
        %p379 = pneg %p110
        %p380 = pneg %p107
        %s381 = sand.u32 %s21, 1
        %s382 = scalar_lea.sflag [#allocation4], %s381
        %s383 = sand.u32 %s123, 1
        %s384 = smul.addr %s383, 72
        %s385 = scalar_lea.vmem [#allocation10], %s384
        %p386 = pneg %p136
        %p387 = pneg %p133
        %p388 = pneg %p157
        %p389 = pneg %p154
        %p390 = pneg %p178
        %p391 = pneg %p175
        %p392 = pneg %p199
        %p393 = pneg %p196
        %p394 = scmp.eq.s32.totalorder %s21, 0
        // Predicated region
        $region69: #{tpu_custom_call.1} parent=47 // pred_check
          %p395 = pneg %p394
        $region70: #{tpu_custom_call.1} parent=47 // pred_check_branch
          %397 = sbr.rel (%p395) target = $region72
        $region71: #{tpu_custom_call.1} parent=47 // pred_region
          %v398 = vld [vmem:[#allocation3] sm:$0xff]
          %v399 = vld [vmem:[#allocation3 + $0x8] sm:$0xff]
          %v400 = vld [vmem:[#allocation3 + $0x10] sm:$0xff]
          %v401 = vld [vmem:[#allocation3 + $0x18] sm:$0xff]
          %v402 = vld [vmem:[#allocation3 + $0x20] sm:$0xff]
          %v403 = vld [vmem:[#allocation3 + $0x28] sm:$0xff]
          %404 = vst [vmem:[#allocation2] sm:$0xff] %v398
          %405 = vst [vmem:[#allocation2 + $0x8] sm:$0xff] %v399
          %406 = vst [vmem:[#allocation2 + $0x10] sm:$0xff] %v400
          %407 = vst [vmem:[#allocation2 + $0x18] sm:$0xff] %v401
          %408 = vst [vmem:[#allocation2 + $0x20] sm:$0xff] %v402
          %409 = vst [vmem:[#allocation2 + $0x28] sm:$0xff] %v403
        $region72: #{tpu_custom_call.1} parent=47 // pred_fallthru
          _
        %v410 = vld [vmem:[#allocation2] sm:$0xff]
        %v411 = vld [vmem:[#allocation2 + $0x8] sm:$0xff]
        %v412 = vld [vmem:[#allocation2 + $0x10] sm:$0xff]
        %v413 = vld [vmem:[#allocation2 + $0x18] sm:$0xff]
        %v414 = vld [vmem:[#allocation2 + $0x20] sm:$0xff]
        %v415 = vld [vmem:[#allocation2 + $0x28] sm:$0xff]
        %v416 = vpack.c.bf16 %v413, %v410
        %v417 = vpack.c.bf16 %v414, %v411
        %v418 = vpack.c.bf16 %v415, %v412
        %v419 = vld [vmem:[%s337] sm:$0xff]
        %v420 = vld [vmem:[%s337 + $0x8] sm:$0xff]
        %v421 = vld [vmem:[%s337 + $0x10] sm:$0xff]
        %v422 = vld [vmem:[%s337 + $0x18] sm:$0xff]
        %v423 = vld [vmem:[%s337 + $0x20] sm:$0xf]
        %v424 = vld [vmem:[%s337 + $0x44] sm:$0xff]
        %v425 = vld [vmem:[%s337 + $0x4c] sm:$0xff]
        %v426 = vld [vmem:[%s337 + $0x54] sm:$0xff]
        %v427 = vld [vmem:[%s337 + $0x5c] sm:$0xff]
        %v428 = vld [vmem:[%s337 + $0x64] sm:$0xf]
        %v429 = vld [vmem:[%s337 + $0x88] sm:$0xff]
        %v430 = vld [vmem:[%s337 + $0x90] sm:$0xff]
        %v431 = vld [vmem:[%s337 + $0x98] sm:$0xff]
        %v432 = vld [vmem:[%s337 + $0xa0] sm:$0xff]
        %v433 = vld [vmem:[%s337 + $0xa8] sm:$0xf]
        %v434 = vld [vmem:[%s337 + $0xcc] sm:$0xff]
        %v435 = vld [vmem:[%s337 + $0xd4] sm:$0xff]
        %v436 = vld [vmem:[%s337 + $0xdc] sm:$0xff]
        %v437 = vld [vmem:[%s337 + $0xe4] sm:$0xff]
        %v438 = vld [vmem:[%s337 + $0xec] sm:$0xf]
        %v439 = vld [vmem:[%s337 + $0x110] sm:$0xff]
        %v440 = vld [vmem:[%s337 + $0x118] sm:$0xff]
        %v441 = vld [vmem:[%s337 + $0x120] sm:$0xff]
        %v442 = vld [vmem:[%s337 + $0x128] sm:$0xff]
        %v443 = vld [vmem:[%s337 + $0x130] sm:$0xf]
        %v444 = vld [vmem:[%s337 + $0x154] sm:$0xff]
        %v445 = vld [vmem:[%s337 + $0x15c] sm:$0xff]
        %v446 = vld [vmem:[%s337 + $0x164] sm:$0xff]
        %v447 = vld [vmem:[%s337 + $0x16c] sm:$0xff]
        %v448 = vld [vmem:[%s337 + $0x174] sm:$0xf]
        %v449 = vld [vmem:[%s337 + $0x198] sm:$0xff]
        %v450 = vld [vmem:[%s337 + $0x1a0] sm:$0xff]
        %v451 = vld [vmem:[%s337 + $0x1a8] sm:$0xff]
        %v452 = vld [vmem:[%s337 + $0x1b0] sm:$0xff]
        %v453 = vld [vmem:[%s337 + $0x1b8] sm:$0xf]
        %v454 = vld [vmem:[%s337 + $0x1dc] sm:$0xff]
        %v455 = vld [vmem:[%s337 + $0x1e4] sm:$0xff]
        %v456 = vld [vmem:[%s337 + $0x1ec] sm:$0xff]
        %v457 = vld [vmem:[%s337 + $0x1f4] sm:$0xff]
        %v458 = vld [vmem:[%s337 + $0x1fc] sm:$0xf]
        %v459 = vld [vmem:[%s337 + $0x220] sm:$0xff]
        %v460 = vld [vmem:[%s337 + $0x228] sm:$0xff]
        %v461 = vld [vmem:[%s337 + $0x230] sm:$0xff]
        %v462 = vld [vmem:[%s337 + $0x238] sm:$0xff]
        %v463 = vld [vmem:[%s337 + $0x240] sm:$0xf]
        %v464 = vld [vmem:[%s337 + $0x264] sm:$0xff]
        %v465 = vld [vmem:[%s337 + $0x26c] sm:$0xff]
        %v466 = vld [vmem:[%s337 + $0x274] sm:$0xff]
        %v467 = vld [vmem:[%s337 + $0x27c] sm:$0xff]
        %v468 = vld [vmem:[%s337 + $0x284] sm:$0xf]
        %v469 = vld [vmem:[%s337 + $0x2a8] sm:$0xff]
        %v470 = vld [vmem:[%s337 + $0x2b0] sm:$0xff]
        %v471 = vld [vmem:[%s337 + $0x2b8] sm:$0xff]
        %v472 = vld [vmem:[%s337 + $0x2c0] sm:$0xff]
        %v473 = vld [vmem:[%s337 + $0x2c8] sm:$0xf]
        %v474 = vld [vmem:[%s337 + $0x2ec] sm:$0xff]
        %v475 = vld [vmem:[%s337 + $0x2f4] sm:$0xff]
        %v476 = vld [vmem:[%s337 + $0x2fc] sm:$0xff]
        %v477 = vld [vmem:[%s337 + $0x304] sm:$0xff]
        %v478 = vld [vmem:[%s337 + $0x30c] sm:$0xf]
        %v479 = vld [vmem:[%s337 + $0x330] sm:$0xff]
        %v480 = vld [vmem:[%s337 + $0x338] sm:$0xff]
        %v481 = vld [vmem:[%s337 + $0x340] sm:$0xff]
        %v482 = vld [vmem:[%s337 + $0x348] sm:$0xff]
        %v483 = vld [vmem:[%s337 + $0x350] sm:$0xf]
        %v484 = vld [vmem:[%s337 + $0x374] sm:$0xff]
        %v485 = vld [vmem:[%s337 + $0x37c] sm:$0xff]
        %v486 = vld [vmem:[%s337 + $0x384] sm:$0xff]
        %v487 = vld [vmem:[%s337 + $0x38c] sm:$0xff]
        %v488 = vld [vmem:[%s337 + $0x394] sm:$0xf]
        %v489 = vld [vmem:[%s337 + $0x3b8] sm:$0xff]
        %v490 = vld [vmem:[%s337 + $0x3c0] sm:$0xff]
        %v491 = vld [vmem:[%s337 + $0x3c8] sm:$0xff]
        %v492 = vld [vmem:[%s337 + $0x3d0] sm:$0xff]
        %v493 = vld [vmem:[%s337 + $0x3d8] sm:$0xf]
        %v494 = vld [vmem:[%s337 + $0x3fc] sm:$0xff]
        %v495 = vld [vmem:[%s337 + $0x404] sm:$0xff]
        %v496 = vld [vmem:[%s337 + $0x40c] sm:$0xff]
        %v497 = vld [vmem:[%s337 + $0x414] sm:$0xff]
        %v498 = vld [vmem:[%s337 + $0x41c] sm:$0xf]
        %v499 = vld [vmem:[%s337 + $0x440] sm:$0xff]
        %v500 = vld [vmem:[%s337 + $0x448] sm:$0xff]
        %v501 = vld [vmem:[%s337 + $0x450] sm:$0xff]
        %v502 = vld [vmem:[%s337 + $0x458] sm:$0xff]
        %v503 = vld [vmem:[%s337 + $0x460] sm:$0xf]
        %v504 = vld [vmem:[%s337 + $0x484] sm:$0xff]
        %v505 = vld [vmem:[%s337 + $0x48c] sm:$0xff]
        %v506 = vld [vmem:[%s337 + $0x494] sm:$0xff]
        %v507 = vld [vmem:[%s337 + $0x49c] sm:$0xff]
        %v508 = vld [vmem:[%s337 + $0x4a4] sm:$0xf]
        %v509 = vld [vmem:[%s337 + $0x4c8] sm:$0xff]
        %v510 = vld [vmem:[%s337 + $0x4d0] sm:$0xff]
        %v511 = vld [vmem:[%s337 + $0x4d8] sm:$0xff]
        %v512 = vld [vmem:[%s337 + $0x4e0] sm:$0xff]
        %v513 = vld [vmem:[%s337 + $0x4e8] sm:$0xf]
        %v514 = vld [vmem:[%s337 + $0x50c] sm:$0xff]
        %v515 = vld [vmem:[%s337 + $0x514] sm:$0xff]
        %v516 = vld [vmem:[%s337 + $0x51c] sm:$0xff]
        %v517 = vld [vmem:[%s337 + $0x524] sm:$0xff]
        %v518 = vld [vmem:[%s337 + $0x52c] sm:$0xf]
        %v519 = vld [vmem:[%s337 + $0x550] sm:$0xff]
        %v520 = vld [vmem:[%s337 + $0x558] sm:$0xff]
        %v521 = vld [vmem:[%s337 + $0x560] sm:$0xff]
        %v522 = vld [vmem:[%s337 + $0x568] sm:$0xff]
        %v523 = vld [vmem:[%s337 + $0x570] sm:$0xf]
        %v524 = vld [vmem:[%s337 + $0x594] sm:$0xff]
        %v525 = vld [vmem:[%s337 + $0x59c] sm:$0xff]
        %v526 = vld [vmem:[%s337 + $0x5a4] sm:$0xff]
        %v527 = vld [vmem:[%s337 + $0x5ac] sm:$0xff]
        %v528 = vld [vmem:[%s337 + $0x5b4] sm:$0xf]
        %v529 = vld [vmem:[%s337 + $0x5d8] sm:$0xff]
        %v530 = vld [vmem:[%s337 + $0x5e0] sm:$0xff]
        %v531 = vld [vmem:[%s337 + $0x5e8] sm:$0xff]
        %v532 = vld [vmem:[%s337 + $0x5f0] sm:$0xff]
        %v533 = vld [vmem:[%s337 + $0x5f8] sm:$0xf]
        %v534 = vld [vmem:[%s337 + $0x61c] sm:$0xff]
        %v535 = vld [vmem:[%s337 + $0x624] sm:$0xff]
        %v536 = vld [vmem:[%s337 + $0x62c] sm:$0xff]
        %v537 = vld [vmem:[%s337 + $0x634] sm:$0xff]
        %v538 = vld [vmem:[%s337 + $0x63c] sm:$0xf]
        %v539 = vld [vmem:[%s337 + $0x660] sm:$0xff]
        %v540 = vld [vmem:[%s337 + $0x668] sm:$0xff]
        %v541 = vld [vmem:[%s337 + $0x670] sm:$0xff]
        %v542 = vld [vmem:[%s337 + $0x678] sm:$0xff]
        %v543 = vld [vmem:[%s337 + $0x680] sm:$0xf]
        %v544 = vld [vmem:[%s337 + $0x6a4] sm:$0xff]
        %v545 = vld [vmem:[%s337 + $0x6ac] sm:$0xff]
        %v546 = vld [vmem:[%s337 + $0x6b4] sm:$0xff]
        %v547 = vld [vmem:[%s337 + $0x6bc] sm:$0xff]
        %v548 = vld [vmem:[%s337 + $0x6c4] sm:$0xf]
        %v549 = vld [vmem:[%s337 + $0x6e8] sm:$0xff]
        %v550 = vld [vmem:[%s337 + $0x6f0] sm:$0xff]
        %v551 = vld [vmem:[%s337 + $0x6f8] sm:$0xff]
        %v552 = vld [vmem:[%s337 + $0x700] sm:$0xff]
        %v553 = vld [vmem:[%s337 + $0x708] sm:$0xf]
        %v554 = vld [vmem:[%s337 + $0x72c] sm:$0xff]
        %v555 = vld [vmem:[%s337 + $0x734] sm:$0xff]
        %v556 = vld [vmem:[%s337 + $0x73c] sm:$0xff]
        %v557 = vld [vmem:[%s337 + $0x744] sm:$0xff]
        %v558 = vld [vmem:[%s337 + $0x74c] sm:$0xf]
        %v559 = vld [vmem:[%s337 + $0x770] sm:$0xff]
        %v560 = vld [vmem:[%s337 + $0x778] sm:$0xff]
        %v561 = vld [vmem:[%s337 + $0x780] sm:$0xff]
        %v562 = vld [vmem:[%s337 + $0x788] sm:$0xff]
        %v563 = vld [vmem:[%s337 + $0x790] sm:$0xf]
        %v564 = vld [vmem:[%s337 + $0x7b4] sm:$0xff]
        %v565 = vld [vmem:[%s337 + $0x7bc] sm:$0xff]
        %v566 = vld [vmem:[%s337 + $0x7c4] sm:$0xff]
        %v567 = vld [vmem:[%s337 + $0x7cc] sm:$0xff]
        %v568 = vld [vmem:[%s337 + $0x7d4] sm:$0xf]
        %v569 = vld [vmem:[%s337 + $0x7f8] sm:$0xff]
        %v570 = vld [vmem:[%s337 + $0x800] sm:$0xff]
        %v571 = vld [vmem:[%s337 + $0x808] sm:$0xff]
        %v572 = vld [vmem:[%s337 + $0x810] sm:$0xff]
        %v573 = vld [vmem:[%s337 + $0x818] sm:$0xf]
        %v574 = vld [vmem:[%s337 + $0x83c] sm:$0xff]
        %v575 = vld [vmem:[%s337 + $0x844] sm:$0xff]
        %v576 = vld [vmem:[%s337 + $0x84c] sm:$0xff]
        %v577 = vld [vmem:[%s337 + $0x854] sm:$0xff]
        %v578 = vld [vmem:[%s337 + $0x85c] sm:$0xf]
        %v579 = vld [vmem:[%s337 + $0x880] sm:$0xff]
        %v580 = vld [vmem:[%s337 + $0x888] sm:$0xff]
        %v581 = vld [vmem:[%s337 + $0x890] sm:$0xff]
        %v582 = vld [vmem:[%s337 + $0x898] sm:$0xff]
        %v583 = vld [vmem:[%s337 + $0x8a0] sm:$0xf]
        %v584 = vld [vmem:[%s337 + $0x8c4] sm:$0xff]
        %v585 = vld [vmem:[%s337 + $0x8cc] sm:$0xff]
        %v586 = vld [vmem:[%s337 + $0x8d4] sm:$0xff]
        %v587 = vld [vmem:[%s337 + $0x8dc] sm:$0xff]
        %v588 = vld [vmem:[%s337 + $0x8e4] sm:$0xf]
        %v589 = vld [vmem:[%s337 + $0x908] sm:$0xff]
        %v590 = vld [vmem:[%s337 + $0x910] sm:$0xff]
        %v591 = vld [vmem:[%s337 + $0x918] sm:$0xff]
        %v592 = vld [vmem:[%s337 + $0x920] sm:$0xff]
        %v593 = vld [vmem:[%s337 + $0x928] sm:$0xf]
        %v594 = vld [vmem:[%s337 + $0x94c] sm:$0xff]
        %v595 = vld [vmem:[%s337 + $0x954] sm:$0xff]
        %v596 = vld [vmem:[%s337 + $0x95c] sm:$0xff]
        %v597 = vld [vmem:[%s337 + $0x964] sm:$0xff]
        %v598 = vld [vmem:[%s337 + $0x96c] sm:$0xf]
        %v599 = vld [vmem:[%s337 + $0x990] sm:$0xff]
        %v600 = vld [vmem:[%s337 + $0x998] sm:$0xff]
        %v601 = vld [vmem:[%s337 + $0x9a0] sm:$0xff]
        %v602 = vld [vmem:[%s337 + $0x9a8] sm:$0xff]
        %v603 = vld [vmem:[%s337 + $0x9b0] sm:$0xf]
        %v604 = vld [vmem:[%s337 + $0x9d4] sm:$0xff]
        %v605 = vld [vmem:[%s337 + $0x9dc] sm:$0xff]
        %v606 = vld [vmem:[%s337 + $0x9e4] sm:$0xff]
        %v607 = vld [vmem:[%s337 + $0x9ec] sm:$0xff]
        %v608 = vld [vmem:[%s337 + $0x9f4] sm:$0xf]
        %v609 = vld [vmem:[%s337 + $0xa18] sm:$0xff]
        %v610 = vld [vmem:[%s337 + $0xa20] sm:$0xff]
        %v611 = vld [vmem:[%s337 + $0xa28] sm:$0xff]
        %v612 = vld [vmem:[%s337 + $0xa30] sm:$0xff]
        %v613 = vld [vmem:[%s337 + $0xa38] sm:$0xf]
        %v614 = vld [vmem:[%s337 + $0xa5c] sm:$0xff]
        %v615 = vld [vmem:[%s337 + $0xa64] sm:$0xff]
        %v616 = vld [vmem:[%s337 + $0xa6c] sm:$0xff]
        %v617 = vld [vmem:[%s337 + $0xa74] sm:$0xff]
        %v618 = vld [vmem:[%s337 + $0xa7c] sm:$0xf]
        %v619 = vld [vmem:[%s337 + $0xaa0] sm:$0xff]
        %v620 = vld [vmem:[%s337 + $0xaa8] sm:$0xff]
        %v621 = vld [vmem:[%s337 + $0xab0] sm:$0xff]
        %v622 = vld [vmem:[%s337 + $0xab8] sm:$0xff]
        %v623 = vld [vmem:[%s337 + $0xac0] sm:$0xf]
        %v624 = vld [vmem:[%s337 + $0xae4] sm:$0xff]
        %v625 = vld [vmem:[%s337 + $0xaec] sm:$0xff]
        %v626 = vld [vmem:[%s337 + $0xaf4] sm:$0xff]
        %v627 = vld [vmem:[%s337 + $0xafc] sm:$0xff]
        %v628 = vld [vmem:[%s337 + $0xb04] sm:$0xf]
        %v629 = vld [vmem:[%s337 + $0xb28] sm:$0xff]
        %v630 = vld [vmem:[%s337 + $0xb30] sm:$0xff]
        %v631 = vld [vmem:[%s337 + $0xb38] sm:$0xff]
        %v632 = vld [vmem:[%s337 + $0xb40] sm:$0xff]
        %v633 = vld [vmem:[%s337 + $0xb48] sm:$0xf]
        %v634 = vld [vmem:[%s337 + $0xb6c] sm:$0xff]
        %v635 = vld [vmem:[%s337 + $0xb74] sm:$0xff]
        %v636 = vld [vmem:[%s337 + $0xb7c] sm:$0xff]
        %v637 = vld [vmem:[%s337 + $0xb84] sm:$0xff]
        %v638 = vld [vmem:[%s337 + $0xb8c] sm:$0xf]
        %v639 = vld [vmem:[%s337 + $0xbb0] sm:$0xff]
        %v640 = vld [vmem:[%s337 + $0xbb8] sm:$0xff]
        %v641 = vld [vmem:[%s337 + $0xbc0] sm:$0xff]
        %v642 = vld [vmem:[%s337 + $0xbc8] sm:$0xff]
        %v643 = vld [vmem:[%s337 + $0xbd0] sm:$0xf]
        %v644 = vld [vmem:[%s337 + $0xbf4] sm:$0xff]
        %v645 = vld [vmem:[%s337 + $0xbfc] sm:$0xff]
        %v646 = vld [vmem:[%s337 + $0xc04] sm:$0xff]
        %v647 = vld [vmem:[%s337 + $0xc0c] sm:$0xff]
        %v648 = vld [vmem:[%s337 + $0xc14] sm:$0xf]
        %v649 = vld [vmem:[%s337 + $0xc38] sm:$0xff]
        %v650 = vld [vmem:[%s337 + $0xc40] sm:$0xff]
        %v651 = vld [vmem:[%s337 + $0xc48] sm:$0xff]
        %v652 = vld [vmem:[%s337 + $0xc50] sm:$0xff]
        %v653 = vld [vmem:[%s337 + $0xc58] sm:$0xf]
        %v654 = vld [vmem:[%s337 + $0xc7c] sm:$0xff]
        %v655 = vld [vmem:[%s337 + $0xc84] sm:$0xff]
        %v656 = vld [vmem:[%s337 + $0xc8c] sm:$0xff]
        %v657 = vld [vmem:[%s337 + $0xc94] sm:$0xff]
        %v658 = vld [vmem:[%s337 + $0xc9c] sm:$0xf]
        %v659 = vld [vmem:[%s357] ss:$8 sm:$0xf]
        %v660 = vld [vmem:[%s357] ss:$8 sm:$0xf0]
        %v661 = vor.u32 %v659, %v660
        %s662 = scalar_lea.vmem %s357, 64 [#allocation10]
        %v663 = vld [vmem:[%s662] ss:$8 sm:$0x1]
        %v666 = vperm.slane %v661, 0
        %v667 = vperm.slane %v661, 1
        %v668 = vperm.slane %v661, 2
        %v669 = vperm.slane %v661, 3
        %v670 = vperm.slane %v661, 4
        %v671 = vperm.slane %v661, 5
        %v672 = vperm.slane %v661, 6
        %v673 = vperm.slane %v661, 7
        %v674 = vperm.slane %v663, 0
        %v924 = vunpack.c.l.b16 %v419
        %v925 = vunpack.c.h.b16 %v419
        %v926 = vunpack.c.l.b16 %v420
        %v927 = vunpack.c.h.b16 %v420
        %v928 = vunpack.c.l.b16 %v421
        %v929 = vunpack.c.h.b16 %v421
        %v930 = vunpack.c.l.b16 %v422
        %v931 = vunpack.c.h.b16 %v422
        %v932 = vunpack.c.l.b16 %v423
        %v933 = vunpack.c.l.b16 %v424
        %v934 = vunpack.c.h.b16 %v424
        %v935 = vunpack.c.l.b16 %v425
        %v936 = vunpack.c.h.b16 %v425
        %v937 = vunpack.c.l.b16 %v426
        %v938 = vunpack.c.h.b16 %v426
        %v939 = vunpack.c.l.b16 %v427
        %v940 = vunpack.c.h.b16 %v427
        %v941 = vunpack.c.l.b16 %v428
        %v942 = vunpack.c.l.b16 %v429
        %v943 = vunpack.c.h.b16 %v429
        %v944 = vunpack.c.l.b16 %v430
        %v945 = vunpack.c.h.b16 %v430
        %v946 = vunpack.c.l.b16 %v431
        %v947 = vunpack.c.h.b16 %v431
        %v948 = vunpack.c.l.b16 %v432
        %v949 = vunpack.c.h.b16 %v432
        %v950 = vunpack.c.l.b16 %v433
        %v951 = vunpack.c.l.b16 %v434
        %v952 = vunpack.c.h.b16 %v434
        %v953 = vunpack.c.l.b16 %v435
        %v954 = vunpack.c.h.b16 %v435
        %v955 = vunpack.c.l.b16 %v436
        %v956 = vunpack.c.h.b16 %v436
        %v957 = vunpack.c.l.b16 %v437
        %v958 = vunpack.c.h.b16 %v437
        %v959 = vunpack.c.l.b16 %v438
        %v960 = vunpack.c.l.b16 %v439
        %v961 = vunpack.c.h.b16 %v439
        %v962 = vunpack.c.l.b16 %v440
        %v963 = vunpack.c.h.b16 %v440
        %v964 = vunpack.c.l.b16 %v441
        %v965 = vunpack.c.h.b16 %v441
        %v966 = vunpack.c.l.b16 %v442
        %v967 = vunpack.c.h.b16 %v442
        %v968 = vunpack.c.l.b16 %v443
        %v969 = vunpack.c.l.b16 %v444
        %v970 = vunpack.c.h.b16 %v444
        %v971 = vunpack.c.l.b16 %v445
        %v972 = vunpack.c.h.b16 %v445
        %v973 = vunpack.c.l.b16 %v446
        %v974 = vunpack.c.h.b16 %v446
        %v975 = vunpack.c.l.b16 %v447
        %v976 = vunpack.c.h.b16 %v447
        %v977 = vunpack.c.l.b16 %v448
        %v978 = vunpack.c.l.b16 %v449
        %v979 = vunpack.c.h.b16 %v449
        %v980 = vunpack.c.l.b16 %v450
        %v981 = vunpack.c.h.b16 %v450
        %v982 = vunpack.c.l.b16 %v451
        %v983 = vunpack.c.h.b16 %v451
        %v984 = vunpack.c.l.b16 %v452
        %v985 = vunpack.c.h.b16 %v452
        %v986 = vunpack.c.l.b16 %v453
        %v987 = vunpack.c.l.b16 %v454
        %v988 = vunpack.c.h.b16 %v454
        %v989 = vunpack.c.l.b16 %v455
        %v990 = vunpack.c.h.b16 %v455
        %v991 = vunpack.c.l.b16 %v456
        %v992 = vunpack.c.h.b16 %v456
        %v993 = vunpack.c.l.b16 %v457
        %v994 = vunpack.c.h.b16 %v457
        %v995 = vunpack.c.l.b16 %v458
        %v996 = vunpack.c.l.b16 %v459
        %v997 = vunpack.c.h.b16 %v459
        %v998 = vunpack.c.l.b16 %v460
        %v999 = vunpack.c.h.b16 %v460
        %v1000 = vunpack.c.l.b16 %v461
        %v1001 = vunpack.c.h.b16 %v461
        %v1002 = vunpack.c.l.b16 %v462
        %v1003 = vunpack.c.h.b16 %v462
        %v1004 = vunpack.c.l.b16 %v463
        %v1005 = vunpack.c.l.b16 %v464
        %v1006 = vunpack.c.h.b16 %v464
        %v1007 = vunpack.c.l.b16 %v465
        %v1008 = vunpack.c.h.b16 %v465
        %v1009 = vunpack.c.l.b16 %v466
        %v1010 = vunpack.c.h.b16 %v466
        %v1011 = vunpack.c.l.b16 %v467
        %v1012 = vunpack.c.h.b16 %v467
        %v1013 = vunpack.c.l.b16 %v468
        %v1014 = vunpack.c.l.b16 %v469
        %v1015 = vunpack.c.h.b16 %v469
        %v1016 = vunpack.c.l.b16 %v470
        %v1017 = vunpack.c.h.b16 %v470
        %v1018 = vunpack.c.l.b16 %v471
        %v1019 = vunpack.c.h.b16 %v471
        %v1020 = vunpack.c.l.b16 %v472
        %v1021 = vunpack.c.h.b16 %v472
        %v1022 = vunpack.c.l.b16 %v473
        %v1023 = vunpack.c.l.b16 %v474
        %v1024 = vunpack.c.h.b16 %v474
        %v1025 = vunpack.c.l.b16 %v475
        %v1026 = vunpack.c.h.b16 %v475
        %v1027 = vunpack.c.l.b16 %v476
        %v1028 = vunpack.c.h.b16 %v476
        %v1029 = vunpack.c.l.b16 %v477
        %v1030 = vunpack.c.h.b16 %v477
        %v1031 = vunpack.c.l.b16 %v478
        %v1032 = vunpack.c.l.b16 %v479
        %v1033 = vunpack.c.h.b16 %v479
        %v1034 = vunpack.c.l.b16 %v480
        %v1035 = vunpack.c.h.b16 %v480
        %v1036 = vunpack.c.l.b16 %v481
        %v1037 = vunpack.c.h.b16 %v481
        %v1038 = vunpack.c.l.b16 %v482
        %v1039 = vunpack.c.h.b16 %v482
        %v1040 = vunpack.c.l.b16 %v483
        %v1041 = vunpack.c.l.b16 %v484
        %v1042 = vunpack.c.h.b16 %v484
        %v1043 = vunpack.c.l.b16 %v485
        %v1044 = vunpack.c.h.b16 %v485
        %v1045 = vunpack.c.l.b16 %v486
        %v1046 = vunpack.c.h.b16 %v486
        %v1047 = vunpack.c.l.b16 %v487
        %v1048 = vunpack.c.h.b16 %v487
        %v1049 = vunpack.c.l.b16 %v488
        %v1050 = vunpack.c.l.b16 %v489
        %v1051 = vunpack.c.h.b16 %v489
        %v1052 = vunpack.c.l.b16 %v490
        %v1053 = vunpack.c.h.b16 %v490
        %v1054 = vunpack.c.l.b16 %v491
        %v1055 = vunpack.c.h.b16 %v491
        %v1056 = vunpack.c.l.b16 %v492
        %v1057 = vunpack.c.h.b16 %v492
        %v1058 = vunpack.c.l.b16 %v493
        %v1059 = vunpack.c.l.b16 %v494
        %v1060 = vunpack.c.h.b16 %v494
        %v1061 = vunpack.c.l.b16 %v495
        %v1062 = vunpack.c.h.b16 %v495
        %v1063 = vunpack.c.l.b16 %v496
        %v1064 = vunpack.c.h.b16 %v496
        %v1065 = vunpack.c.l.b16 %v497
        %v1066 = vunpack.c.h.b16 %v497
        %v1067 = vunpack.c.l.b16 %v498
        %v1068 = vunpack.c.l.b16 %v499
        %v1069 = vunpack.c.h.b16 %v499
        %v1070 = vunpack.c.l.b16 %v500
        %v1071 = vunpack.c.h.b16 %v500
        %v1072 = vunpack.c.l.b16 %v501
        %v1073 = vunpack.c.h.b16 %v501
        %v1074 = vunpack.c.l.b16 %v502
        %v1075 = vunpack.c.h.b16 %v502
        %v1076 = vunpack.c.l.b16 %v503
        %v1077 = vunpack.c.l.b16 %v504
        %v1078 = vunpack.c.h.b16 %v504
        %v1079 = vunpack.c.l.b16 %v505
        %v1080 = vunpack.c.h.b16 %v505
        %v1081 = vunpack.c.l.b16 %v506
        %v1082 = vunpack.c.h.b16 %v506
        %v1083 = vunpack.c.l.b16 %v507
        %v1084 = vunpack.c.h.b16 %v507
        %v1085 = vunpack.c.l.b16 %v508
        %v1086 = vunpack.c.l.b16 %v509
        %v1087 = vunpack.c.h.b16 %v509
        %v1088 = vunpack.c.l.b16 %v510
        %v1089 = vunpack.c.h.b16 %v510
        %v1090 = vunpack.c.l.b16 %v511
        %v1091 = vunpack.c.h.b16 %v511
        %v1092 = vunpack.c.l.b16 %v512
        %v1093 = vunpack.c.h.b16 %v512
        %v1094 = vunpack.c.l.b16 %v513
        %v1095 = vunpack.c.l.b16 %v514
        %v1096 = vunpack.c.h.b16 %v514
        %v1097 = vunpack.c.l.b16 %v515
        %v1098 = vunpack.c.h.b16 %v515
        %v1099 = vunpack.c.l.b16 %v516
        %v1100 = vunpack.c.h.b16 %v516
        %v1101 = vunpack.c.l.b16 %v517
        %v1102 = vunpack.c.h.b16 %v517
        %v1103 = vunpack.c.l.b16 %v518
        %v1104 = vunpack.c.l.b16 %v519
        %v1105 = vunpack.c.h.b16 %v519
        %v1106 = vunpack.c.l.b16 %v520
        %v1107 = vunpack.c.h.b16 %v520
        %v1108 = vunpack.c.l.b16 %v521
        %v1109 = vunpack.c.h.b16 %v521
        %v1110 = vunpack.c.l.b16 %v522
        %v1111 = vunpack.c.h.b16 %v522
        %v1112 = vunpack.c.l.b16 %v523
        %v1113 = vunpack.c.l.b16 %v524
        %v1114 = vunpack.c.h.b16 %v524
        %v1115 = vunpack.c.l.b16 %v525
        %v1116 = vunpack.c.h.b16 %v525
        %v1117 = vunpack.c.l.b16 %v526
        %v1118 = vunpack.c.h.b16 %v526
        %v1119 = vunpack.c.l.b16 %v527
        %v1120 = vunpack.c.h.b16 %v527
        %v1121 = vunpack.c.l.b16 %v528
        %v1122 = vunpack.c.l.b16 %v529
        %v1123 = vunpack.c.h.b16 %v529
        %v1124 = vunpack.c.l.b16 %v530
        %v1125 = vunpack.c.h.b16 %v530
        %v1126 = vunpack.c.l.b16 %v531
        %v1127 = vunpack.c.h.b16 %v531
        %v1128 = vunpack.c.l.b16 %v532
        %v1129 = vunpack.c.h.b16 %v532
        %v1130 = vunpack.c.l.b16 %v533
        %v1131 = vunpack.c.l.b16 %v534
        %v1132 = vunpack.c.h.b16 %v534
        %v1133 = vunpack.c.l.b16 %v535
        %v1134 = vunpack.c.h.b16 %v535
        %v1135 = vunpack.c.l.b16 %v536
        %v1136 = vunpack.c.h.b16 %v536
        %v1137 = vunpack.c.l.b16 %v537
        %v1138 = vunpack.c.h.b16 %v537
        %v1139 = vunpack.c.l.b16 %v538
        %v1140 = vunpack.c.l.b16 %v539
        %v1141 = vunpack.c.h.b16 %v539
        %v1142 = vunpack.c.l.b16 %v540
        %v1143 = vunpack.c.h.b16 %v540
        %v1144 = vunpack.c.l.b16 %v541
        %v1145 = vunpack.c.h.b16 %v541
        %v1146 = vunpack.c.l.b16 %v542
        %v1147 = vunpack.c.h.b16 %v542
        %v1148 = vunpack.c.l.b16 %v543
        %v1149 = vunpack.c.l.b16 %v544
        %v1150 = vunpack.c.h.b16 %v544
        %v1151 = vunpack.c.l.b16 %v545
        %v1152 = vunpack.c.h.b16 %v545
        %v1153 = vunpack.c.l.b16 %v546
        %v1154 = vunpack.c.h.b16 %v546
        %v1155 = vunpack.c.l.b16 %v547
        %v1156 = vunpack.c.h.b16 %v547
        %v1157 = vunpack.c.l.b16 %v548
        %v1158 = vunpack.c.l.b16 %v549
        %v1159 = vunpack.c.h.b16 %v549
        %v1160 = vunpack.c.l.b16 %v550
        %v1161 = vunpack.c.h.b16 %v550
        %v1162 = vunpack.c.l.b16 %v551
        %v1163 = vunpack.c.h.b16 %v551
        %v1164 = vunpack.c.l.b16 %v552
        %v1165 = vunpack.c.h.b16 %v552
        %v1166 = vunpack.c.l.b16 %v553
        %v1167 = vunpack.c.l.b16 %v554
        %v1168 = vunpack.c.h.b16 %v554
        %v1169 = vunpack.c.l.b16 %v555
        %v1170 = vunpack.c.h.b16 %v555
        %v1171 = vunpack.c.l.b16 %v556
        %v1172 = vunpack.c.h.b16 %v556
        %v1173 = vunpack.c.l.b16 %v557
        %v1174 = vunpack.c.h.b16 %v557
        %v1175 = vunpack.c.l.b16 %v558
        %v1176 = vunpack.c.l.b16 %v559
        %v1177 = vunpack.c.h.b16 %v559
        %v1178 = vunpack.c.l.b16 %v560
        %v1179 = vunpack.c.h.b16 %v560
        %v1180 = vunpack.c.l.b16 %v561
        %v1181 = vunpack.c.h.b16 %v561
        %v1182 = vunpack.c.l.b16 %v562
        %v1183 = vunpack.c.h.b16 %v562
        %v1184 = vunpack.c.l.b16 %v563
        %v1185 = vunpack.c.l.b16 %v564
        %v1186 = vunpack.c.h.b16 %v564
        %v1187 = vunpack.c.l.b16 %v565
        %v1188 = vunpack.c.h.b16 %v565
        %v1189 = vunpack.c.l.b16 %v566
        %v1190 = vunpack.c.h.b16 %v566
        %v1191 = vunpack.c.l.b16 %v567
        %v1192 = vunpack.c.h.b16 %v567
        %v1193 = vunpack.c.l.b16 %v568
        %v1194 = vunpack.c.l.b16 %v569
        %v1195 = vunpack.c.h.b16 %v569
        %v1196 = vunpack.c.l.b16 %v570
        %v1197 = vunpack.c.h.b16 %v570
        %v1198 = vunpack.c.l.b16 %v571
        %v1199 = vunpack.c.h.b16 %v571
        %v1200 = vunpack.c.l.b16 %v572
        %v1201 = vunpack.c.h.b16 %v572
        %v1202 = vunpack.c.l.b16 %v573
        %v1203 = vunpack.c.l.b16 %v574
        %v1204 = vunpack.c.h.b16 %v574
        %v1205 = vunpack.c.l.b16 %v575
        %v1206 = vunpack.c.h.b16 %v575
        %v1207 = vunpack.c.l.b16 %v576
        %v1208 = vunpack.c.h.b16 %v576
        %v1209 = vunpack.c.l.b16 %v577
        %v1210 = vunpack.c.h.b16 %v577
        %v1211 = vunpack.c.l.b16 %v578
        %v1212 = vunpack.c.l.b16 %v579
        %v1213 = vunpack.c.h.b16 %v579
        %v1214 = vunpack.c.l.b16 %v580
        %v1215 = vunpack.c.h.b16 %v580
        %v1216 = vunpack.c.l.b16 %v581
        %v1217 = vunpack.c.h.b16 %v581
        %v1218 = vunpack.c.l.b16 %v582
        %v1219 = vunpack.c.h.b16 %v582
        %v1220 = vunpack.c.l.b16 %v583
        %v1221 = vunpack.c.l.b16 %v584
        %v1222 = vunpack.c.h.b16 %v584
        %v1223 = vunpack.c.l.b16 %v585
        %v1224 = vunpack.c.h.b16 %v585
        %v1225 = vunpack.c.l.b16 %v586
        %v1226 = vunpack.c.h.b16 %v586
        %v1227 = vunpack.c.l.b16 %v587
        %v1228 = vunpack.c.h.b16 %v587
        %v1229 = vunpack.c.l.b16 %v588
        %v1230 = vunpack.c.l.b16 %v589
        %v1231 = vunpack.c.h.b16 %v589
        %v1232 = vunpack.c.l.b16 %v590
        %v1233 = vunpack.c.h.b16 %v590
        %v1234 = vunpack.c.l.b16 %v591
        %v1235 = vunpack.c.h.b16 %v591
        %v1236 = vunpack.c.l.b16 %v592
        %v1237 = vunpack.c.h.b16 %v592
        %v1238 = vunpack.c.l.b16 %v593
        %v1239 = vunpack.c.l.b16 %v594
        %v1240 = vunpack.c.h.b16 %v594
        %v1241 = vunpack.c.l.b16 %v595
        %v1242 = vunpack.c.h.b16 %v595
        %v1243 = vunpack.c.l.b16 %v596
        %v1244 = vunpack.c.h.b16 %v596
        %v1245 = vunpack.c.l.b16 %v597
        %v1246 = vunpack.c.h.b16 %v597
        %v1247 = vunpack.c.l.b16 %v598
        %v1248 = vunpack.c.l.b16 %v599
        %v1249 = vunpack.c.h.b16 %v599
        %v1250 = vunpack.c.l.b16 %v600
        %v1251 = vunpack.c.h.b16 %v600
        %v1252 = vunpack.c.l.b16 %v601
        %v1253 = vunpack.c.h.b16 %v601
        %v1254 = vunpack.c.l.b16 %v602
        %v1255 = vunpack.c.h.b16 %v602
        %v1256 = vunpack.c.l.b16 %v603
        %v1257 = vunpack.c.l.b16 %v604
        %v1258 = vunpack.c.h.b16 %v604
        %v1259 = vunpack.c.l.b16 %v605
        %v1260 = vunpack.c.h.b16 %v605
        %v1261 = vunpack.c.l.b16 %v606
        %v1262 = vunpack.c.h.b16 %v606
        %v1263 = vunpack.c.l.b16 %v607
        %v1264 = vunpack.c.h.b16 %v607
        %v1265 = vunpack.c.l.b16 %v608
        %v1266 = vunpack.c.l.b16 %v609
        %v1267 = vunpack.c.h.b16 %v609
        %v1268 = vunpack.c.l.b16 %v610
        %v1269 = vunpack.c.h.b16 %v610
        %v1270 = vunpack.c.l.b16 %v611
        %v1271 = vunpack.c.h.b16 %v611
        %v1272 = vunpack.c.l.b16 %v612
        %v1273 = vunpack.c.h.b16 %v612
        %v1274 = vunpack.c.l.b16 %v613
        %v1275 = vunpack.c.l.b16 %v614
        %v1276 = vunpack.c.h.b16 %v614
        %v1277 = vunpack.c.l.b16 %v615
        %v1278 = vunpack.c.h.b16 %v615
        %v1279 = vunpack.c.l.b16 %v616
        %v1280 = vunpack.c.h.b16 %v616
        %v1281 = vunpack.c.l.b16 %v617
        %v1282 = vunpack.c.h.b16 %v617
        %v1283 = vunpack.c.l.b16 %v618
        %v1284 = vunpack.c.l.b16 %v619
        %v1285 = vunpack.c.h.b16 %v619
        %v1286 = vunpack.c.l.b16 %v620
        %v1287 = vunpack.c.h.b16 %v620
        %v1288 = vunpack.c.l.b16 %v621
        %v1289 = vunpack.c.h.b16 %v621
        %v1290 = vunpack.c.l.b16 %v622
        %v1291 = vunpack.c.h.b16 %v622
        %v1292 = vunpack.c.l.b16 %v623
        %v1293 = vunpack.c.l.b16 %v624
        %v1294 = vunpack.c.h.b16 %v624
        %v1295 = vunpack.c.l.b16 %v625
        %v1296 = vunpack.c.h.b16 %v625
        %v1297 = vunpack.c.l.b16 %v626
        %v1298 = vunpack.c.h.b16 %v626
        %v1299 = vunpack.c.l.b16 %v627
        %v1300 = vunpack.c.h.b16 %v627
        %v1301 = vunpack.c.l.b16 %v628
        %v1302 = vunpack.c.l.b16 %v629
        %v1303 = vunpack.c.h.b16 %v629
        %v1304 = vunpack.c.l.b16 %v630
        %v1305 = vunpack.c.h.b16 %v630
        %v1306 = vunpack.c.l.b16 %v631
        %v1307 = vunpack.c.h.b16 %v631
        %v1308 = vunpack.c.l.b16 %v632
        %v1309 = vunpack.c.h.b16 %v632
        %v1310 = vunpack.c.l.b16 %v633
        %v1311 = vunpack.c.l.b16 %v634
        %v1312 = vunpack.c.h.b16 %v634
        %v1313 = vunpack.c.l.b16 %v635
        %v1314 = vunpack.c.h.b16 %v635
        %v1315 = vunpack.c.l.b16 %v636
        %v1316 = vunpack.c.h.b16 %v636
        %v1317 = vunpack.c.l.b16 %v637
        %v1318 = vunpack.c.h.b16 %v637
        %v1319 = vunpack.c.l.b16 %v638
        %v1320 = vunpack.c.l.b16 %v639
        %v1321 = vunpack.c.h.b16 %v639
        %v1322 = vunpack.c.l.b16 %v640
        %v1323 = vunpack.c.h.b16 %v640
        %v1324 = vunpack.c.l.b16 %v641
        %v1325 = vunpack.c.h.b16 %v641
        %v1326 = vunpack.c.l.b16 %v642
        %v1327 = vunpack.c.h.b16 %v642
        %v1328 = vunpack.c.l.b16 %v643
        %v1329 = vunpack.c.l.b16 %v644
        %v1330 = vunpack.c.h.b16 %v644
        %v1331 = vunpack.c.l.b16 %v645
        %v1332 = vunpack.c.h.b16 %v645
        %v1333 = vunpack.c.l.b16 %v646
        %v1334 = vunpack.c.h.b16 %v646
        %v1335 = vunpack.c.l.b16 %v647
        %v1336 = vunpack.c.h.b16 %v647
        %v1337 = vunpack.c.l.b16 %v648
        %v1338 = vunpack.c.l.b16 %v649
        %v1339 = vunpack.c.h.b16 %v649
        %v1340 = vunpack.c.l.b16 %v650
        %v1341 = vunpack.c.h.b16 %v650
        %v1342 = vunpack.c.l.b16 %v651
        %v1343 = vunpack.c.h.b16 %v651
        %v1344 = vunpack.c.l.b16 %v652
        %v1345 = vunpack.c.h.b16 %v652
        %v1346 = vunpack.c.l.b16 %v653
        %v1347 = vunpack.c.l.b16 %v654
        %v1348 = vunpack.c.h.b16 %v654
        %v1349 = vunpack.c.l.b16 %v655
        %v1350 = vunpack.c.h.b16 %v655
        %v1351 = vunpack.c.l.b16 %v656
        %v1352 = vunpack.c.h.b16 %v656
        %v1353 = vunpack.c.l.b16 %v657
        %v1354 = vunpack.c.h.b16 %v657
        %v1355 = vunpack.c.l.b16 %v658
        %v1356 = vpack.c.b16 %v933, %v924
        %v1357 = vpack.c.b16 %v934, %v925
        %v1358 = vpack.c.b16 %v935, %v926
        %v1359 = vpack.c.b16 %v936, %v927
        %v1360 = vpack.c.b16 %v937, %v928
        %v1361 = vpack.c.b16 %v938, %v929
        %v1362 = vpack.c.b16 %v939, %v930
        %v1363 = vpack.c.b16 %v940, %v931
        %v1364 = vpack.c.b16 %v941, %v932
        %v1365 = vpack.c.b16 %v951, %v942
        %v1366 = vpack.c.b16 %v952, %v943
        %v1367 = vpack.c.b16 %v953, %v944
        %v1368 = vpack.c.b16 %v954, %v945
        %v1369 = vpack.c.b16 %v955, %v946
        %v1370 = vpack.c.b16 %v956, %v947
        %v1371 = vpack.c.b16 %v957, %v948
        %v1372 = vpack.c.b16 %v958, %v949
        %v1373 = vpack.c.b16 %v959, %v950
        %v1374 = vpack.c.b16 %v969, %v960
        %v1375 = vpack.c.b16 %v970, %v961
        %v1376 = vpack.c.b16 %v971, %v962
        %v1377 = vpack.c.b16 %v972, %v963
        %v1378 = vpack.c.b16 %v973, %v964
        %v1379 = vpack.c.b16 %v974, %v965
        %v1380 = vpack.c.b16 %v975, %v966
        %v1381 = vpack.c.b16 %v976, %v967
        %v1382 = vpack.c.b16 %v977, %v968
        %v1383 = vpack.c.b16 %v987, %v978
        %v1384 = vpack.c.b16 %v988, %v979
        %v1385 = vpack.c.b16 %v989, %v980
        %v1386 = vpack.c.b16 %v990, %v981
        %v1387 = vpack.c.b16 %v991, %v982
        %v1388 = vpack.c.b16 %v992, %v983
        %v1389 = vpack.c.b16 %v993, %v984
        %v1390 = vpack.c.b16 %v994, %v985
        %v1391 = vpack.c.b16 %v995, %v986
        %v1392 = vpack.c.b16 %v1005, %v996
        %v1393 = vpack.c.b16 %v1006, %v997
        %v1394 = vpack.c.b16 %v1007, %v998
        %v1395 = vpack.c.b16 %v1008, %v999
        %v1396 = vpack.c.b16 %v1009, %v1000
        %v1397 = vpack.c.b16 %v1010, %v1001
        %v1398 = vpack.c.b16 %v1011, %v1002
        %v1399 = vpack.c.b16 %v1012, %v1003
        %v1400 = vpack.c.b16 %v1013, %v1004
        %v1401 = vpack.c.b16 %v1023, %v1014
        %v1402 = vpack.c.b16 %v1024, %v1015
        %v1403 = vpack.c.b16 %v1025, %v1016
        %v1404 = vpack.c.b16 %v1026, %v1017
        %v1405 = vpack.c.b16 %v1027, %v1018
        %v1406 = vpack.c.b16 %v1028, %v1019
        %v1407 = vpack.c.b16 %v1029, %v1020
        %v1408 = vpack.c.b16 %v1030, %v1021
        %v1409 = vpack.c.b16 %v1031, %v1022
        %v1410 = vpack.c.b16 %v1041, %v1032
        %v1411 = vpack.c.b16 %v1042, %v1033
        %v1412 = vpack.c.b16 %v1043, %v1034
        %v1413 = vpack.c.b16 %v1044, %v1035
        %v1414 = vpack.c.b16 %v1045, %v1036
        %v1415 = vpack.c.b16 %v1046, %v1037
        %v1416 = vpack.c.b16 %v1047, %v1038
        %v1417 = vpack.c.b16 %v1048, %v1039
        %v1418 = vpack.c.b16 %v1049, %v1040
        %v1419 = vpack.c.b16 %v1059, %v1050
        %v1420 = vpack.c.b16 %v1060, %v1051
        %v1421 = vpack.c.b16 %v1061, %v1052
        %v1422 = vpack.c.b16 %v1062, %v1053
        %v1423 = vpack.c.b16 %v1063, %v1054
        %v1424 = vpack.c.b16 %v1064, %v1055
        %v1425 = vpack.c.b16 %v1065, %v1056
        %v1426 = vpack.c.b16 %v1066, %v1057
        %v1427 = vpack.c.b16 %v1067, %v1058
        %v1428 = vpack.c.b16 %v1077, %v1068
        %v1429 = vpack.c.b16 %v1078, %v1069
        %v1430 = vpack.c.b16 %v1079, %v1070
        %v1431 = vpack.c.b16 %v1080, %v1071
        %v1432 = vpack.c.b16 %v1081, %v1072
        %v1433 = vpack.c.b16 %v1082, %v1073
        %v1434 = vpack.c.b16 %v1083, %v1074
        %v1435 = vpack.c.b16 %v1084, %v1075
        %v1436 = vpack.c.b16 %v1085, %v1076
        %v1437 = vpack.c.b16 %v1095, %v1086
        %v1438 = vpack.c.b16 %v1096, %v1087
        %v1439 = vpack.c.b16 %v1097, %v1088
        %v1440 = vpack.c.b16 %v1098, %v1089
        %v1441 = vpack.c.b16 %v1099, %v1090
        %v1442 = vpack.c.b16 %v1100, %v1091
        %v1443 = vpack.c.b16 %v1101, %v1092
        %v1444 = vpack.c.b16 %v1102, %v1093
        %v1445 = vpack.c.b16 %v1103, %v1094
        %v1446 = vpack.c.b16 %v1113, %v1104
        %v1447 = vpack.c.b16 %v1114, %v1105
        %v1448 = vpack.c.b16 %v1115, %v1106
        %v1449 = vpack.c.b16 %v1116, %v1107
        %v1450 = vpack.c.b16 %v1117, %v1108
        %v1451 = vpack.c.b16 %v1118, %v1109
        %v1452 = vpack.c.b16 %v1119, %v1110
        %v1453 = vpack.c.b16 %v1120, %v1111
        %v1454 = vpack.c.b16 %v1121, %v1112
        %v1455 = vpack.c.b16 %v1131, %v1122
        %v1456 = vpack.c.b16 %v1132, %v1123
        %v1457 = vpack.c.b16 %v1133, %v1124
        %v1458 = vpack.c.b16 %v1134, %v1125
        %v1459 = vpack.c.b16 %v1135, %v1126
        %v1460 = vpack.c.b16 %v1136, %v1127
        %v1461 = vpack.c.b16 %v1137, %v1128
        %v1462 = vpack.c.b16 %v1138, %v1129
        %v1463 = vpack.c.b16 %v1139, %v1130
        %v1464 = vpack.c.b16 %v1149, %v1140
        %v1465 = vpack.c.b16 %v1150, %v1141
        %v1466 = vpack.c.b16 %v1151, %v1142
        %v1467 = vpack.c.b16 %v1152, %v1143
        %v1468 = vpack.c.b16 %v1153, %v1144
        %v1469 = vpack.c.b16 %v1154, %v1145
        %v1470 = vpack.c.b16 %v1155, %v1146
        %v1471 = vpack.c.b16 %v1156, %v1147
        %v1472 = vpack.c.b16 %v1157, %v1148
        %v1473 = vpack.c.b16 %v1167, %v1158
        %v1474 = vpack.c.b16 %v1168, %v1159
        %v1475 = vpack.c.b16 %v1169, %v1160
        %v1476 = vpack.c.b16 %v1170, %v1161
        %v1477 = vpack.c.b16 %v1171, %v1162
        %v1478 = vpack.c.b16 %v1172, %v1163
        %v1479 = vpack.c.b16 %v1173, %v1164
        %v1480 = vpack.c.b16 %v1174, %v1165
        %v1481 = vpack.c.b16 %v1175, %v1166
        %v1482 = vpack.c.b16 %v1185, %v1176
        %v1483 = vpack.c.b16 %v1186, %v1177
        %v1484 = vpack.c.b16 %v1187, %v1178
        %v1485 = vpack.c.b16 %v1188, %v1179
        %v1486 = vpack.c.b16 %v1189, %v1180
        %v1487 = vpack.c.b16 %v1190, %v1181
        %v1488 = vpack.c.b16 %v1191, %v1182
        %v1489 = vpack.c.b16 %v1192, %v1183
        %v1490 = vpack.c.b16 %v1193, %v1184
        %v1491 = vpack.c.b16 %v1203, %v1194
        %v1492 = vpack.c.b16 %v1204, %v1195
        %v1493 = vpack.c.b16 %v1205, %v1196
        %v1494 = vpack.c.b16 %v1206, %v1197
        %v1495 = vpack.c.b16 %v1207, %v1198
        %v1496 = vpack.c.b16 %v1208, %v1199
        %v1497 = vpack.c.b16 %v1209, %v1200
        %v1498 = vpack.c.b16 %v1210, %v1201
        %v1499 = vpack.c.b16 %v1211, %v1202
        %v1500 = vpack.c.b16 %v1221, %v1212
        %v1501 = vpack.c.b16 %v1222, %v1213
        %v1502 = vpack.c.b16 %v1223, %v1214
        %v1503 = vpack.c.b16 %v1224, %v1215
        %v1504 = vpack.c.b16 %v1225, %v1216
        %v1505 = vpack.c.b16 %v1226, %v1217
        %v1506 = vpack.c.b16 %v1227, %v1218
        %v1507 = vpack.c.b16 %v1228, %v1219
        %v1508 = vpack.c.b16 %v1229, %v1220
        %v1509 = vpack.c.b16 %v1239, %v1230
        %v1510 = vpack.c.b16 %v1240, %v1231
        %v1511 = vpack.c.b16 %v1241, %v1232
        %v1512 = vpack.c.b16 %v1242, %v1233
        %v1513 = vpack.c.b16 %v1243, %v1234
        %v1514 = vpack.c.b16 %v1244, %v1235
        %v1515 = vpack.c.b16 %v1245, %v1236
        %v1516 = vpack.c.b16 %v1246, %v1237
        %v1517 = vpack.c.b16 %v1247, %v1238
        %v1518 = vpack.c.b16 %v1257, %v1248
        %v1519 = vpack.c.b16 %v1258, %v1249
        %v1520 = vpack.c.b16 %v1259, %v1250
        %v1521 = vpack.c.b16 %v1260, %v1251
        %v1522 = vpack.c.b16 %v1261, %v1252
        %v1523 = vpack.c.b16 %v1262, %v1253
        %v1524 = vpack.c.b16 %v1263, %v1254
        %v1525 = vpack.c.b16 %v1264, %v1255
        %v1526 = vpack.c.b16 %v1265, %v1256
        %v1527 = vpack.c.b16 %v1275, %v1266
        %v1528 = vpack.c.b16 %v1276, %v1267
        %v1529 = vpack.c.b16 %v1277, %v1268
        %v1530 = vpack.c.b16 %v1278, %v1269
        %v1531 = vpack.c.b16 %v1279, %v1270
        %v1532 = vpack.c.b16 %v1280, %v1271
        %v1533 = vpack.c.b16 %v1281, %v1272
        %v1534 = vpack.c.b16 %v1282, %v1273
        %v1535 = vpack.c.b16 %v1283, %v1274
        %v1536 = vpack.c.b16 %v1293, %v1284
        %v1537 = vpack.c.b16 %v1294, %v1285
        %v1538 = vpack.c.b16 %v1295, %v1286
        %v1539 = vpack.c.b16 %v1296, %v1287
        %v1540 = vpack.c.b16 %v1297, %v1288
        %v1541 = vpack.c.b16 %v1298, %v1289
        %v1542 = vpack.c.b16 %v1299, %v1290
        %v1543 = vpack.c.b16 %v1300, %v1291
        %v1544 = vpack.c.b16 %v1301, %v1292
        %v1545 = vpack.c.b16 %v1311, %v1302
        %v1546 = vpack.c.b16 %v1312, %v1303
        %v1547 = vpack.c.b16 %v1313, %v1304
        %v1548 = vpack.c.b16 %v1314, %v1305
        %v1549 = vpack.c.b16 %v1315, %v1306
        %v1550 = vpack.c.b16 %v1316, %v1307
        %v1551 = vpack.c.b16 %v1317, %v1308
        %v1552 = vpack.c.b16 %v1318, %v1309
        %v1553 = vpack.c.b16 %v1319, %v1310
        %v1554 = vpack.c.b16 %v1329, %v1320
        %v1555 = vpack.c.b16 %v1330, %v1321
        %v1556 = vpack.c.b16 %v1331, %v1322
        %v1557 = vpack.c.b16 %v1332, %v1323
        %v1558 = vpack.c.b16 %v1333, %v1324
        %v1559 = vpack.c.b16 %v1334, %v1325
        %v1560 = vpack.c.b16 %v1335, %v1326
        %v1561 = vpack.c.b16 %v1336, %v1327
        %v1562 = vpack.c.b16 %v1337, %v1328
        %v1563 = vpack.c.b16 %v1347, %v1338
        %v1564 = vpack.c.b16 %v1348, %v1339
        %v1565 = vpack.c.b16 %v1349, %v1340
        %v1566 = vpack.c.b16 %v1350, %v1341
        %v1567 = vpack.c.b16 %v1351, %v1342
        %v1568 = vpack.c.b16 %v1352, %v1343
        %v1569 = vpack.c.b16 %v1353, %v1344
        %v1570 = vpack.c.b16 %v1354, %v1345
        %v1571 = vpack.c.b16 %v1355, %v1346
        %1788 = vmatpush.bf16.msra.mxu0 %v1419
        %1789 = vmatpush.bf16.msra.mxu0 %v1410
        %1790 = vmatpush.bf16.msra.mxu0 %v1401
        %1791 = vmatpush.bf16.msra.mxu0 %v1392
        %1792 = vmatpush.bf16.msra.mxu0 %v1383
        %1793 = vmatpush.bf16.msra.mxu0 %v1374
        %1794 = vmatpush.bf16.msra.mxu0 %v1365
        %1795 = vmatpush.bf16.msra.mxu0 %v1356
        %1796 = vmatmul.bf16.gmra.mxu0 %v416
        %v1797 = vpop.f32.mrf.mxu0
        %v1798 = vadd.f32 %v666, %v1797
        %v1799 = vpop.f32.mrf.mxu0
        %v1800 = vadd.f32 %v666, %v1799
        %1801 = vdwg.mxu0
        %1802 = vmatpush.bf16.msra.mxu0 %v1491
        %1803 = vmatpush.bf16.msra.mxu0 %v1482
        %1804 = vmatpush.bf16.msra.mxu0 %v1473
        %1805 = vmatpush.bf16.msra.mxu0 %v1464
        %1806 = vmatpush.bf16.msra.mxu0 %v1455
        %1807 = vmatpush.bf16.msra.mxu0 %v1446
        %1808 = vmatpush.bf16.msra.mxu0 %v1437
        %1809 = vmatpush.bf16.msra.mxu0 %v1428
        %1810 = vmatmul.bf16.gmra.mxu0 %v417
        %v1811 = vpop.f32.mrf.mxu0
        %v1812 = vadd.f32 %v1798, %v1811
        %v1813 = vpop.f32.mrf.mxu0
        %v1814 = vadd.f32 %v1800, %v1813
        %1815 = vdwg.mxu0
        %1816 = vmatpush.bf16.msra.mxu0 %v1563
        %1817 = vmatpush.bf16.msra.mxu0 %v1554
        %1818 = vmatpush.bf16.msra.mxu0 %v1545
        %1819 = vmatpush.bf16.msra.mxu0 %v1536
        %1820 = vmatpush.bf16.msra.mxu0 %v1527
        %1821 = vmatpush.bf16.msra.mxu0 %v1518
        %1822 = vmatpush.bf16.msra.mxu0 %v1509
        %1823 = vmatpush.bf16.msra.mxu0 %v1500
        %1824 = vmatmul.bf16.gmra.mxu0 %v418
        %v1825 = vpop.f32.mrf.mxu0
        %v1826 = vadd.f32 %v1812, %v1825
        %v1827 = vpop.f32.mrf.mxu0
        %v1828 = vadd.f32 %v1814, %v1827
        %1829 = vdwg.mxu0
        %1830 = vmatpush.bf16.msra.mxu0 %v1420
        %1831 = vmatpush.bf16.msra.mxu0 %v1411
        %1832 = vmatpush.bf16.msra.mxu0 %v1402
        %1833 = vmatpush.bf16.msra.mxu0 %v1393
        %1834 = vmatpush.bf16.msra.mxu0 %v1384
        %1835 = vmatpush.bf16.msra.mxu0 %v1375
        %1836 = vmatpush.bf16.msra.mxu0 %v1366
        %1837 = vmatpush.bf16.msra.mxu0 %v1357
        %1838 = vmatmul.bf16.gmra.mxu0 %v416
        %v1839 = vpop.f32.mrf.mxu0
        %v1840 = vadd.f32 %v667, %v1839
        %v1841 = vpop.f32.mrf.mxu0
        %v1842 = vadd.f32 %v667, %v1841
        %1843 = vdwg.mxu0
        %1844 = vmatpush.bf16.msra.mxu0 %v1492
        %1845 = vmatpush.bf16.msra.mxu0 %v1483
        %1846 = vmatpush.bf16.msra.mxu0 %v1474
        %1847 = vmatpush.bf16.msra.mxu0 %v1465
        %1848 = vmatpush.bf16.msra.mxu0 %v1456
        %1849 = vmatpush.bf16.msra.mxu0 %v1447
        %1850 = vmatpush.bf16.msra.mxu0 %v1438
        %1851 = vmatpush.bf16.msra.mxu0 %v1429
        %1852 = vmatmul.bf16.gmra.mxu0 %v417
        %v1853 = vpop.f32.mrf.mxu0
        %v1854 = vadd.f32 %v1840, %v1853
        %v1855 = vpop.f32.mrf.mxu0
        %v1856 = vadd.f32 %v1842, %v1855
        %1857 = vdwg.mxu0
        %1858 = vmatpush.bf16.msra.mxu0 %v1564
        %1859 = vmatpush.bf16.msra.mxu0 %v1555
        %1860 = vmatpush.bf16.msra.mxu0 %v1546
        %1861 = vmatpush.bf16.msra.mxu0 %v1537
        %1862 = vmatpush.bf16.msra.mxu0 %v1528
        %1863 = vmatpush.bf16.msra.mxu0 %v1519
        %1864 = vmatpush.bf16.msra.mxu0 %v1510
        %1865 = vmatpush.bf16.msra.mxu0 %v1501
        %1866 = vmatmul.bf16.gmra.mxu0 %v418
        %v1867 = vpop.f32.mrf.mxu0
        %v1868 = vadd.f32 %v1854, %v1867
        %v1869 = vpop.f32.mrf.mxu0
        %v1870 = vadd.f32 %v1856, %v1869
        %1871 = vdwg.mxu0
        %1872 = vmatpush.bf16.msra.mxu0 %v1421
        %1873 = vmatpush.bf16.msra.mxu0 %v1412
        %1874 = vmatpush.bf16.msra.mxu0 %v1403
        %1875 = vmatpush.bf16.msra.mxu0 %v1394
        %1876 = vmatpush.bf16.msra.mxu0 %v1385
        %1877 = vmatpush.bf16.msra.mxu0 %v1376
        %1878 = vmatpush.bf16.msra.mxu0 %v1367
        %1879 = vmatpush.bf16.msra.mxu0 %v1358
        %1880 = vmatmul.bf16.gmra.mxu0 %v416
        %v1881 = vpop.f32.mrf.mxu0
        %v1882 = vadd.f32 %v668, %v1881
        %v1883 = vpop.f32.mrf.mxu0
        %v1884 = vadd.f32 %v668, %v1883
        %1885 = vdwg.mxu0
        %1886 = vmatpush.bf16.msra.mxu0 %v1493
        %1887 = vmatpush.bf16.msra.mxu0 %v1484
        %1888 = vmatpush.bf16.msra.mxu0 %v1475
        %1889 = vmatpush.bf16.msra.mxu0 %v1466
        %1890 = vmatpush.bf16.msra.mxu0 %v1457
        %1891 = vmatpush.bf16.msra.mxu0 %v1448
        %1892 = vmatpush.bf16.msra.mxu0 %v1439
        %1893 = vmatpush.bf16.msra.mxu0 %v1430
        %1894 = vmatmul.bf16.gmra.mxu0 %v417
        %v1895 = vpop.f32.mrf.mxu0
        %v1896 = vadd.f32 %v1882, %v1895
        %v1897 = vpop.f32.mrf.mxu0
        %v1898 = vadd.f32 %v1884, %v1897
        %1899 = vdwg.mxu0
        %1900 = vmatpush.bf16.msra.mxu0 %v1565
        %1901 = vmatpush.bf16.msra.mxu0 %v1556
        %1902 = vmatpush.bf16.msra.mxu0 %v1547
        %1903 = vmatpush.bf16.msra.mxu0 %v1538
        %1904 = vmatpush.bf16.msra.mxu0 %v1529
        %1905 = vmatpush.bf16.msra.mxu0 %v1520
        %1906 = vmatpush.bf16.msra.mxu0 %v1511
        %1907 = vmatpush.bf16.msra.mxu0 %v1502
        %1908 = vmatmul.bf16.gmra.mxu0 %v418
        %v1909 = vpop.f32.mrf.mxu0
        %v1910 = vadd.f32 %v1896, %v1909
        %v1911 = vpop.f32.mrf.mxu0
        %v1912 = vadd.f32 %v1898, %v1911
        %1913 = vdwg.mxu0
        %1914 = vmatpush.bf16.msra.mxu0 %v1422
        %1915 = vmatpush.bf16.msra.mxu0 %v1413
        %1916 = vmatpush.bf16.msra.mxu0 %v1404
        %1917 = vmatpush.bf16.msra.mxu0 %v1395
        %1918 = vmatpush.bf16.msra.mxu0 %v1386
        %1919 = vmatpush.bf16.msra.mxu0 %v1377
        %1920 = vmatpush.bf16.msra.mxu0 %v1368
        %1921 = vmatpush.bf16.msra.mxu0 %v1359
        %1922 = vmatmul.bf16.gmra.mxu0 %v416
        %v1923 = vpop.f32.mrf.mxu0
        %v1924 = vadd.f32 %v669, %v1923
        %v1925 = vpop.f32.mrf.mxu0
        %v1926 = vadd.f32 %v669, %v1925
        %1927 = vdwg.mxu0
        %1928 = vmatpush.bf16.msra.mxu0 %v1494
        %1929 = vmatpush.bf16.msra.mxu0 %v1485
        %1930 = vmatpush.bf16.msra.mxu0 %v1476
        %1931 = vmatpush.bf16.msra.mxu0 %v1467
        %1932 = vmatpush.bf16.msra.mxu0 %v1458
        %1933 = vmatpush.bf16.msra.mxu0 %v1449
        %1934 = vmatpush.bf16.msra.mxu0 %v1440
        %1935 = vmatpush.bf16.msra.mxu0 %v1431
        %1936 = vmatmul.bf16.gmra.mxu0 %v417
        %v1937 = vpop.f32.mrf.mxu0
        %v1938 = vadd.f32 %v1924, %v1937
        %v1939 = vpop.f32.mrf.mxu0
        %v1940 = vadd.f32 %v1926, %v1939
        %1941 = vdwg.mxu0
        %1942 = vmatpush.bf16.msra.mxu0 %v1566
        %1943 = vmatpush.bf16.msra.mxu0 %v1557
        %1944 = vmatpush.bf16.msra.mxu0 %v1548
        %1945 = vmatpush.bf16.msra.mxu0 %v1539
        %1946 = vmatpush.bf16.msra.mxu0 %v1530
        %1947 = vmatpush.bf16.msra.mxu0 %v1521
        %1948 = vmatpush.bf16.msra.mxu0 %v1512
        %1949 = vmatpush.bf16.msra.mxu0 %v1503
        %1950 = vmatmul.bf16.gmra.mxu0 %v418
        %v1951 = vpop.f32.mrf.mxu0
        %v1952 = vadd.f32 %v1938, %v1951
        %v1953 = vpop.f32.mrf.mxu0
        %v1954 = vadd.f32 %v1940, %v1953
        %1955 = vdwg.mxu0
        %1956 = vmatpush.bf16.msra.mxu0 %v1423
        %1957 = vmatpush.bf16.msra.mxu0 %v1414
        %1958 = vmatpush.bf16.msra.mxu0 %v1405
        %1959 = vmatpush.bf16.msra.mxu0 %v1396
        %1960 = vmatpush.bf16.msra.mxu0 %v1387
        %1961 = vmatpush.bf16.msra.mxu0 %v1378
        %1962 = vmatpush.bf16.msra.mxu0 %v1369
        %1963 = vmatpush.bf16.msra.mxu0 %v1360
        %1964 = vmatmul.bf16.gmra.mxu0 %v416
        %v1965 = vpop.f32.mrf.mxu0
        %v1966 = vadd.f32 %v670, %v1965
        %v1967 = vpop.f32.mrf.mxu0
        %v1968 = vadd.f32 %v670, %v1967
        %1969 = vdwg.mxu0
        %1970 = vmatpush.bf16.msra.mxu0 %v1495
        %1971 = vmatpush.bf16.msra.mxu0 %v1486
        %1972 = vmatpush.bf16.msra.mxu0 %v1477
        %1973 = vmatpush.bf16.msra.mxu0 %v1468
        %1974 = vmatpush.bf16.msra.mxu0 %v1459
        %1975 = vmatpush.bf16.msra.mxu0 %v1450
        %1976 = vmatpush.bf16.msra.mxu0 %v1441
        %1977 = vmatpush.bf16.msra.mxu0 %v1432
        %1978 = vmatmul.bf16.gmra.mxu0 %v417
        %v1979 = vpop.f32.mrf.mxu0
        %v1980 = vadd.f32 %v1966, %v1979
        %v1981 = vpop.f32.mrf.mxu0
        %v1982 = vadd.f32 %v1968, %v1981
        %1983 = vdwg.mxu0
        %1984 = vmatpush.bf16.msra.mxu0 %v1567
        %1985 = vmatpush.bf16.msra.mxu0 %v1558
        %1986 = vmatpush.bf16.msra.mxu0 %v1549
        %1987 = vmatpush.bf16.msra.mxu0 %v1540
        %1988 = vmatpush.bf16.msra.mxu0 %v1531
        %1989 = vmatpush.bf16.msra.mxu0 %v1522
        %1990 = vmatpush.bf16.msra.mxu0 %v1513
        %1991 = vmatpush.bf16.msra.mxu0 %v1504
        %1992 = vmatmul.bf16.gmra.mxu0 %v418
        %v1993 = vpop.f32.mrf.mxu0
        %v1994 = vadd.f32 %v1980, %v1993
        %v1995 = vpop.f32.mrf.mxu0
        %v1996 = vadd.f32 %v1982, %v1995
        %1997 = vdwg.mxu0
        %1998 = vmatpush.bf16.msra.mxu0 %v1424
        %1999 = vmatpush.bf16.msra.mxu0 %v1415
        %2000 = vmatpush.bf16.msra.mxu0 %v1406
        %2001 = vmatpush.bf16.msra.mxu0 %v1397
        %2002 = vmatpush.bf16.msra.mxu0 %v1388
        %2003 = vmatpush.bf16.msra.mxu0 %v1379
        %2004 = vmatpush.bf16.msra.mxu0 %v1370
        %2005 = vmatpush.bf16.msra.mxu0 %v1361
        %2006 = vmatmul.bf16.gmra.mxu0 %v416
        %v2007 = vpop.f32.mrf.mxu0
        %v2008 = vadd.f32 %v671, %v2007
        %v2009 = vpop.f32.mrf.mxu0
        %v2010 = vadd.f32 %v671, %v2009
        %2011 = vdwg.mxu0
        %2012 = vmatpush.bf16.msra.mxu0 %v1496
        %2013 = vmatpush.bf16.msra.mxu0 %v1487
        %2014 = vmatpush.bf16.msra.mxu0 %v1478
        %2015 = vmatpush.bf16.msra.mxu0 %v1469
        %2016 = vmatpush.bf16.msra.mxu0 %v1460
        %2017 = vmatpush.bf16.msra.mxu0 %v1451
        %2018 = vmatpush.bf16.msra.mxu0 %v1442
        %2019 = vmatpush.bf16.msra.mxu0 %v1433
        %2020 = vmatmul.bf16.gmra.mxu0 %v417
        %v2021 = vpop.f32.mrf.mxu0
        %v2022 = vadd.f32 %v2008, %v2021
        %v2023 = vpop.f32.mrf.mxu0
        %v2024 = vadd.f32 %v2010, %v2023
        %2025 = vdwg.mxu0
        %2026 = vmatpush.bf16.msra.mxu0 %v1568
        %2027 = vmatpush.bf16.msra.mxu0 %v1559
        %2028 = vmatpush.bf16.msra.mxu0 %v1550
        %2029 = vmatpush.bf16.msra.mxu0 %v1541
        %2030 = vmatpush.bf16.msra.mxu0 %v1532
        %2031 = vmatpush.bf16.msra.mxu0 %v1523
        %2032 = vmatpush.bf16.msra.mxu0 %v1514
        %2033 = vmatpush.bf16.msra.mxu0 %v1505
        %2034 = vmatmul.bf16.gmra.mxu0 %v418
        %v2035 = vpop.f32.mrf.mxu0
        %v2036 = vadd.f32 %v2022, %v2035
        %v2037 = vpop.f32.mrf.mxu0
        %v2038 = vadd.f32 %v2024, %v2037
        %2039 = vdwg.mxu0
        %2040 = vmatpush.bf16.msra.mxu0 %v1425
        %2041 = vmatpush.bf16.msra.mxu0 %v1416
        %2042 = vmatpush.bf16.msra.mxu0 %v1407
        %2043 = vmatpush.bf16.msra.mxu0 %v1398
        %2044 = vmatpush.bf16.msra.mxu0 %v1389
        %2045 = vmatpush.bf16.msra.mxu0 %v1380
        %2046 = vmatpush.bf16.msra.mxu0 %v1371
        %2047 = vmatpush.bf16.msra.mxu0 %v1362
        %2048 = vmatmul.bf16.gmra.mxu0 %v416
        %v2049 = vpop.f32.mrf.mxu0
        %v2050 = vadd.f32 %v672, %v2049
        %v2051 = vpop.f32.mrf.mxu0
        %v2052 = vadd.f32 %v672, %v2051
        %2053 = vdwg.mxu0
        %2054 = vmatpush.bf16.msra.mxu0 %v1497
        %2055 = vmatpush.bf16.msra.mxu0 %v1488
        %2056 = vmatpush.bf16.msra.mxu0 %v1479
        %2057 = vmatpush.bf16.msra.mxu0 %v1470
        %2058 = vmatpush.bf16.msra.mxu0 %v1461
        %2059 = vmatpush.bf16.msra.mxu0 %v1452
        %2060 = vmatpush.bf16.msra.mxu0 %v1443
        %2061 = vmatpush.bf16.msra.mxu0 %v1434
        %2062 = vmatmul.bf16.gmra.mxu0 %v417
        %v2063 = vpop.f32.mrf.mxu0
        %v2064 = vadd.f32 %v2050, %v2063
        %v2065 = vpop.f32.mrf.mxu0
        %v2066 = vadd.f32 %v2052, %v2065
        %2067 = vdwg.mxu0
        %2068 = vmatpush.bf16.msra.mxu0 %v1569
        %2069 = vmatpush.bf16.msra.mxu0 %v1560
        %2070 = vmatpush.bf16.msra.mxu0 %v1551
        %2071 = vmatpush.bf16.msra.mxu0 %v1542
        %2072 = vmatpush.bf16.msra.mxu0 %v1533
        %2073 = vmatpush.bf16.msra.mxu0 %v1524
        %2074 = vmatpush.bf16.msra.mxu0 %v1515
        %2075 = vmatpush.bf16.msra.mxu0 %v1506
        %2076 = vmatmul.bf16.gmra.mxu0 %v418
        %v2077 = vpop.f32.mrf.mxu0
        %v2078 = vadd.f32 %v2064, %v2077
        %v2079 = vpop.f32.mrf.mxu0
        %v2080 = vadd.f32 %v2066, %v2079
        %2081 = vdwg.mxu0
        %2082 = vmatpush.bf16.msra.mxu0 %v1426
        %2083 = vmatpush.bf16.msra.mxu0 %v1417
        %2084 = vmatpush.bf16.msra.mxu0 %v1408
        %2085 = vmatpush.bf16.msra.mxu0 %v1399
        %2086 = vmatpush.bf16.msra.mxu0 %v1390
        %2087 = vmatpush.bf16.msra.mxu0 %v1381
        %2088 = vmatpush.bf16.msra.mxu0 %v1372
        %2089 = vmatpush.bf16.msra.mxu0 %v1363
        %2090 = vmatmul.bf16.gmra.mxu0 %v416
        %v2091 = vpop.f32.mrf.mxu0
        %v2092 = vadd.f32 %v673, %v2091
        %v2093 = vpop.f32.mrf.mxu0
        %v2094 = vadd.f32 %v673, %v2093
        %2095 = vdwg.mxu0
        %2096 = vmatpush.bf16.msra.mxu0 %v1498
        %2097 = vmatpush.bf16.msra.mxu0 %v1489
        %2098 = vmatpush.bf16.msra.mxu0 %v1480
        %2099 = vmatpush.bf16.msra.mxu0 %v1471
        %2100 = vmatpush.bf16.msra.mxu0 %v1462
        %2101 = vmatpush.bf16.msra.mxu0 %v1453
        %2102 = vmatpush.bf16.msra.mxu0 %v1444
        %2103 = vmatpush.bf16.msra.mxu0 %v1435
        %2104 = vmatmul.bf16.gmra.mxu0 %v417
        %v2105 = vpop.f32.mrf.mxu0
        %v2106 = vadd.f32 %v2092, %v2105
        %v2107 = vpop.f32.mrf.mxu0
        %v2108 = vadd.f32 %v2094, %v2107
        %2109 = vdwg.mxu0
        %2110 = vmatpush.bf16.msra.mxu0 %v1570
        %2111 = vmatpush.bf16.msra.mxu0 %v1561
        %2112 = vmatpush.bf16.msra.mxu0 %v1552
        %2113 = vmatpush.bf16.msra.mxu0 %v1543
        %2114 = vmatpush.bf16.msra.mxu0 %v1534
        %2115 = vmatpush.bf16.msra.mxu0 %v1525
        %2116 = vmatpush.bf16.msra.mxu0 %v1516
        %2117 = vmatpush.bf16.msra.mxu0 %v1507
        %2118 = vmatmul.bf16.gmra.mxu0 %v418
        %v2119 = vpop.f32.mrf.mxu0
        %v2120 = vadd.f32 %v2106, %v2119
        %v2121 = vpop.f32.mrf.mxu0
        %v2122 = vadd.f32 %v2108, %v2121
        %2123 = vdwg.mxu0
        %2124 = vmatpush.bf16.msra.mxu0 %v1427
        %2125 = vmatpush.bf16.msra.mxu0 %v1418
        %2126 = vmatpush.bf16.msra.mxu0 %v1409
        %2127 = vmatpush.bf16.msra.mxu0 %v1400
        %2128 = vmatpush.bf16.msra.mxu0 %v1391
        %2129 = vmatpush.bf16.msra.mxu0 %v1382
        %2130 = vmatpush.bf16.msra.mxu0 %v1373
        %2131 = vmatpush.bf16.msra.mxu0 %v1364
        %2132 = vmatmul.bf16.gmra.mxu0 %v416
        %v2133 = vpop.f32.mrf.mxu0
        %v2134 = vadd.f32 %v674, %v2133
        %v2135 = vpop.f32.mrf.mxu0
        %v2136 = vadd.f32 %v674, %v2135
        %2137 = vdwg.mxu0
        %2138 = vmatpush.bf16.msra.mxu0 %v1499
        %2139 = vmatpush.bf16.msra.mxu0 %v1490
        %2140 = vmatpush.bf16.msra.mxu0 %v1481
        %2141 = vmatpush.bf16.msra.mxu0 %v1472
        %2142 = vmatpush.bf16.msra.mxu0 %v1463
        %2143 = vmatpush.bf16.msra.mxu0 %v1454
        %2144 = vmatpush.bf16.msra.mxu0 %v1445
        %2145 = vmatpush.bf16.msra.mxu0 %v1436
        %2146 = vmatmul.bf16.gmra.mxu0 %v417
        %v2147 = vpop.f32.mrf.mxu0
        %v2148 = vadd.f32 %v2134, %v2147
        %v2149 = vpop.f32.mrf.mxu0
        %v2150 = vadd.f32 %v2136, %v2149
        %2151 = vdwg.mxu0
        %2152 = vmatpush.bf16.msra.mxu0 %v1571
        %2153 = vmatpush.bf16.msra.mxu0 %v1562
        %2154 = vmatpush.bf16.msra.mxu0 %v1553
        %2155 = vmatpush.bf16.msra.mxu0 %v1544
        %2156 = vmatpush.bf16.msra.mxu0 %v1535
        %2157 = vmatpush.bf16.msra.mxu0 %v1526
        %2158 = vmatpush.bf16.msra.mxu0 %v1517
        %2159 = vmatpush.bf16.msra.mxu0 %v1508
        %2160 = vmatmul.bf16.gmra.mxu0 %v418
        %v2161 = vpop.f32.mrf.mxu0
        %v2162 = vadd.f32 %v2148, %v2161
        %v2163 = vpop.f32.mrf.mxu0
        %v2164 = vadd.f32 %v2150, %v2163
        %2165 = vdwg.mxu0
        %2168 = vrot.lane.b32.xlu0 %v1826, 96
        %v2169 = vpop.permute.xlu0 %2168
        %2170 = vrot.lane.b32.xlu0 %v1828, 96
        %v2171 = vpop.permute.xlu0 %2170
        %2172 = vrot.lane.b32.xlu0 %v1826, 64
        %v2173 = vpop.permute.xlu0 %2172
        %2174 = vrot.lane.b32.xlu0 %v1828, 64
        %v2175 = vpop.permute.xlu0 %2174
        %2176 = vrot.lane.b32.xlu0 %v1826, 32
        %v2177 = vpop.permute.xlu0 %2176
        %2178 = vrot.lane.b32.xlu0 %v1828, 32
        %v2179 = vpop.permute.xlu0 %2178
        %2182 = vrot.lane.b32.xlu0 %v1868, 96
        %v2183 = vpop.permute.xlu0 %2182
        %2184 = vrot.lane.b32.xlu0 %v1870, 96
        %v2185 = vpop.permute.xlu0 %2184
        %2186 = vrot.lane.b32.xlu0 %v1868, 64
        %v2187 = vpop.permute.xlu0 %2186
        %2188 = vrot.lane.b32.xlu0 %v1870, 64
        %v2189 = vpop.permute.xlu0 %2188
        %2190 = vrot.lane.b32.xlu0 %v1868, 32
        %v2191 = vpop.permute.xlu0 %2190
        %2192 = vrot.lane.b32.xlu0 %v1870, 32
        %v2193 = vpop.permute.xlu0 %2192
        %2196 = vrot.lane.b32.xlu0 %v1910, 96
        %v2197 = vpop.permute.xlu0 %2196
        %2198 = vrot.lane.b32.xlu0 %v1912, 96
        %v2199 = vpop.permute.xlu0 %2198
        %2200 = vrot.lane.b32.xlu0 %v1910, 64
        %v2201 = vpop.permute.xlu0 %2200
        %2202 = vrot.lane.b32.xlu0 %v1912, 64
        %v2203 = vpop.permute.xlu0 %2202
        %2204 = vrot.lane.b32.xlu0 %v1910, 32
        %v2205 = vpop.permute.xlu0 %2204
        %2206 = vrot.lane.b32.xlu0 %v1912, 32
        %v2207 = vpop.permute.xlu0 %2206
        %2210 = vrot.lane.b32.xlu0 %v1952, 96
        %v2211 = vpop.permute.xlu0 %2210
        %2212 = vrot.lane.b32.xlu0 %v1954, 96
        %v2213 = vpop.permute.xlu0 %2212
        %2214 = vrot.lane.b32.xlu0 %v1952, 64
        %v2215 = vpop.permute.xlu0 %2214
        %2216 = vrot.lane.b32.xlu0 %v1954, 64
        %v2217 = vpop.permute.xlu0 %2216
        %2218 = vrot.lane.b32.xlu0 %v1952, 32
        %v2219 = vpop.permute.xlu0 %2218
        %2220 = vrot.lane.b32.xlu0 %v1954, 32
        %v2221 = vpop.permute.xlu0 %2220
        %2224 = vrot.lane.b32.xlu0 %v1994, 96
        %v2225 = vpop.permute.xlu0 %2224
        %2226 = vrot.lane.b32.xlu0 %v1996, 96
        %v2227 = vpop.permute.xlu0 %2226
        %2228 = vrot.lane.b32.xlu0 %v1994, 64
        %v2229 = vpop.permute.xlu0 %2228
        %2230 = vrot.lane.b32.xlu0 %v1996, 64
        %v2231 = vpop.permute.xlu0 %2230
        %2232 = vrot.lane.b32.xlu0 %v1994, 32
        %v2233 = vpop.permute.xlu0 %2232
        %2234 = vrot.lane.b32.xlu0 %v1996, 32
        %v2235 = vpop.permute.xlu0 %2234
        %2238 = vrot.lane.b32.xlu0 %v2036, 96
        %v2239 = vpop.permute.xlu0 %2238
        %2240 = vrot.lane.b32.xlu0 %v2038, 96
        %v2241 = vpop.permute.xlu0 %2240
        %2242 = vrot.lane.b32.xlu0 %v2036, 64
        %v2243 = vpop.permute.xlu0 %2242
        %2244 = vrot.lane.b32.xlu0 %v2038, 64
        %v2245 = vpop.permute.xlu0 %2244
        %2246 = vrot.lane.b32.xlu0 %v2036, 32
        %v2247 = vpop.permute.xlu0 %2246
        %2248 = vrot.lane.b32.xlu0 %v2038, 32
        %v2249 = vpop.permute.xlu0 %2248
        %2252 = vrot.lane.b32.xlu0 %v2078, 96
        %v2253 = vpop.permute.xlu0 %2252
        %2254 = vrot.lane.b32.xlu0 %v2080, 96
        %v2255 = vpop.permute.xlu0 %2254
        %2258 = vrot.lane.b32.xlu0 %v2078, 64
        %v2259 = vpop.permute.xlu0 %2258
        %2260 = vrot.lane.b32.xlu0 %v2080, 64
        %v2261 = vpop.permute.xlu0 %2260
        %2264 = vrot.lane.b32.xlu0 %v2078, 32
        %v2265 = vpop.permute.xlu0 %2264
        %2266 = vrot.lane.b32.xlu0 %v2080, 32
        %v2267 = vpop.permute.xlu0 %2266
        %2272 = vrot.lane.b32.xlu0 %v2120, 96
        %v2273 = vpop.permute.xlu0 %2272
        %2274 = vrot.lane.b32.xlu0 %v2122, 96
        %v2275 = vpop.permute.xlu0 %2274
        %2278 = vrot.lane.b32.xlu0 %v2120, 64
        %v2279 = vpop.permute.xlu0 %2278
        %2280 = vrot.lane.b32.xlu0 %v2122, 64
        %v2281 = vpop.permute.xlu0 %2280
        %2284 = vrot.lane.b32.xlu0 %v2120, 32
        %v2285 = vpop.permute.xlu0 %2284
        %2286 = vrot.lane.b32.xlu0 %v2122, 32
        %v2287 = vpop.permute.xlu0 %2286
        %2292 = vrot.lane.b32.xlu0 %v2162, 96
        %v2293 = vpop.permute.xlu0 %2292
        %2294 = vrot.lane.b32.xlu0 %v2164, 96
        %v2295 = vpop.permute.xlu0 %2294
        %2298 = vrot.lane.b32.xlu0 %v2162, 64
        %v2299 = vpop.permute.xlu0 %2298
        %2300 = vrot.lane.b32.xlu0 %v2164, 64
        %v2301 = vpop.permute.xlu0 %2300
        %2304 = vrot.lane.b32.xlu0 %v2162, 32
        %v2305 = vpop.permute.xlu0 %2304
        %2306 = vrot.lane.b32.xlu0 %v2164, 32
        %v2307 = vpop.permute.xlu0 %2306
        %v2310 = vld [vmem:[#allocation6] sm:$0xff]
        %v2311 = vld [vmem:[#allocation6 + $0x8] sm:$0xff]
        %vm2312 = vcmask 261120
        %v2313 = vsel %vm2312, %v1826, 0
        %v2315 = vsel %vm2312, %v1828, 0
        %v2317 = vsel %vm2312, %v1952, 0
        %v2319 = vsel %vm2312, %v1954, 0
        %2321 = vmatpush.xpose.msra.mxu0 0.0
        %2322 = vmatpush.xpose.msra.mxu0 0.0
        %2323 = vmatpush.xpose.msra.mxu0 0.0
        %2324 = vmatpush.xpose.msra.mxu0 0.0
        %2325 = vmatpush.xpose.msra.mxu0 0.0
        %2326 = vmatpush.xpose.msra.mxu0 0.0
        %2327 = vmatpush.xpose.msra.mxu0 0.0
        %2328 = vmatpush.xpose.msra.mxu0 0.0
        %2329 = vmatpush.xpose.msra.mxu0 0.0
        %2330 = vmatpush.xpose.msra.mxu0 0.0
        %2331 = vmatpush.xpose.msra.mxu0 0.0
        %2332 = vmatpush.xpose.msra.mxu0 0.0
        %2333 = vmatpush.xpose.msra.mxu0 0.0
        %2334 = vmatpush.xpose.msra.mxu0 0.0
        %2335 = vmatpush.xpose.msra.mxu0 %v2319
        %2336 = vmatpush.xpose.msra.mxu0 %v2317
        %2337 = vmatmul.f32.gmra.mxu0 %v2313
        %v2338 = vpop.f32.mrf.mxu0
        %v2339 = vadd.f32 %v2310, %v2338
        %2340 = vmatmul.f32.gmra.mxu0 %v2315
        %v2341 = vpop.f32.mrf.mxu0
        %v2342 = vadd.f32 %v2311, %v2341
        %2343 = vdwg.mxu0
        %v2344 = vsel %vm2312, %v2169, 0
        %v2346 = vsel %vm2312, %v2171, 0
        %v2348 = vsel %vm2312, %v2211, 0
        %v2350 = vsel %vm2312, %v2213, 0
        %2352 = vmatpush.xpose.msra.mxu0 0.0
        %2353 = vmatpush.xpose.msra.mxu0 0.0
        %2354 = vmatpush.xpose.msra.mxu0 0.0
        %2355 = vmatpush.xpose.msra.mxu0 0.0
        %2356 = vmatpush.xpose.msra.mxu0 0.0
        %2357 = vmatpush.xpose.msra.mxu0 0.0
        %2358 = vmatpush.xpose.msra.mxu0 0.0
        %2359 = vmatpush.xpose.msra.mxu0 0.0
        %2360 = vmatpush.xpose.msra.mxu0 0.0
        %2361 = vmatpush.xpose.msra.mxu0 0.0
        %2362 = vmatpush.xpose.msra.mxu0 0.0
        %2363 = vmatpush.xpose.msra.mxu0 0.0
        %2364 = vmatpush.xpose.msra.mxu0 0.0
        %2365 = vmatpush.xpose.msra.mxu0 0.0
        %2366 = vmatpush.xpose.msra.mxu0 %v2350
        %2367 = vmatpush.xpose.msra.mxu0 %v2348
        %2368 = vmatmul.f32.gmra.mxu0 %v2344
        %v2369 = vpop.f32.mrf.mxu0
        %v2370 = vadd.f32 %v2310, %v2369
        %2371 = vmatmul.f32.gmra.mxu0 %v2346
        %v2372 = vpop.f32.mrf.mxu0
        %v2373 = vadd.f32 %v2311, %v2372
        %2374 = vdwg.mxu0
        %v2375 = vsel %vm2312, %v2173, 0
        %v2377 = vsel %vm2312, %v2175, 0
        %v2379 = vsel %vm2312, %v2215, 0
        %v2381 = vsel %vm2312, %v2217, 0
        %2383 = vmatpush.xpose.msra.mxu0 0.0
        %2384 = vmatpush.xpose.msra.mxu0 0.0
        %2385 = vmatpush.xpose.msra.mxu0 0.0
        %2386 = vmatpush.xpose.msra.mxu0 0.0
        %2387 = vmatpush.xpose.msra.mxu0 0.0
        %2388 = vmatpush.xpose.msra.mxu0 0.0
        %2389 = vmatpush.xpose.msra.mxu0 0.0
        %2390 = vmatpush.xpose.msra.mxu0 0.0
        %2391 = vmatpush.xpose.msra.mxu0 0.0
        %2392 = vmatpush.xpose.msra.mxu0 0.0
        %2393 = vmatpush.xpose.msra.mxu0 0.0
        %2394 = vmatpush.xpose.msra.mxu0 0.0
        %2395 = vmatpush.xpose.msra.mxu0 0.0
        %2396 = vmatpush.xpose.msra.mxu0 0.0
        %2397 = vmatpush.xpose.msra.mxu0 %v2381
        %2398 = vmatpush.xpose.msra.mxu0 %v2379
        %2399 = vmatmul.f32.gmra.mxu0 %v2375
        %v2400 = vpop.f32.mrf.mxu0
        %v2401 = vadd.f32 %v2310, %v2400
        %2402 = vmatmul.f32.gmra.mxu0 %v2377
        %v2403 = vpop.f32.mrf.mxu0
        %v2404 = vadd.f32 %v2311, %v2403
        %2405 = vdwg.mxu0
        %v2406 = vsel %vm2312, %v2177, 0
        %v2408 = vsel %vm2312, %v2179, 0
        %v2410 = vsel %vm2312, %v2219, 0
        %v2412 = vsel %vm2312, %v2221, 0
        %2414 = vmatpush.xpose.msra.mxu0 0.0
        %2415 = vmatpush.xpose.msra.mxu0 0.0
        %2416 = vmatpush.xpose.msra.mxu0 0.0
        %2417 = vmatpush.xpose.msra.mxu0 0.0
        %2418 = vmatpush.xpose.msra.mxu0 0.0
        %2419 = vmatpush.xpose.msra.mxu0 0.0
        %2420 = vmatpush.xpose.msra.mxu0 0.0
        %2421 = vmatpush.xpose.msra.mxu0 0.0
        %2422 = vmatpush.xpose.msra.mxu0 0.0
        %2423 = vmatpush.xpose.msra.mxu0 0.0
        %2424 = vmatpush.xpose.msra.mxu0 0.0
        %2425 = vmatpush.xpose.msra.mxu0 0.0
        %2426 = vmatpush.xpose.msra.mxu0 0.0
        %2427 = vmatpush.xpose.msra.mxu0 0.0
        %2428 = vmatpush.xpose.msra.mxu0 %v2412
        %2429 = vmatpush.xpose.msra.mxu0 %v2410
        %2430 = vmatmul.f32.gmra.mxu0 %v2406
        %v2431 = vpop.f32.mrf.mxu0
        %v2432 = vadd.f32 %v2310, %v2431
        %2433 = vmatmul.f32.gmra.mxu0 %v2408
        %v2434 = vpop.f32.mrf.mxu0
        %v2435 = vadd.f32 %v2311, %v2434
        %2436 = vdwg.mxu0
        %v2437 = vsel %vm2312, %v1868, 0
        %v2439 = vsel %vm2312, %v1870, 0
        %v2441 = vsel %vm2312, %v1994, 0
        %v2443 = vsel %vm2312, %v1996, 0
        %2445 = vmatpush.xpose.msra.mxu0 0.0
        %2446 = vmatpush.xpose.msra.mxu0 0.0
        %2447 = vmatpush.xpose.msra.mxu0 0.0
        %2448 = vmatpush.xpose.msra.mxu0 0.0
        %2449 = vmatpush.xpose.msra.mxu0 0.0
        %2450 = vmatpush.xpose.msra.mxu0 0.0
        %2451 = vmatpush.xpose.msra.mxu0 0.0
        %2452 = vmatpush.xpose.msra.mxu0 0.0
        %2453 = vmatpush.xpose.msra.mxu0 0.0
        %2454 = vmatpush.xpose.msra.mxu0 0.0
        %2455 = vmatpush.xpose.msra.mxu0 0.0
        %2456 = vmatpush.xpose.msra.mxu0 0.0
        %2457 = vmatpush.xpose.msra.mxu0 0.0
        %2458 = vmatpush.xpose.msra.mxu0 0.0
        %2459 = vmatpush.xpose.msra.mxu0 %v2443
        %2460 = vmatpush.xpose.msra.mxu0 %v2441
        %2461 = vmatmul.f32.gmra.mxu0 %v2437
        %v2462 = vpop.f32.mrf.mxu0
        %v2463 = vadd.f32 %v2310, %v2462
        %2464 = vmatmul.f32.gmra.mxu0 %v2439
        %v2465 = vpop.f32.mrf.mxu0
        %v2466 = vadd.f32 %v2311, %v2465
        %2467 = vdwg.mxu0
        %v2468 = vsel %vm2312, %v2183, 0
        %v2470 = vsel %vm2312, %v2185, 0
        %v2472 = vsel %vm2312, %v2225, 0
        %v2474 = vsel %vm2312, %v2227, 0
        %2476 = vmatpush.xpose.msra.mxu0 0.0
        %2477 = vmatpush.xpose.msra.mxu0 0.0
        %2478 = vmatpush.xpose.msra.mxu0 0.0
        %2479 = vmatpush.xpose.msra.mxu0 0.0
        %2480 = vmatpush.xpose.msra.mxu0 0.0
        %2481 = vmatpush.xpose.msra.mxu0 0.0
        %2482 = vmatpush.xpose.msra.mxu0 0.0
        %2483 = vmatpush.xpose.msra.mxu0 0.0
        %2484 = vmatpush.xpose.msra.mxu0 0.0
        %2485 = vmatpush.xpose.msra.mxu0 0.0
        %2486 = vmatpush.xpose.msra.mxu0 0.0
        %2487 = vmatpush.xpose.msra.mxu0 0.0
        %2488 = vmatpush.xpose.msra.mxu0 0.0
        %2489 = vmatpush.xpose.msra.mxu0 0.0
        %2490 = vmatpush.xpose.msra.mxu0 %v2474
        %2491 = vmatpush.xpose.msra.mxu0 %v2472
        %2492 = vmatmul.f32.gmra.mxu0 %v2468
        %v2493 = vpop.f32.mrf.mxu0
        %v2494 = vadd.f32 %v2310, %v2493
        %2495 = vmatmul.f32.gmra.mxu0 %v2470
        %v2496 = vpop.f32.mrf.mxu0
        %v2497 = vadd.f32 %v2311, %v2496
        %2498 = vdwg.mxu0
        %v2499 = vsel %vm2312, %v2187, 0
        %v2501 = vsel %vm2312, %v2189, 0
        %v2503 = vsel %vm2312, %v2229, 0
        %v2505 = vsel %vm2312, %v2231, 0
        %2507 = vmatpush.xpose.msra.mxu0 0.0
        %2508 = vmatpush.xpose.msra.mxu0 0.0
        %2509 = vmatpush.xpose.msra.mxu0 0.0
        %2510 = vmatpush.xpose.msra.mxu0 0.0
        %2511 = vmatpush.xpose.msra.mxu0 0.0
        %2512 = vmatpush.xpose.msra.mxu0 0.0
        %2513 = vmatpush.xpose.msra.mxu0 0.0
        %2514 = vmatpush.xpose.msra.mxu0 0.0
        %2515 = vmatpush.xpose.msra.mxu0 0.0
        %2516 = vmatpush.xpose.msra.mxu0 0.0
        %2517 = vmatpush.xpose.msra.mxu0 0.0
        %2518 = vmatpush.xpose.msra.mxu0 0.0
        %2519 = vmatpush.xpose.msra.mxu0 0.0
        %2520 = vmatpush.xpose.msra.mxu0 0.0
        %2521 = vmatpush.xpose.msra.mxu0 %v2505
        %2522 = vmatpush.xpose.msra.mxu0 %v2503
        %2523 = vmatmul.f32.gmra.mxu0 %v2499
        %v2524 = vpop.f32.mrf.mxu0
        %v2525 = vadd.f32 %v2310, %v2524
        %2526 = vmatmul.f32.gmra.mxu0 %v2501
        %v2527 = vpop.f32.mrf.mxu0
        %v2528 = vadd.f32 %v2311, %v2527
        %2529 = vdwg.mxu0
        %v2530 = vsel %vm2312, %v2191, 0
        %v2532 = vsel %vm2312, %v2193, 0
        %v2534 = vsel %vm2312, %v2233, 0
        %v2536 = vsel %vm2312, %v2235, 0
        %2538 = vmatpush.xpose.msra.mxu0 0.0
        %2539 = vmatpush.xpose.msra.mxu0 0.0
        %2540 = vmatpush.xpose.msra.mxu0 0.0
        %2541 = vmatpush.xpose.msra.mxu0 0.0
        %2542 = vmatpush.xpose.msra.mxu0 0.0
        %2543 = vmatpush.xpose.msra.mxu0 0.0
        %2544 = vmatpush.xpose.msra.mxu0 0.0
        %2545 = vmatpush.xpose.msra.mxu0 0.0
        %2546 = vmatpush.xpose.msra.mxu0 0.0
        %2547 = vmatpush.xpose.msra.mxu0 0.0
        %2548 = vmatpush.xpose.msra.mxu0 0.0
        %2549 = vmatpush.xpose.msra.mxu0 0.0
        %2550 = vmatpush.xpose.msra.mxu0 0.0
        %2551 = vmatpush.xpose.msra.mxu0 0.0
        %2552 = vmatpush.xpose.msra.mxu0 %v2536
        %2553 = vmatpush.xpose.msra.mxu0 %v2534
        %2554 = vmatmul.f32.gmra.mxu0 %v2530
        %v2555 = vpop.f32.mrf.mxu0
        %v2556 = vadd.f32 %v2310, %v2555
        %2557 = vmatmul.f32.gmra.mxu0 %v2532
        %v2558 = vpop.f32.mrf.mxu0
        %v2559 = vadd.f32 %v2311, %v2558
        %2560 = vdwg.mxu0
        %v2561 = vsel %vm2312, %v1910, 0
        %v2563 = vsel %vm2312, %v1912, 0
        %v2565 = vsel %vm2312, %v2036, 0
        %v2567 = vsel %vm2312, %v2038, 0
        %2569 = vmatpush.xpose.msra.mxu0 0.0
        %2570 = vmatpush.xpose.msra.mxu0 0.0
        %2571 = vmatpush.xpose.msra.mxu0 0.0
        %2572 = vmatpush.xpose.msra.mxu0 0.0
        %2573 = vmatpush.xpose.msra.mxu0 0.0
        %2574 = vmatpush.xpose.msra.mxu0 0.0
        %2575 = vmatpush.xpose.msra.mxu0 0.0
        %2576 = vmatpush.xpose.msra.mxu0 0.0
        %2577 = vmatpush.xpose.msra.mxu0 0.0
        %2578 = vmatpush.xpose.msra.mxu0 0.0
        %2579 = vmatpush.xpose.msra.mxu0 0.0
        %2580 = vmatpush.xpose.msra.mxu0 0.0
        %2581 = vmatpush.xpose.msra.mxu0 0.0
        %2582 = vmatpush.xpose.msra.mxu0 0.0
        %2583 = vmatpush.xpose.msra.mxu0 %v2567
        %2584 = vmatpush.xpose.msra.mxu0 %v2565
        %2585 = vmatmul.f32.gmra.mxu0 %v2561
        %v2586 = vpop.f32.mrf.mxu0
        %v2587 = vadd.f32 %v2310, %v2586
        %2588 = vmatmul.f32.gmra.mxu0 %v2563
        %v2589 = vpop.f32.mrf.mxu0
        %v2590 = vadd.f32 %v2311, %v2589
        %2591 = vdwg.mxu0
        %v2592 = vsel %vm2312, %v2197, 0
        %v2594 = vsel %vm2312, %v2199, 0
        %v2596 = vsel %vm2312, %v2239, 0
        %v2598 = vsel %vm2312, %v2241, 0
        %2600 = vmatpush.xpose.msra.mxu0 0.0
        %2601 = vmatpush.xpose.msra.mxu0 0.0
        %2602 = vmatpush.xpose.msra.mxu0 0.0
        %2603 = vmatpush.xpose.msra.mxu0 0.0
        %2604 = vmatpush.xpose.msra.mxu0 0.0
        %2605 = vmatpush.xpose.msra.mxu0 0.0
        %2606 = vmatpush.xpose.msra.mxu0 0.0
        %2607 = vmatpush.xpose.msra.mxu0 0.0
        %2608 = vmatpush.xpose.msra.mxu0 0.0
        %2609 = vmatpush.xpose.msra.mxu0 0.0
        %2610 = vmatpush.xpose.msra.mxu0 0.0
        %2611 = vmatpush.xpose.msra.mxu0 0.0
        %2612 = vmatpush.xpose.msra.mxu0 0.0
        %2613 = vmatpush.xpose.msra.mxu0 0.0
        %2614 = vmatpush.xpose.msra.mxu0 %v2598
        %2615 = vmatpush.xpose.msra.mxu0 %v2596
        %2616 = vmatmul.f32.gmra.mxu0 %v2592
        %v2617 = vpop.f32.mrf.mxu0
        %v2618 = vadd.f32 %v2310, %v2617
        %2619 = vmatmul.f32.gmra.mxu0 %v2594
        %v2620 = vpop.f32.mrf.mxu0
        %v2621 = vadd.f32 %v2311, %v2620
        %2622 = vdwg.mxu0
        %v2623 = vsel %vm2312, %v2201, 0
        %v2625 = vsel %vm2312, %v2203, 0
        %v2627 = vsel %vm2312, %v2243, 0
        %v2629 = vsel %vm2312, %v2245, 0
        %2631 = vmatpush.xpose.msra.mxu0 0.0
        %2632 = vmatpush.xpose.msra.mxu0 0.0
        %2633 = vmatpush.xpose.msra.mxu0 0.0
        %2634 = vmatpush.xpose.msra.mxu0 0.0
        %2635 = vmatpush.xpose.msra.mxu0 0.0
        %2636 = vmatpush.xpose.msra.mxu0 0.0
        %2637 = vmatpush.xpose.msra.mxu0 0.0
        %2638 = vmatpush.xpose.msra.mxu0 0.0
        %2639 = vmatpush.xpose.msra.mxu0 0.0
        %2640 = vmatpush.xpose.msra.mxu0 0.0
        %2641 = vmatpush.xpose.msra.mxu0 0.0
        %2642 = vmatpush.xpose.msra.mxu0 0.0
        %2643 = vmatpush.xpose.msra.mxu0 0.0
        %2644 = vmatpush.xpose.msra.mxu0 0.0
        %2645 = vmatpush.xpose.msra.mxu0 %v2629
        %2646 = vmatpush.xpose.msra.mxu0 %v2627
        %2647 = vmatmul.f32.gmra.mxu0 %v2623
        %v2648 = vpop.f32.mrf.mxu0
        %v2649 = vadd.f32 %v2310, %v2648
        %2650 = vmatmul.f32.gmra.mxu0 %v2625
        %v2651 = vpop.f32.mrf.mxu0
        %v2652 = vadd.f32 %v2311, %v2651
        %2653 = vdwg.mxu0
        %v2654 = vsel %vm2312, %v2205, 0
        %v2656 = vsel %vm2312, %v2207, 0
        %v2658 = vsel %vm2312, %v2247, 0
        %v2660 = vsel %vm2312, %v2249, 0
        %2662 = vmatpush.xpose.msra.mxu0 0.0
        %2663 = vmatpush.xpose.msra.mxu0 0.0
        %2664 = vmatpush.xpose.msra.mxu0 0.0
        %2665 = vmatpush.xpose.msra.mxu0 0.0
        %2666 = vmatpush.xpose.msra.mxu0 0.0
        %2667 = vmatpush.xpose.msra.mxu0 0.0
        %2668 = vmatpush.xpose.msra.mxu0 0.0
        %2669 = vmatpush.xpose.msra.mxu0 0.0
        %2670 = vmatpush.xpose.msra.mxu0 0.0
        %2671 = vmatpush.xpose.msra.mxu0 0.0
        %2672 = vmatpush.xpose.msra.mxu0 0.0
        %2673 = vmatpush.xpose.msra.mxu0 0.0
        %2674 = vmatpush.xpose.msra.mxu0 0.0
        %2675 = vmatpush.xpose.msra.mxu0 0.0
        %2676 = vmatpush.xpose.msra.mxu0 %v2660
        %2677 = vmatpush.xpose.msra.mxu0 %v2658
        %2678 = vmatmul.f32.gmra.mxu0 %v2654
        %v2679 = vpop.f32.mrf.mxu0
        %v2680 = vadd.f32 %v2310, %v2679
        %2681 = vmatmul.f32.gmra.mxu0 %v2656
        %v2682 = vpop.f32.mrf.mxu0
        %v2683 = vadd.f32 %v2311, %v2682
        %2684 = vdwg.mxu0
        %vm2685 = vcmask 130048
        %v2686 = vsel %vm2685, %v2339, -inf
        %2687 = vmax.xlane.f32.xlu0 %v2686
        %v2688 = vpop.xlane.xlu0 %2687
        %v2689 = vsel %vm2685, %v2342, -inf
        %2690 = vmax.xlane.f32.xlu0 %v2689
        %v2691 = vpop.xlane.xlu0 %2690
        %v2692 = vsel %vm2685, %v2370, -inf
        %2693 = vmax.xlane.f32.xlu0 %v2692
        %v2694 = vpop.xlane.xlu0 %2693
        %v2695 = vsel %vm2685, %v2373, -inf
        %2696 = vmax.xlane.f32.xlu0 %v2695
        %v2697 = vpop.xlane.xlu0 %2696
        %v2698 = vsel %vm2685, %v2401, -inf
        %2699 = vmax.xlane.f32.xlu0 %v2698
        %v2700 = vpop.xlane.xlu0 %2699
        %v2701 = vsel %vm2685, %v2404, -inf
        %2702 = vmax.xlane.f32.xlu0 %v2701
        %v2703 = vpop.xlane.xlu0 %2702
        %v2704 = vsel %vm2685, %v2432, -inf
        %2705 = vmax.xlane.f32.xlu0 %v2704
        %v2706 = vpop.xlane.xlu0 %2705
        %v2707 = vsel %vm2685, %v2435, -inf
        %2708 = vmax.xlane.f32.xlu0 %v2707
        %v2709 = vpop.xlane.xlu0 %2708
        %v2710 = vsel %vm2685, %v2463, -inf
        %2711 = vmax.xlane.f32.xlu0 %v2710
        %v2712 = vpop.xlane.xlu0 %2711
        %v2713 = vsel %vm2685, %v2466, -inf
        %2714 = vmax.xlane.f32.xlu0 %v2713
        %v2715 = vpop.xlane.xlu0 %2714
        %v2716 = vsel %vm2685, %v2494, -inf
        %2717 = vmax.xlane.f32.xlu0 %v2716
        %v2718 = vpop.xlane.xlu0 %2717
        %v2719 = vsel %vm2685, %v2497, -inf
        %2720 = vmax.xlane.f32.xlu0 %v2719
        %v2721 = vpop.xlane.xlu0 %2720
        %v2722 = vsel %vm2685, %v2525, -inf
        %2723 = vmax.xlane.f32.xlu0 %v2722
        %v2724 = vpop.xlane.xlu0 %2723
        %v2725 = vsel %vm2685, %v2528, -inf
        %2726 = vmax.xlane.f32.xlu0 %v2725
        %v2727 = vpop.xlane.xlu0 %2726
        %v2728 = vsel %vm2685, %v2556, -inf
        %2729 = vmax.xlane.f32.xlu0 %v2728
        %v2730 = vpop.xlane.xlu0 %2729
        %v2731 = vsel %vm2685, %v2559, -inf
        %2732 = vmax.xlane.f32.xlu0 %v2731
        %v2733 = vpop.xlane.xlu0 %2732
        %v2734 = vsel %vm2685, %v2587, -inf
        %2735 = vmax.xlane.f32.xlu0 %v2734
        %v2736 = vpop.xlane.xlu0 %2735
        %v2737 = vsel %vm2685, %v2590, -inf
        %2738 = vmax.xlane.f32.xlu0 %v2737
        %v2739 = vpop.xlane.xlu0 %2738
        %v2740 = vsel %vm2685, %v2618, -inf
        %2741 = vmax.xlane.f32.xlu0 %v2740
        %v2742 = vpop.xlane.xlu0 %2741
        %v2743 = vsel %vm2685, %v2621, -inf
        %2744 = vmax.xlane.f32.xlu0 %v2743
        %v2745 = vpop.xlane.xlu0 %2744
        %v2746 = vsel %vm2685, %v2649, -inf
        %2747 = vmax.xlane.f32.xlu0 %v2746
        %v2748 = vpop.xlane.xlu0 %2747
        %v2749 = vsel %vm2685, %v2652, -inf
        %2750 = vmax.xlane.f32.xlu0 %v2749
        %v2751 = vpop.xlane.xlu0 %2750
        %v2752 = vsel %vm2685, %v2680, -inf
        %2753 = vmax.xlane.f32.xlu0 %v2752
        %v2754 = vpop.xlane.xlu0 %2753
        %v2755 = vsel %vm2685, %v2683, -inf
        %2756 = vmax.xlane.f32.xlu0 %v2755
        %v2757 = vpop.xlane.xlu0 %2756
        %v2758 = vsub.f32 %v2339, %v2688
        %v2759 = vsub.f32 %v2342, %v2691
        %v2760 = vsub.f32 %v2370, %v2694
        %v2761 = vsub.f32 %v2373, %v2697
        %v2762 = vsub.f32 %v2401, %v2700
        %v2763 = vsub.f32 %v2404, %v2703
        %v2764 = vsub.f32 %v2432, %v2706
        %v2765 = vsub.f32 %v2435, %v2709
        %v2766 = vsub.f32 %v2463, %v2712
        %v2767 = vsub.f32 %v2466, %v2715
        %v2768 = vsub.f32 %v2494, %v2718
        %v2769 = vsub.f32 %v2497, %v2721
        %v2770 = vsub.f32 %v2525, %v2724
        %v2771 = vsub.f32 %v2528, %v2727
        %v2772 = vsub.f32 %v2556, %v2730
        %v2773 = vsub.f32 %v2559, %v2733
        %v2774 = vsub.f32 %v2587, %v2736
        %v2775 = vsub.f32 %v2590, %v2739
        %v2776 = vsub.f32 %v2618, %v2742
        %v2777 = vsub.f32 %v2621, %v2745
        %v2778 = vsub.f32 %v2649, %v2748
        %v2779 = vsub.f32 %v2652, %v2751
        %v2780 = vsub.f32 %v2680, %v2754
        %v2781 = vsub.f32 %v2683, %v2757
        %v2782 = vmul.f32 %v2758, 1.442695
        %v2783 = vpow.pop %v2782
        %v2784 = vmul.f32 %v2759, 1.442695
        %v2785 = vpow.pop %v2784
        %v2786 = vmul.f32 %v2760, 1.442695
        %v2787 = vpow.pop %v2786
        %v2788 = vmul.f32 %v2761, 1.442695
        %v2789 = vpow.pop %v2788
        %v2790 = vmul.f32 %v2762, 1.442695
        %v2791 = vpow.pop %v2790
        %v2792 = vmul.f32 %v2763, 1.442695
        %v2793 = vpow.pop %v2792
        %v2794 = vmul.f32 %v2764, 1.442695
        %v2795 = vpow.pop %v2794
        %v2796 = vmul.f32 %v2765, 1.442695
        %v2797 = vpow.pop %v2796
        %v2798 = vmul.f32 %v2766, 1.442695
        %v2799 = vpow.pop %v2798
        %v2800 = vmul.f32 %v2767, 1.442695
        %v2801 = vpow.pop %v2800
        %v2802 = vmul.f32 %v2768, 1.442695
        %v2803 = vpow.pop %v2802
        %v2804 = vmul.f32 %v2769, 1.442695
        %v2805 = vpow.pop %v2804
        %v2806 = vmul.f32 %v2770, 1.442695
        %v2807 = vpow.pop %v2806
        %v2808 = vmul.f32 %v2771, 1.442695
        %v2809 = vpow.pop %v2808
        %v2810 = vmul.f32 %v2772, 1.442695
        %v2811 = vpow.pop %v2810
        %v2812 = vmul.f32 %v2773, 1.442695
        %v2813 = vpow.pop %v2812
        %v2814 = vmul.f32 %v2774, 1.442695
        %v2815 = vpow.pop %v2814
        %v2816 = vmul.f32 %v2775, 1.442695
        %v2817 = vpow.pop %v2816
        %v2818 = vmul.f32 %v2776, 1.442695
        %v2819 = vpow.pop %v2818
        %v2820 = vmul.f32 %v2777, 1.442695
        %v2821 = vpow.pop %v2820
        %v2822 = vmul.f32 %v2778, 1.442695
        %v2823 = vpow.pop %v2822
        %v2824 = vmul.f32 %v2779, 1.442695
        %v2825 = vpow.pop %v2824
        %v2826 = vmul.f32 %v2780, 1.442695
        %v2827 = vpow.pop %v2826
        %v2828 = vmul.f32 %v2781, 1.442695
        %v2829 = vpow.pop %v2828
        %v2830 = vsel %vm2685, %v2783, 0.0
        %2831 = vadd.xlane.f32.xlu0 %v2830
        %v2832 = vpop.xlane.xlu0 %2831
        %v2833 = vsel %vm2685, %v2785, 0.0
        %2834 = vadd.xlane.f32.xlu0 %v2833
        %v2835 = vpop.xlane.xlu0 %2834
        %v2836 = vsel %vm2685, %v2787, 0.0
        %2837 = vadd.xlane.f32.xlu0 %v2836
        %v2838 = vpop.xlane.xlu0 %2837
        %v2839 = vsel %vm2685, %v2789, 0.0
        %2840 = vadd.xlane.f32.xlu0 %v2839
        %v2841 = vpop.xlane.xlu0 %2840
        %v2842 = vsel %vm2685, %v2791, 0.0
        %2843 = vadd.xlane.f32.xlu0 %v2842
        %v2844 = vpop.xlane.xlu0 %2843
        %v2845 = vsel %vm2685, %v2793, 0.0
        %2846 = vadd.xlane.f32.xlu0 %v2845
        %v2847 = vpop.xlane.xlu0 %2846
        %v2848 = vsel %vm2685, %v2795, 0.0
        %2849 = vadd.xlane.f32.xlu0 %v2848
        %v2850 = vpop.xlane.xlu0 %2849
        %v2851 = vsel %vm2685, %v2797, 0.0
        %2852 = vadd.xlane.f32.xlu0 %v2851
        %v2853 = vpop.xlane.xlu0 %2852
        %v2854 = vsel %vm2685, %v2799, 0.0
        %2855 = vadd.xlane.f32.xlu0 %v2854
        %v2856 = vpop.xlane.xlu0 %2855
        %v2857 = vsel %vm2685, %v2801, 0.0
        %2858 = vadd.xlane.f32.xlu0 %v2857
        %v2859 = vpop.xlane.xlu0 %2858
        %v2860 = vsel %vm2685, %v2803, 0.0
        %2861 = vadd.xlane.f32.xlu0 %v2860
        %v2862 = vpop.xlane.xlu0 %2861
        %v2863 = vsel %vm2685, %v2805, 0.0
        %2864 = vadd.xlane.f32.xlu0 %v2863
        %v2865 = vpop.xlane.xlu0 %2864
        %v2866 = vsel %vm2685, %v2807, 0.0
        %2867 = vadd.xlane.f32.xlu0 %v2866
        %v2868 = vpop.xlane.xlu0 %2867
        %v2869 = vsel %vm2685, %v2809, 0.0
        %2870 = vadd.xlane.f32.xlu0 %v2869
        %v2871 = vpop.xlane.xlu0 %2870
        %v2872 = vsel %vm2685, %v2811, 0.0
        %2873 = vadd.xlane.f32.xlu0 %v2872
        %v2874 = vpop.xlane.xlu0 %2873
        %v2875 = vsel %vm2685, %v2813, 0.0
        %2876 = vadd.xlane.f32.xlu0 %v2875
        %v2877 = vpop.xlane.xlu0 %2876
        %v2878 = vsel %vm2685, %v2815, 0.0
        %2879 = vadd.xlane.f32.xlu0 %v2878
        %v2880 = vpop.xlane.xlu0 %2879
        %v2881 = vsel %vm2685, %v2817, 0.0
        %2882 = vadd.xlane.f32.xlu0 %v2881
        %v2883 = vpop.xlane.xlu0 %2882
        %v2884 = vsel %vm2685, %v2819, 0.0
        %2885 = vadd.xlane.f32.xlu0 %v2884
        %v2886 = vpop.xlane.xlu0 %2885
        %v2887 = vsel %vm2685, %v2821, 0.0
        %2888 = vadd.xlane.f32.xlu0 %v2887
        %v2889 = vpop.xlane.xlu0 %2888
        %v2890 = vsel %vm2685, %v2823, 0.0
        %2891 = vadd.xlane.f32.xlu0 %v2890
        %v2892 = vpop.xlane.xlu0 %2891
        %v2893 = vsel %vm2685, %v2825, 0.0
        %2894 = vadd.xlane.f32.xlu0 %v2893
        %v2895 = vpop.xlane.xlu0 %2894
        %v2896 = vsel %vm2685, %v2827, 0.0
        %2897 = vadd.xlane.f32.xlu0 %v2896
        %v2898 = vpop.xlane.xlu0 %2897
        %v2899 = vsel %vm2685, %v2829, 0.0
        %2900 = vadd.xlane.f32.xlu0 %v2899
        %v2901 = vpop.xlane.xlu0 %2900
        %v2902 = vrcp.pop %v2832
        %v2903 = vrcp.pop %v2835
        %v2904 = vrcp.pop %v2838
        %v2905 = vrcp.pop %v2841
        %v2906 = vrcp.pop %v2844
        %v2907 = vrcp.pop %v2847
        %v2908 = vrcp.pop %v2850
        %v2909 = vrcp.pop %v2853
        %v2910 = vrcp.pop %v2856
        %v2911 = vrcp.pop %v2859
        %v2912 = vrcp.pop %v2862
        %v2913 = vrcp.pop %v2865
        %v2914 = vrcp.pop %v2868
        %v2915 = vrcp.pop %v2871
        %v2916 = vrcp.pop %v2874
        %v2917 = vrcp.pop %v2877
        %v2918 = vrcp.pop %v2880
        %v2919 = vrcp.pop %v2883
        %v2920 = vrcp.pop %v2886
        %v2921 = vrcp.pop %v2889
        %v2922 = vrcp.pop %v2892
        %v2923 = vrcp.pop %v2895
        %v2924 = vrcp.pop %v2898
        %v2925 = vrcp.pop %v2901
        %v2926 = vmul.f32 %v2783, %v2902
        %v2927 = vmul.f32 %v2785, %v2903
        %v2928 = vmul.f32 %v2787, %v2904
        %v2929 = vmul.f32 %v2789, %v2905
        %v2930 = vmul.f32 %v2791, %v2906
        %v2931 = vmul.f32 %v2793, %v2907
        %v2932 = vmul.f32 %v2795, %v2908
        %v2933 = vmul.f32 %v2797, %v2909
        %v2934 = vmul.f32 %v2799, %v2910
        %v2935 = vmul.f32 %v2801, %v2911
        %v2936 = vmul.f32 %v2803, %v2912
        %v2937 = vmul.f32 %v2805, %v2913
        %v2938 = vmul.f32 %v2807, %v2914
        %v2939 = vmul.f32 %v2809, %v2915
        %v2940 = vmul.f32 %v2811, %v2916
        %v2941 = vmul.f32 %v2813, %v2917
        %v2942 = vmul.f32 %v2815, %v2918
        %v2943 = vmul.f32 %v2817, %v2919
        %v2944 = vmul.f32 %v2819, %v2920
        %v2945 = vmul.f32 %v2821, %v2921
        %v2946 = vmul.f32 %v2823, %v2922
        %v2947 = vmul.f32 %v2825, %v2923
        %v2948 = vmul.f32 %v2827, %v2924
        %v2949 = vmul.f32 %v2829, %v2925
        %v2951 = vsel %vm2685, %v2926, 0
        %v2954 = vsel %vm2685, %v2927, 0
        %2956 = vmatpush.msra.mxu0 0.0
        %2957 = vmatpush.msra.mxu0 0.0
        %2958 = vmatpush.msra.mxu0 0.0
        %2959 = vmatpush.msra.mxu0 0.0
        %2960 = vmatpush.msra.mxu0 0.0
        %2961 = vmatpush.msra.mxu0 0.0
        %2962 = vmatpush.msra.mxu0 0.0
        %2963 = vmatpush.msra.mxu0 0.0
        %2964 = vmatpush.msra.mxu0 0.0
        %2965 = vmatpush.msra.mxu0 0.0
        %2966 = vmatpush.msra.mxu0 0.0
        %2967 = vmatpush.msra.mxu0 0.0
        %2968 = vmatpush.msra.mxu0 0.0
        %2969 = vmatpush.msra.mxu0 0.0
        %2970 = vmatpush.msra.mxu0 %v2080
        %2971 = vmatpush.msra.mxu0 %v2078
        %2972 = vmatmul.f32.gmra.mxu0 %v2951
        %v2973 = vpop.f32.mrf.mxu0
        %v2974 = vadd.f32 0.0, %v2973
        %2975 = vmatmul.f32.gmra.mxu0 %v2954
        %v2976 = vpop.f32.mrf.mxu0
        %v2977 = vadd.f32 0.0, %v2976
        %2978 = vdwg.mxu0
        %v2980 = vsel %vm2685, %v2928, 0
        %v2983 = vsel %vm2685, %v2929, 0
        %2985 = vmatpush.msra.mxu0 0.0
        %2986 = vmatpush.msra.mxu0 0.0
        %2987 = vmatpush.msra.mxu0 0.0
        %2988 = vmatpush.msra.mxu0 0.0
        %2989 = vmatpush.msra.mxu0 0.0
        %2990 = vmatpush.msra.mxu0 0.0
        %2991 = vmatpush.msra.mxu0 0.0
        %2992 = vmatpush.msra.mxu0 0.0
        %2993 = vmatpush.msra.mxu0 0.0
        %2994 = vmatpush.msra.mxu0 0.0
        %2995 = vmatpush.msra.mxu0 0.0
        %2996 = vmatpush.msra.mxu0 0.0
        %2997 = vmatpush.msra.mxu0 0.0
        %2998 = vmatpush.msra.mxu0 0.0
        %2999 = vmatpush.msra.mxu0 %v2255
        %3000 = vmatpush.msra.mxu0 %v2253
        %3001 = vmatmul.f32.gmra.mxu0 %v2980
        %v3002 = vpop.f32.mrf.mxu0
        %v3003 = vadd.f32 0.0, %v3002
        %3004 = vmatmul.f32.gmra.mxu0 %v2983
        %v3005 = vpop.f32.mrf.mxu0
        %v3006 = vadd.f32 0.0, %v3005
        %3007 = vdwg.mxu0
        %v3009 = vsel %vm2685, %v2930, 0
        %v3012 = vsel %vm2685, %v2931, 0
        %3014 = vmatpush.msra.mxu0 0.0
        %3015 = vmatpush.msra.mxu0 0.0
        %3016 = vmatpush.msra.mxu0 0.0
        %3017 = vmatpush.msra.mxu0 0.0
        %3018 = vmatpush.msra.mxu0 0.0
        %3019 = vmatpush.msra.mxu0 0.0
        %3020 = vmatpush.msra.mxu0 0.0
        %3021 = vmatpush.msra.mxu0 0.0
        %3022 = vmatpush.msra.mxu0 0.0
        %3023 = vmatpush.msra.mxu0 0.0
        %3024 = vmatpush.msra.mxu0 0.0
        %3025 = vmatpush.msra.mxu0 0.0
        %3026 = vmatpush.msra.mxu0 0.0
        %3027 = vmatpush.msra.mxu0 0.0
        %3028 = vmatpush.msra.mxu0 %v2261
        %3029 = vmatpush.msra.mxu0 %v2259
        %3030 = vmatmul.f32.gmra.mxu0 %v3009
        %v3031 = vpop.f32.mrf.mxu0
        %v3032 = vadd.f32 0.0, %v3031
        %3033 = vmatmul.f32.gmra.mxu0 %v3012
        %v3034 = vpop.f32.mrf.mxu0
        %v3035 = vadd.f32 0.0, %v3034
        %3036 = vdwg.mxu0
        %v3038 = vsel %vm2685, %v2932, 0
        %v3041 = vsel %vm2685, %v2933, 0
        %3043 = vmatpush.msra.mxu0 0.0
        %3044 = vmatpush.msra.mxu0 0.0
        %3045 = vmatpush.msra.mxu0 0.0
        %3046 = vmatpush.msra.mxu0 0.0
        %3047 = vmatpush.msra.mxu0 0.0
        %3048 = vmatpush.msra.mxu0 0.0
        %3049 = vmatpush.msra.mxu0 0.0
        %3050 = vmatpush.msra.mxu0 0.0
        %3051 = vmatpush.msra.mxu0 0.0
        %3052 = vmatpush.msra.mxu0 0.0
        %3053 = vmatpush.msra.mxu0 0.0
        %3054 = vmatpush.msra.mxu0 0.0
        %3055 = vmatpush.msra.mxu0 0.0
        %3056 = vmatpush.msra.mxu0 0.0
        %3057 = vmatpush.msra.mxu0 %v2267
        %3058 = vmatpush.msra.mxu0 %v2265
        %3059 = vmatmul.f32.gmra.mxu0 %v3038
        %v3060 = vpop.f32.mrf.mxu0
        %v3061 = vadd.f32 0.0, %v3060
        %3062 = vmatmul.f32.gmra.mxu0 %v3041
        %v3063 = vpop.f32.mrf.mxu0
        %v3064 = vadd.f32 0.0, %v3063
        %3065 = vdwg.mxu0
        %v3067 = vsel %vm2685, %v2934, 0
        %v3070 = vsel %vm2685, %v2935, 0
        %3072 = vmatpush.msra.mxu0 0.0
        %3073 = vmatpush.msra.mxu0 0.0
        %3074 = vmatpush.msra.mxu0 0.0
        %3075 = vmatpush.msra.mxu0 0.0
        %3076 = vmatpush.msra.mxu0 0.0
        %3077 = vmatpush.msra.mxu0 0.0
        %3078 = vmatpush.msra.mxu0 0.0
        %3079 = vmatpush.msra.mxu0 0.0
        %3080 = vmatpush.msra.mxu0 0.0
        %3081 = vmatpush.msra.mxu0 0.0
        %3082 = vmatpush.msra.mxu0 0.0
        %3083 = vmatpush.msra.mxu0 0.0
        %3084 = vmatpush.msra.mxu0 0.0
        %3085 = vmatpush.msra.mxu0 0.0
        %3086 = vmatpush.msra.mxu0 %v2122
        %3087 = vmatpush.msra.mxu0 %v2120
        %3088 = vmatmul.f32.gmra.mxu0 %v3067
        %v3089 = vpop.f32.mrf.mxu0
        %v3090 = vadd.f32 0.0, %v3089
        %3091 = vmatmul.f32.gmra.mxu0 %v3070
        %v3092 = vpop.f32.mrf.mxu0
        %v3093 = vadd.f32 0.0, %v3092
        %3094 = vdwg.mxu0
        %v3096 = vsel %vm2685, %v2936, 0
        %v3099 = vsel %vm2685, %v2937, 0
        %3101 = vmatpush.msra.mxu0 0.0
        %3102 = vmatpush.msra.mxu0 0.0
        %3103 = vmatpush.msra.mxu0 0.0
        %3104 = vmatpush.msra.mxu0 0.0
        %3105 = vmatpush.msra.mxu0 0.0
        %3106 = vmatpush.msra.mxu0 0.0
        %3107 = vmatpush.msra.mxu0 0.0
        %3108 = vmatpush.msra.mxu0 0.0
        %3109 = vmatpush.msra.mxu0 0.0
        %3110 = vmatpush.msra.mxu0 0.0
        %3111 = vmatpush.msra.mxu0 0.0
        %3112 = vmatpush.msra.mxu0 0.0
        %3113 = vmatpush.msra.mxu0 0.0
        %3114 = vmatpush.msra.mxu0 0.0
        %3115 = vmatpush.msra.mxu0 %v2275
        %3116 = vmatpush.msra.mxu0 %v2273
        %3117 = vmatmul.f32.gmra.mxu0 %v3096
        %v3118 = vpop.f32.mrf.mxu0
        %v3119 = vadd.f32 0.0, %v3118
        %3120 = vmatmul.f32.gmra.mxu0 %v3099
        %v3121 = vpop.f32.mrf.mxu0
        %v3122 = vadd.f32 0.0, %v3121
        %3123 = vdwg.mxu0
        %v3125 = vsel %vm2685, %v2938, 0
        %v3128 = vsel %vm2685, %v2939, 0
        %3130 = vmatpush.msra.mxu0 0.0
        %3131 = vmatpush.msra.mxu0 0.0
        %3132 = vmatpush.msra.mxu0 0.0
        %3133 = vmatpush.msra.mxu0 0.0
        %3134 = vmatpush.msra.mxu0 0.0
        %3135 = vmatpush.msra.mxu0 0.0
        %3136 = vmatpush.msra.mxu0 0.0
        %3137 = vmatpush.msra.mxu0 0.0
        %3138 = vmatpush.msra.mxu0 0.0
        %3139 = vmatpush.msra.mxu0 0.0
        %3140 = vmatpush.msra.mxu0 0.0
        %3141 = vmatpush.msra.mxu0 0.0
        %3142 = vmatpush.msra.mxu0 0.0
        %3143 = vmatpush.msra.mxu0 0.0
        %3144 = vmatpush.msra.mxu0 %v2281
        %3145 = vmatpush.msra.mxu0 %v2279
        %3146 = vmatmul.f32.gmra.mxu0 %v3125
        %v3147 = vpop.f32.mrf.mxu0
        %v3148 = vadd.f32 0.0, %v3147
        %3149 = vmatmul.f32.gmra.mxu0 %v3128
        %v3150 = vpop.f32.mrf.mxu0
        %v3151 = vadd.f32 0.0, %v3150
        %3152 = vdwg.mxu0
        %v3154 = vsel %vm2685, %v2940, 0
        %v3157 = vsel %vm2685, %v2941, 0
        %3159 = vmatpush.msra.mxu0 0.0
        %3160 = vmatpush.msra.mxu0 0.0
        %3161 = vmatpush.msra.mxu0 0.0
        %3162 = vmatpush.msra.mxu0 0.0
        %3163 = vmatpush.msra.mxu0 0.0
        %3164 = vmatpush.msra.mxu0 0.0
        %3165 = vmatpush.msra.mxu0 0.0
        %3166 = vmatpush.msra.mxu0 0.0
        %3167 = vmatpush.msra.mxu0 0.0
        %3168 = vmatpush.msra.mxu0 0.0
        %3169 = vmatpush.msra.mxu0 0.0
        %3170 = vmatpush.msra.mxu0 0.0
        %3171 = vmatpush.msra.mxu0 0.0
        %3172 = vmatpush.msra.mxu0 0.0
        %3173 = vmatpush.msra.mxu0 %v2287
        %3174 = vmatpush.msra.mxu0 %v2285
        %3175 = vmatmul.f32.gmra.mxu0 %v3154
        %v3176 = vpop.f32.mrf.mxu0
        %v3177 = vadd.f32 0.0, %v3176
        %3178 = vmatmul.f32.gmra.mxu0 %v3157
        %v3179 = vpop.f32.mrf.mxu0
        %v3180 = vadd.f32 0.0, %v3179
        %3181 = vdwg.mxu0
        %v3183 = vsel %vm2685, %v2942, 0
        %v3186 = vsel %vm2685, %v2943, 0
        %3188 = vmatpush.msra.mxu0 0.0
        %3189 = vmatpush.msra.mxu0 0.0
        %3190 = vmatpush.msra.mxu0 0.0
        %3191 = vmatpush.msra.mxu0 0.0
        %3192 = vmatpush.msra.mxu0 0.0
        %3193 = vmatpush.msra.mxu0 0.0
        %3194 = vmatpush.msra.mxu0 0.0
        %3195 = vmatpush.msra.mxu0 0.0
        %3196 = vmatpush.msra.mxu0 0.0
        %3197 = vmatpush.msra.mxu0 0.0
        %3198 = vmatpush.msra.mxu0 0.0
        %3199 = vmatpush.msra.mxu0 0.0
        %3200 = vmatpush.msra.mxu0 0.0
        %3201 = vmatpush.msra.mxu0 0.0
        %3202 = vmatpush.msra.mxu0 %v2164
        %3203 = vmatpush.msra.mxu0 %v2162
        %3204 = vmatmul.f32.gmra.mxu0 %v3183
        %v3205 = vpop.f32.mrf.mxu0
        %v3206 = vadd.f32 0.0, %v3205
        %3207 = vmatmul.f32.gmra.mxu0 %v3186
        %v3208 = vpop.f32.mrf.mxu0
        %v3209 = vadd.f32 0.0, %v3208
        %3210 = vdwg.mxu0
        %v3212 = vsel %vm2685, %v2944, 0
        %v3215 = vsel %vm2685, %v2945, 0
        %3217 = vmatpush.msra.mxu0 0.0
        %3218 = vmatpush.msra.mxu0 0.0
        %3219 = vmatpush.msra.mxu0 0.0
        %3220 = vmatpush.msra.mxu0 0.0
        %3221 = vmatpush.msra.mxu0 0.0
        %3222 = vmatpush.msra.mxu0 0.0
        %3223 = vmatpush.msra.mxu0 0.0
        %3224 = vmatpush.msra.mxu0 0.0
        %3225 = vmatpush.msra.mxu0 0.0
        %3226 = vmatpush.msra.mxu0 0.0
        %3227 = vmatpush.msra.mxu0 0.0
        %3228 = vmatpush.msra.mxu0 0.0
        %3229 = vmatpush.msra.mxu0 0.0
        %3230 = vmatpush.msra.mxu0 0.0
        %3231 = vmatpush.msra.mxu0 %v2295
        %3232 = vmatpush.msra.mxu0 %v2293
        %3233 = vmatmul.f32.gmra.mxu0 %v3212
        %v3234 = vpop.f32.mrf.mxu0
        %v3235 = vadd.f32 0.0, %v3234
        %3236 = vmatmul.f32.gmra.mxu0 %v3215
        %v3237 = vpop.f32.mrf.mxu0
        %v3238 = vadd.f32 0.0, %v3237
        %3239 = vdwg.mxu0
        %v3241 = vsel %vm2685, %v2946, 0
        %v3244 = vsel %vm2685, %v2947, 0
        %3246 = vmatpush.msra.mxu0 0.0
        %3247 = vmatpush.msra.mxu0 0.0
        %3248 = vmatpush.msra.mxu0 0.0
        %3249 = vmatpush.msra.mxu0 0.0
        %3250 = vmatpush.msra.mxu0 0.0
        %3251 = vmatpush.msra.mxu0 0.0
        %3252 = vmatpush.msra.mxu0 0.0
        %3253 = vmatpush.msra.mxu0 0.0
        %3254 = vmatpush.msra.mxu0 0.0
        %3255 = vmatpush.msra.mxu0 0.0
        %3256 = vmatpush.msra.mxu0 0.0
        %3257 = vmatpush.msra.mxu0 0.0
        %3258 = vmatpush.msra.mxu0 0.0
        %3259 = vmatpush.msra.mxu0 0.0
        %3260 = vmatpush.msra.mxu0 %v2301
        %3261 = vmatpush.msra.mxu0 %v2299
        %3262 = vmatmul.f32.gmra.mxu0 %v3241
        %v3263 = vpop.f32.mrf.mxu0
        %v3264 = vadd.f32 0.0, %v3263
        %3265 = vmatmul.f32.gmra.mxu0 %v3244
        %v3266 = vpop.f32.mrf.mxu0
        %v3267 = vadd.f32 0.0, %v3266
        %3268 = vdwg.mxu0
        %v3270 = vsel %vm2685, %v2948, 0
        %v3273 = vsel %vm2685, %v2949, 0
        %3275 = vmatpush.msra.mxu0 0.0
        %3276 = vmatpush.msra.mxu0 0.0
        %3277 = vmatpush.msra.mxu0 0.0
        %3278 = vmatpush.msra.mxu0 0.0
        %3279 = vmatpush.msra.mxu0 0.0
        %3280 = vmatpush.msra.mxu0 0.0
        %3281 = vmatpush.msra.mxu0 0.0
        %3282 = vmatpush.msra.mxu0 0.0
        %3283 = vmatpush.msra.mxu0 0.0
        %3284 = vmatpush.msra.mxu0 0.0
        %3285 = vmatpush.msra.mxu0 0.0
        %3286 = vmatpush.msra.mxu0 0.0
        %3287 = vmatpush.msra.mxu0 0.0
        %3288 = vmatpush.msra.mxu0 0.0
        %3289 = vmatpush.msra.mxu0 %v2307
        %3290 = vmatpush.msra.mxu0 %v2305
        %3291 = vmatmul.f32.gmra.mxu0 %v3270
        %v3292 = vpop.f32.mrf.mxu0
        %v3293 = vadd.f32 0.0, %v3292
        %3294 = vmatmul.f32.gmra.mxu0 %v3273
        %v3295 = vpop.f32.mrf.mxu0
        %v3296 = vadd.f32 0.0, %v3295
        %3297 = vdwg.mxu0
        %3300 = vrot.lane.b32.xlu0 %v3003, 32
        %v3301 = vpop.permute.xlu0 %3300
        %3302 = vrot.lane.b32.xlu0 %v3006, 32
        %v3303 = vpop.permute.xlu0 %3302
        %3308 = vrot.lane.b32.xlu0 %v3032, 64
        %v3309 = vpop.permute.xlu0 %3308
        %3310 = vrot.lane.b32.xlu0 %v3035, 64
        %v3311 = vpop.permute.xlu0 %3310
        %3316 = vrot.lane.b32.xlu0 %v3061, 96
        %v3317 = vpop.permute.xlu0 %3316
        %3318 = vrot.lane.b32.xlu0 %v3064, 96
        %v3319 = vpop.permute.xlu0 %3318
        %3324 = vrot.lane.b32.xlu0 %v3119, 32
        %v3325 = vpop.permute.xlu0 %3324
        %3326 = vrot.lane.b32.xlu0 %v3122, 32
        %v3327 = vpop.permute.xlu0 %3326
        %3332 = vrot.lane.b32.xlu0 %v3148, 64
        %v3333 = vpop.permute.xlu0 %3332
        %3334 = vrot.lane.b32.xlu0 %v3151, 64
        %v3335 = vpop.permute.xlu0 %3334
        %3340 = vrot.lane.b32.xlu0 %v3177, 96
        %v3341 = vpop.permute.xlu0 %3340
        %3342 = vrot.lane.b32.xlu0 %v3180, 96
        %v3343 = vpop.permute.xlu0 %3342
        %3348 = vrot.lane.b32.xlu0 %v3235, 32
        %v3349 = vpop.permute.xlu0 %3348
        %3350 = vrot.lane.b32.xlu0 %v3238, 32
        %v3351 = vpop.permute.xlu0 %3350
        %3356 = vrot.lane.b32.xlu0 %v3264, 64
        %v3357 = vpop.permute.xlu0 %3356
        %3358 = vrot.lane.b32.xlu0 %v3267, 64
        %v3359 = vpop.permute.xlu0 %3358
        %3364 = vrot.lane.b32.xlu0 %v3293, 96
        %v3365 = vpop.permute.xlu0 %3364
        %3366 = vrot.lane.b32.xlu0 %v3296, 96
        %v3367 = vpop.permute.xlu0 %3366
        %v3370 = vsel %vm2312, %v2974, %v3301
        %v3371 = vsel %vm2312, %v2977, %v3303
        %vm3372 = vcmask 523264
        %v3373 = vsel %vm3372, %v3370, %v3309
        %v3374 = vsel %vm3372, %v3371, %v3311
        %vm3375 = vcmask 785408
        %v3376 = vsel %vm3375, %v3373, %v3317
        %v3377 = vsel %vm3375, %v3374, %v3319
        %v3378 = vsel %vm2312, %v3090, %v3325
        %v3379 = vsel %vm2312, %v3093, %v3327
        %v3380 = vsel %vm3372, %v3378, %v3333
        %v3381 = vsel %vm3372, %v3379, %v3335
        %v3382 = vsel %vm3375, %v3380, %v3341
        %v3383 = vsel %vm3375, %v3381, %v3343
        %v3384 = vsel %vm2312, %v3206, %v3349
        %v3385 = vsel %vm2312, %v3209, %v3351
        %v3386 = vsel %vm3372, %v3384, %v3357
        %v3387 = vsel %vm3372, %v3385, %v3359
        %v3388 = vsel %vm3375, %v3386, %v3365
        %v3389 = vsel %vm3375, %v3387, %v3367
        %v3390 = vpack.c.bf16 %v3377, %v3376
        %v3391 = vpack.c.bf16 %v3383, %v3382
        %v3392 = vpack.c.bf16 %v3389, %v3388
        %v3393 = vld [vmem:[%s337 + $0x24] sm:$0xff]
        %v3394 = vld [vmem:[%s337 + $0x2c] sm:$0xf]
        %v3395 = vld [vmem:[%s337 + $0x68] sm:$0xff]
        %v3396 = vld [vmem:[%s337 + $0x70] sm:$0xf]
        %v3397 = vld [vmem:[%s337 + $0xac] sm:$0xff]
        %v3398 = vld [vmem:[%s337 + $0xb4] sm:$0xf]
        %v3399 = vld [vmem:[%s337 + $0xf0] sm:$0xff]
        %v3400 = vld [vmem:[%s337 + $0xf8] sm:$0xf]
        %v3401 = vld [vmem:[%s337 + $0x134] sm:$0xff]
        %v3402 = vld [vmem:[%s337 + $0x13c] sm:$0xf]
        %v3403 = vld [vmem:[%s337 + $0x178] sm:$0xff]
        %v3404 = vld [vmem:[%s337 + $0x180] sm:$0xf]
        %v3405 = vld [vmem:[%s337 + $0x1bc] sm:$0xff]
        %v3406 = vld [vmem:[%s337 + $0x1c4] sm:$0xf]
        %v3407 = vld [vmem:[%s337 + $0x200] sm:$0xff]
        %v3408 = vld [vmem:[%s337 + $0x208] sm:$0xf]
        %v3409 = vld [vmem:[%s337 + $0x244] sm:$0xff]
        %v3410 = vld [vmem:[%s337 + $0x24c] sm:$0xf]
        %v3411 = vld [vmem:[%s337 + $0x288] sm:$0xff]
        %v3412 = vld [vmem:[%s337 + $0x290] sm:$0xf]
        %v3413 = vld [vmem:[%s337 + $0x2cc] sm:$0xff]
        %v3414 = vld [vmem:[%s337 + $0x2d4] sm:$0xf]
        %v3415 = vld [vmem:[%s337 + $0x310] sm:$0xff]
        %v3416 = vld [vmem:[%s337 + $0x318] sm:$0xf]
        %v3417 = vld [vmem:[%s337 + $0x354] sm:$0xff]
        %v3418 = vld [vmem:[%s337 + $0x35c] sm:$0xf]
        %v3419 = vld [vmem:[%s337 + $0x398] sm:$0xff]
        %v3420 = vld [vmem:[%s337 + $0x3a0] sm:$0xf]
        %v3421 = vld [vmem:[%s337 + $0x3dc] sm:$0xff]
        %v3422 = vld [vmem:[%s337 + $0x3e4] sm:$0xf]
        %v3423 = vld [vmem:[%s337 + $0x420] sm:$0xff]
        %v3424 = vld [vmem:[%s337 + $0x428] sm:$0xf]
        %v3425 = vld [vmem:[%s337 + $0x464] sm:$0xff]
        %v3426 = vld [vmem:[%s337 + $0x46c] sm:$0xf]
        %v3427 = vld [vmem:[%s337 + $0x4a8] sm:$0xff]
        %v3428 = vld [vmem:[%s337 + $0x4b0] sm:$0xf]
        %v3429 = vld [vmem:[%s337 + $0x4ec] sm:$0xff]
        %v3430 = vld [vmem:[%s337 + $0x4f4] sm:$0xf]
        %v3431 = vld [vmem:[%s337 + $0x530] sm:$0xff]
        %v3432 = vld [vmem:[%s337 + $0x538] sm:$0xf]
        %v3433 = vld [vmem:[%s337 + $0x574] sm:$0xff]
        %v3434 = vld [vmem:[%s337 + $0x57c] sm:$0xf]
        %v3435 = vld [vmem:[%s337 + $0x5b8] sm:$0xff]
        %v3436 = vld [vmem:[%s337 + $0x5c0] sm:$0xf]
        %v3437 = vld [vmem:[%s337 + $0x5fc] sm:$0xff]
        %v3438 = vld [vmem:[%s337 + $0x604] sm:$0xf]
        %v3439 = vld [vmem:[%s337 + $0x640] sm:$0xff]
        %v3440 = vld [vmem:[%s337 + $0x648] sm:$0xf]
        %v3441 = vld [vmem:[%s337 + $0x684] sm:$0xff]
        %v3442 = vld [vmem:[%s337 + $0x68c] sm:$0xf]
        %v3443 = vld [vmem:[%s337 + $0x6c8] sm:$0xff]
        %v3444 = vld [vmem:[%s337 + $0x6d0] sm:$0xf]
        %v3445 = vld [vmem:[%s337 + $0x70c] sm:$0xff]
        %v3446 = vld [vmem:[%s337 + $0x714] sm:$0xf]
        %v3447 = vld [vmem:[%s337 + $0x750] sm:$0xff]
        %v3448 = vld [vmem:[%s337 + $0x758] sm:$0xf]
        %v3449 = vld [vmem:[%s337 + $0x794] sm:$0xff]
        %v3450 = vld [vmem:[%s337 + $0x79c] sm:$0xf]
        %v3451 = vld [vmem:[%s337 + $0x7d8] sm:$0xff]
        %v3452 = vld [vmem:[%s337 + $0x7e0] sm:$0xf]
        %v3453 = vld [vmem:[%s337 + $0x81c] sm:$0xff]
        %v3454 = vld [vmem:[%s337 + $0x824] sm:$0xf]
        %v3455 = vld [vmem:[%s337 + $0x860] sm:$0xff]
        %v3456 = vld [vmem:[%s337 + $0x868] sm:$0xf]
        %v3457 = vld [vmem:[%s337 + $0x8a4] sm:$0xff]
        %v3458 = vld [vmem:[%s337 + $0x8ac] sm:$0xf]
        %v3459 = vld [vmem:[%s337 + $0x8e8] sm:$0xff]
        %v3460 = vld [vmem:[%s337 + $0x8f0] sm:$0xf]
        %v3461 = vld [vmem:[%s337 + $0x92c] sm:$0xff]
        %v3462 = vld [vmem:[%s337 + $0x934] sm:$0xf]
        %v3463 = vld [vmem:[%s337 + $0x970] sm:$0xff]
        %v3464 = vld [vmem:[%s337 + $0x978] sm:$0xf]
        %v3465 = vld [vmem:[%s337 + $0x9b4] sm:$0xff]
        %v3466 = vld [vmem:[%s337 + $0x9bc] sm:$0xf]
        %v3467 = vld [vmem:[%s337 + $0x9f8] sm:$0xff]
        %v3468 = vld [vmem:[%s337 + $0xa00] sm:$0xf]
        %v3469 = vld [vmem:[%s337 + $0xa3c] sm:$0xff]
        %v3470 = vld [vmem:[%s337 + $0xa44] sm:$0xf]
        %v3471 = vld [vmem:[%s337 + $0xa80] sm:$0xff]
        %v3472 = vld [vmem:[%s337 + $0xa88] sm:$0xf]
        %v3473 = vld [vmem:[%s337 + $0xac4] sm:$0xff]
        %v3474 = vld [vmem:[%s337 + $0xacc] sm:$0xf]
        %v3475 = vld [vmem:[%s337 + $0xb08] sm:$0xff]
        %v3476 = vld [vmem:[%s337 + $0xb10] sm:$0xf]
        %v3477 = vld [vmem:[%s337 + $0xb4c] sm:$0xff]
        %v3478 = vld [vmem:[%s337 + $0xb54] sm:$0xf]
        %v3479 = vld [vmem:[%s337 + $0xb90] sm:$0xff]
        %v3480 = vld [vmem:[%s337 + $0xb98] sm:$0xf]
        %v3481 = vld [vmem:[%s337 + $0xbd4] sm:$0xff]
        %v3482 = vld [vmem:[%s337 + $0xbdc] sm:$0xf]
        %v3483 = vld [vmem:[%s337 + $0xc18] sm:$0xff]
        %v3484 = vld [vmem:[%s337 + $0xc20] sm:$0xf]
        %v3485 = vld [vmem:[%s337 + $0xc5c] sm:$0xff]
        %v3486 = vld [vmem:[%s337 + $0xc64] sm:$0xf]
        %v3487 = vld [vmem:[%s337 + $0xca0] sm:$0xff]
        %v3488 = vld [vmem:[%s337 + $0xca8] sm:$0xf]
        %s3489 = scalar_lea.vmem %s357, 1 [#allocation10]
        %v3490 = vld [vmem:[%s3489] ss:$8 sm:$0x7]
        %v3492 = vperm.slane %v3490, 0
        %v3493 = vperm.slane %v3490, 1
        %v3494 = vperm.slane %v3490, 2
        %v3594 = vunpack.c.l.b16 %v3393
        %v3595 = vunpack.c.h.b16 %v3393
        %v3596 = vunpack.c.l.b16 %v3394
        %v3597 = vunpack.c.l.b16 %v3395
        %v3598 = vunpack.c.h.b16 %v3395
        %v3599 = vunpack.c.l.b16 %v3396
        %v3600 = vunpack.c.l.b16 %v3397
        %v3601 = vunpack.c.h.b16 %v3397
        %v3602 = vunpack.c.l.b16 %v3398
        %v3603 = vunpack.c.l.b16 %v3399
        %v3604 = vunpack.c.h.b16 %v3399
        %v3605 = vunpack.c.l.b16 %v3400
        %v3606 = vunpack.c.l.b16 %v3401
        %v3607 = vunpack.c.h.b16 %v3401
        %v3608 = vunpack.c.l.b16 %v3402
        %v3609 = vunpack.c.l.b16 %v3403
        %v3610 = vunpack.c.h.b16 %v3403
        %v3611 = vunpack.c.l.b16 %v3404
        %v3612 = vunpack.c.l.b16 %v3405
        %v3613 = vunpack.c.h.b16 %v3405
        %v3614 = vunpack.c.l.b16 %v3406
        %v3615 = vunpack.c.l.b16 %v3407
        %v3616 = vunpack.c.h.b16 %v3407
        %v3617 = vunpack.c.l.b16 %v3408
        %v3618 = vunpack.c.l.b16 %v3409
        %v3619 = vunpack.c.h.b16 %v3409
        %v3620 = vunpack.c.l.b16 %v3410
        %v3621 = vunpack.c.l.b16 %v3411
        %v3622 = vunpack.c.h.b16 %v3411
        %v3623 = vunpack.c.l.b16 %v3412
        %v3624 = vunpack.c.l.b16 %v3413
        %v3625 = vunpack.c.h.b16 %v3413
        %v3626 = vunpack.c.l.b16 %v3414
        %v3627 = vunpack.c.l.b16 %v3415
        %v3628 = vunpack.c.h.b16 %v3415
        %v3629 = vunpack.c.l.b16 %v3416
        %v3630 = vunpack.c.l.b16 %v3417
        %v3631 = vunpack.c.h.b16 %v3417
        %v3632 = vunpack.c.l.b16 %v3418
        %v3633 = vunpack.c.l.b16 %v3419
        %v3634 = vunpack.c.h.b16 %v3419
        %v3635 = vunpack.c.l.b16 %v3420
        %v3636 = vunpack.c.l.b16 %v3421
        %v3637 = vunpack.c.h.b16 %v3421
        %v3638 = vunpack.c.l.b16 %v3422
        %v3639 = vunpack.c.l.b16 %v3423
        %v3640 = vunpack.c.h.b16 %v3423
        %v3641 = vunpack.c.l.b16 %v3424
        %v3642 = vunpack.c.l.b16 %v3425
        %v3643 = vunpack.c.h.b16 %v3425
        %v3644 = vunpack.c.l.b16 %v3426
        %v3645 = vunpack.c.l.b16 %v3427
        %v3646 = vunpack.c.h.b16 %v3427
        %v3647 = vunpack.c.l.b16 %v3428
        %v3648 = vunpack.c.l.b16 %v3429
        %v3649 = vunpack.c.h.b16 %v3429
        %v3650 = vunpack.c.l.b16 %v3430
        %v3651 = vunpack.c.l.b16 %v3431
        %v3652 = vunpack.c.h.b16 %v3431
        %v3653 = vunpack.c.l.b16 %v3432
        %v3654 = vunpack.c.l.b16 %v3433
        %v3655 = vunpack.c.h.b16 %v3433
        %v3656 = vunpack.c.l.b16 %v3434
        %v3657 = vunpack.c.l.b16 %v3435
        %v3658 = vunpack.c.h.b16 %v3435
        %v3659 = vunpack.c.l.b16 %v3436
        %v3660 = vunpack.c.l.b16 %v3437
        %v3661 = vunpack.c.h.b16 %v3437
        %v3662 = vunpack.c.l.b16 %v3438
        %v3663 = vunpack.c.l.b16 %v3439
        %v3664 = vunpack.c.h.b16 %v3439
        %v3665 = vunpack.c.l.b16 %v3440
        %v3666 = vunpack.c.l.b16 %v3441
        %v3667 = vunpack.c.h.b16 %v3441
        %v3668 = vunpack.c.l.b16 %v3442
        %v3669 = vunpack.c.l.b16 %v3443
        %v3670 = vunpack.c.h.b16 %v3443
        %v3671 = vunpack.c.l.b16 %v3444
        %v3672 = vunpack.c.l.b16 %v3445
        %v3673 = vunpack.c.h.b16 %v3445
        %v3674 = vunpack.c.l.b16 %v3446
        %v3675 = vunpack.c.l.b16 %v3447
        %v3676 = vunpack.c.h.b16 %v3447
        %v3677 = vunpack.c.l.b16 %v3448
        %v3678 = vunpack.c.l.b16 %v3449
        %v3679 = vunpack.c.h.b16 %v3449
        %v3680 = vunpack.c.l.b16 %v3450
        %v3681 = vunpack.c.l.b16 %v3451
        %v3682 = vunpack.c.h.b16 %v3451
        %v3683 = vunpack.c.l.b16 %v3452
        %v3684 = vunpack.c.l.b16 %v3453
        %v3685 = vunpack.c.h.b16 %v3453
        %v3686 = vunpack.c.l.b16 %v3454
        %v3687 = vunpack.c.l.b16 %v3455
        %v3688 = vunpack.c.h.b16 %v3455
        %v3689 = vunpack.c.l.b16 %v3456
        %v3690 = vunpack.c.l.b16 %v3457
        %v3691 = vunpack.c.h.b16 %v3457
        %v3692 = vunpack.c.l.b16 %v3458
        %v3693 = vunpack.c.l.b16 %v3459
        %v3694 = vunpack.c.h.b16 %v3459
        %v3695 = vunpack.c.l.b16 %v3460
        %v3696 = vunpack.c.l.b16 %v3461
        %v3697 = vunpack.c.h.b16 %v3461
        %v3698 = vunpack.c.l.b16 %v3462
        %v3699 = vunpack.c.l.b16 %v3463
        %v3700 = vunpack.c.h.b16 %v3463
        %v3701 = vunpack.c.l.b16 %v3464
        %v3702 = vunpack.c.l.b16 %v3465
        %v3703 = vunpack.c.h.b16 %v3465
        %v3704 = vunpack.c.l.b16 %v3466
        %v3705 = vunpack.c.l.b16 %v3467
        %v3706 = vunpack.c.h.b16 %v3467
        %v3707 = vunpack.c.l.b16 %v3468
        %v3708 = vunpack.c.l.b16 %v3469
        %v3709 = vunpack.c.h.b16 %v3469
        %v3710 = vunpack.c.l.b16 %v3470
        %v3711 = vunpack.c.l.b16 %v3471
        %v3712 = vunpack.c.h.b16 %v3471
        %v3713 = vunpack.c.l.b16 %v3472
        %v3714 = vunpack.c.l.b16 %v3473
        %v3715 = vunpack.c.h.b16 %v3473
        %v3716 = vunpack.c.l.b16 %v3474
        %v3717 = vunpack.c.l.b16 %v3475
        %v3718 = vunpack.c.h.b16 %v3475
        %v3719 = vunpack.c.l.b16 %v3476
        %v3720 = vunpack.c.l.b16 %v3477
        %v3721 = vunpack.c.h.b16 %v3477
        %v3722 = vunpack.c.l.b16 %v3478
        %v3723 = vunpack.c.l.b16 %v3479
        %v3724 = vunpack.c.h.b16 %v3479
        %v3725 = vunpack.c.l.b16 %v3480
        %v3726 = vunpack.c.l.b16 %v3481
        %v3727 = vunpack.c.h.b16 %v3481
        %v3728 = vunpack.c.l.b16 %v3482
        %v3729 = vunpack.c.l.b16 %v3483
        %v3730 = vunpack.c.h.b16 %v3483
        %v3731 = vunpack.c.l.b16 %v3484
        %v3732 = vunpack.c.l.b16 %v3485
        %v3733 = vunpack.c.h.b16 %v3485
        %v3734 = vunpack.c.l.b16 %v3486
        %v3735 = vunpack.c.l.b16 %v3487
        %v3736 = vunpack.c.h.b16 %v3487
        %v3737 = vunpack.c.l.b16 %v3488
        %v3738 = vpack.c.b16 %v3597, %v3594
        %v3739 = vpack.c.b16 %v3598, %v3595
        %v3740 = vpack.c.b16 %v3599, %v3596
        %v3741 = vpack.c.b16 %v3603, %v3600
        %v3742 = vpack.c.b16 %v3604, %v3601
        %v3743 = vpack.c.b16 %v3605, %v3602
        %v3744 = vpack.c.b16 %v3609, %v3606
        %v3745 = vpack.c.b16 %v3610, %v3607
        %v3746 = vpack.c.b16 %v3611, %v3608
        %v3747 = vpack.c.b16 %v3615, %v3612
        %v3748 = vpack.c.b16 %v3616, %v3613
        %v3749 = vpack.c.b16 %v3617, %v3614
        %v3750 = vpack.c.b16 %v3621, %v3618
        %v3751 = vpack.c.b16 %v3622, %v3619
        %v3752 = vpack.c.b16 %v3623, %v3620
        %v3753 = vpack.c.b16 %v3627, %v3624
        %v3754 = vpack.c.b16 %v3628, %v3625
        %v3755 = vpack.c.b16 %v3629, %v3626
        %v3756 = vpack.c.b16 %v3633, %v3630
        %v3757 = vpack.c.b16 %v3634, %v3631
        %v3758 = vpack.c.b16 %v3635, %v3632
        %v3759 = vpack.c.b16 %v3639, %v3636
        %v3760 = vpack.c.b16 %v3640, %v3637
        %v3761 = vpack.c.b16 %v3641, %v3638
        %v3762 = vpack.c.b16 %v3645, %v3642
        %v3763 = vpack.c.b16 %v3646, %v3643
        %v3764 = vpack.c.b16 %v3647, %v3644
        %v3765 = vpack.c.b16 %v3651, %v3648
        %v3766 = vpack.c.b16 %v3652, %v3649
        %v3767 = vpack.c.b16 %v3653, %v3650
        %v3768 = vpack.c.b16 %v3657, %v3654
        %v3769 = vpack.c.b16 %v3658, %v3655
        %v3770 = vpack.c.b16 %v3659, %v3656
        %v3771 = vpack.c.b16 %v3663, %v3660
        %v3772 = vpack.c.b16 %v3664, %v3661
        %v3773 = vpack.c.b16 %v3665, %v3662
        %v3774 = vpack.c.b16 %v3669, %v3666
        %v3775 = vpack.c.b16 %v3670, %v3667
        %v3776 = vpack.c.b16 %v3671, %v3668
        %v3777 = vpack.c.b16 %v3675, %v3672
        %v3778 = vpack.c.b16 %v3676, %v3673
        %v3779 = vpack.c.b16 %v3677, %v3674
        %v3780 = vpack.c.b16 %v3681, %v3678
        %v3781 = vpack.c.b16 %v3682, %v3679
        %v3782 = vpack.c.b16 %v3683, %v3680
        %v3783 = vpack.c.b16 %v3687, %v3684
        %v3784 = vpack.c.b16 %v3688, %v3685
        %v3785 = vpack.c.b16 %v3689, %v3686
        %v3786 = vpack.c.b16 %v3693, %v3690
        %v3787 = vpack.c.b16 %v3694, %v3691
        %v3788 = vpack.c.b16 %v3695, %v3692
        %v3789 = vpack.c.b16 %v3699, %v3696
        %v3790 = vpack.c.b16 %v3700, %v3697
        %v3791 = vpack.c.b16 %v3701, %v3698
        %v3792 = vpack.c.b16 %v3705, %v3702
        %v3793 = vpack.c.b16 %v3706, %v3703
        %v3794 = vpack.c.b16 %v3707, %v3704
        %v3795 = vpack.c.b16 %v3711, %v3708
        %v3796 = vpack.c.b16 %v3712, %v3709
        %v3797 = vpack.c.b16 %v3713, %v3710
        %v3798 = vpack.c.b16 %v3717, %v3714
        %v3799 = vpack.c.b16 %v3718, %v3715
        %v3800 = vpack.c.b16 %v3719, %v3716
        %v3801 = vpack.c.b16 %v3723, %v3720
        %v3802 = vpack.c.b16 %v3724, %v3721
        %v3803 = vpack.c.b16 %v3725, %v3722
        %v3804 = vpack.c.b16 %v3729, %v3726
        %v3805 = vpack.c.b16 %v3730, %v3727
        %v3806 = vpack.c.b16 %v3731, %v3728
        %v3807 = vpack.c.b16 %v3735, %v3732
        %v3808 = vpack.c.b16 %v3736, %v3733
        %v3809 = vpack.c.b16 %v3737, %v3734
        %3882 = vmatpush.bf16.msra.mxu0 %v3759
        %3883 = vmatpush.bf16.msra.mxu0 %v3756
        %3884 = vmatpush.bf16.msra.mxu0 %v3753
        %3885 = vmatpush.bf16.msra.mxu0 %v3750
        %3886 = vmatpush.bf16.msra.mxu0 %v3747
        %3887 = vmatpush.bf16.msra.mxu0 %v3744
        %3888 = vmatpush.bf16.msra.mxu0 %v3741
        %3889 = vmatpush.bf16.msra.mxu0 %v3738
        %3890 = vmatmul.bf16.gmra.mxu0 %v3390
        %v3891 = vpop.f32.mrf.mxu0
        %v3892 = vadd.f32 %v3492, %v3891
        %v3893 = vpop.f32.mrf.mxu0
        %v3894 = vadd.f32 %v3492, %v3893
        %3895 = vdwg.mxu0
        %3896 = vmatpush.bf16.msra.mxu0 %v3783
        %3897 = vmatpush.bf16.msra.mxu0 %v3780
        %3898 = vmatpush.bf16.msra.mxu0 %v3777
        %3899 = vmatpush.bf16.msra.mxu0 %v3774
        %3900 = vmatpush.bf16.msra.mxu0 %v3771
        %3901 = vmatpush.bf16.msra.mxu0 %v3768
        %3902 = vmatpush.bf16.msra.mxu0 %v3765
        %3903 = vmatpush.bf16.msra.mxu0 %v3762
        %3904 = vmatmul.bf16.gmra.mxu0 %v3391
        %v3905 = vpop.f32.mrf.mxu0
        %v3906 = vadd.f32 %v3892, %v3905
        %v3907 = vpop.f32.mrf.mxu0
        %v3908 = vadd.f32 %v3894, %v3907
        %3909 = vdwg.mxu0
        %3910 = vmatpush.bf16.msra.mxu0 %v3807
        %3911 = vmatpush.bf16.msra.mxu0 %v3804
        %3912 = vmatpush.bf16.msra.mxu0 %v3801
        %3913 = vmatpush.bf16.msra.mxu0 %v3798
        %3914 = vmatpush.bf16.msra.mxu0 %v3795
        %3915 = vmatpush.bf16.msra.mxu0 %v3792
        %3916 = vmatpush.bf16.msra.mxu0 %v3789
        %3917 = vmatpush.bf16.msra.mxu0 %v3786
        %3918 = vmatmul.bf16.gmra.mxu0 %v3392
        %v3919 = vpop.f32.mrf.mxu0
        %v3920 = vadd.f32 %v3906, %v3919
        %v3921 = vpop.f32.mrf.mxu0
        %v3922 = vadd.f32 %v3908, %v3921
        %3923 = vdwg.mxu0
        %3924 = vmatpush.bf16.msra.mxu0 %v3760
        %3925 = vmatpush.bf16.msra.mxu0 %v3757
        %3926 = vmatpush.bf16.msra.mxu0 %v3754
        %3927 = vmatpush.bf16.msra.mxu0 %v3751
        %3928 = vmatpush.bf16.msra.mxu0 %v3748
        %3929 = vmatpush.bf16.msra.mxu0 %v3745
        %3930 = vmatpush.bf16.msra.mxu0 %v3742
        %3931 = vmatpush.bf16.msra.mxu0 %v3739
        %3932 = vmatmul.bf16.gmra.mxu0 %v3390
        %v3933 = vpop.f32.mrf.mxu0
        %v3934 = vadd.f32 %v3493, %v3933
        %v3935 = vpop.f32.mrf.mxu0
        %v3936 = vadd.f32 %v3493, %v3935
        %3937 = vdwg.mxu0
        %3938 = vmatpush.bf16.msra.mxu0 %v3784
        %3939 = vmatpush.bf16.msra.mxu0 %v3781
        %3940 = vmatpush.bf16.msra.mxu0 %v3778
        %3941 = vmatpush.bf16.msra.mxu0 %v3775
        %3942 = vmatpush.bf16.msra.mxu0 %v3772
        %3943 = vmatpush.bf16.msra.mxu0 %v3769
        %3944 = vmatpush.bf16.msra.mxu0 %v3766
        %3945 = vmatpush.bf16.msra.mxu0 %v3763
        %3946 = vmatmul.bf16.gmra.mxu0 %v3391
        %v3947 = vpop.f32.mrf.mxu0
        %v3948 = vadd.f32 %v3934, %v3947
        %v3949 = vpop.f32.mrf.mxu0
        %v3950 = vadd.f32 %v3936, %v3949
        %3951 = vdwg.mxu0
        %3952 = vmatpush.bf16.msra.mxu0 %v3808
        %3953 = vmatpush.bf16.msra.mxu0 %v3805
        %3954 = vmatpush.bf16.msra.mxu0 %v3802
        %3955 = vmatpush.bf16.msra.mxu0 %v3799
        %3956 = vmatpush.bf16.msra.mxu0 %v3796
        %3957 = vmatpush.bf16.msra.mxu0 %v3793
        %3958 = vmatpush.bf16.msra.mxu0 %v3790
        %3959 = vmatpush.bf16.msra.mxu0 %v3787
        %3960 = vmatmul.bf16.gmra.mxu0 %v3392
        %v3961 = vpop.f32.mrf.mxu0
        %v3962 = vadd.f32 %v3948, %v3961
        %v3963 = vpop.f32.mrf.mxu0
        %v3964 = vadd.f32 %v3950, %v3963
        %3965 = vdwg.mxu0
        %3966 = vmatpush.bf16.msra.mxu0 %v3761
        %3967 = vmatpush.bf16.msra.mxu0 %v3758
        %3968 = vmatpush.bf16.msra.mxu0 %v3755
        %3969 = vmatpush.bf16.msra.mxu0 %v3752
        %3970 = vmatpush.bf16.msra.mxu0 %v3749
        %3971 = vmatpush.bf16.msra.mxu0 %v3746
        %3972 = vmatpush.bf16.msra.mxu0 %v3743
        %3973 = vmatpush.bf16.msra.mxu0 %v3740
        %3974 = vmatmul.bf16.gmra.mxu0 %v3390
        %v3975 = vpop.f32.mrf.mxu0
        %v3976 = vadd.f32 %v3494, %v3975
        %v3977 = vpop.f32.mrf.mxu0
        %v3978 = vadd.f32 %v3494, %v3977
        %3979 = vdwg.mxu0
        %3980 = vmatpush.bf16.msra.mxu0 %v3785
        %3981 = vmatpush.bf16.msra.mxu0 %v3782
        %3982 = vmatpush.bf16.msra.mxu0 %v3779
        %3983 = vmatpush.bf16.msra.mxu0 %v3776
        %3984 = vmatpush.bf16.msra.mxu0 %v3773
        %3985 = vmatpush.bf16.msra.mxu0 %v3770
        %3986 = vmatpush.bf16.msra.mxu0 %v3767
        %3987 = vmatpush.bf16.msra.mxu0 %v3764
        %3988 = vmatmul.bf16.gmra.mxu0 %v3391
        %v3989 = vpop.f32.mrf.mxu0
        %v3990 = vadd.f32 %v3976, %v3989
        %v3991 = vpop.f32.mrf.mxu0
        %v3992 = vadd.f32 %v3978, %v3991
        %3993 = vdwg.mxu0
        %3994 = vmatpush.bf16.msra.mxu0 %v3809
        %3995 = vmatpush.bf16.msra.mxu0 %v3806
        %3996 = vmatpush.bf16.msra.mxu0 %v3803
        %3997 = vmatpush.bf16.msra.mxu0 %v3800
        %3998 = vmatpush.bf16.msra.mxu0 %v3797
        %3999 = vmatpush.bf16.msra.mxu0 %v3794
        %4000 = vmatpush.bf16.msra.mxu0 %v3791
        %4001 = vmatpush.bf16.msra.mxu0 %v3788
        %4002 = vmatmul.bf16.gmra.mxu0 %v3392
        %v4003 = vpop.f32.mrf.mxu0
        %v4004 = vadd.f32 %v3990, %v4003
        %v4005 = vpop.f32.mrf.mxu0
        %v4006 = vadd.f32 %v3992, %v4005
        %4007 = vdwg.mxu0
        %v4008 = vlaneseq
        %v4009 = vand.u32 %v4008, 127
        %v4010 = vadd.s32 %v4009, 128
        %v4011 = vadd.s32 %v4009, 256
        %vm4012 = vcmp.lt.s32.totalorder %v4009, 312
        %vm4013 = vcmp.lt.s32.totalorder %v4010, 312
        %vm4014 = vcmp.lt.s32.totalorder %v4011, 312
        %v4015 = vsel %vm4012, 1, 0
        %v4016 = vsel %vm4013, 1, 0
        %v4017 = vsel %vm4014, 1, 0
        %v4018 = vcvt.s32.f32 %v4015
        %v4019 = vcvt.s32.f32 %v4016
        %v4020 = vcvt.s32.f32 %v4017
        %v4021 = vadd.f32 %v410, %v3920
        %v4022 = vadd.f32 %v411, %v3962
        %v4023 = vadd.f32 %v412, %v4004
        %v4024 = vadd.f32 %v413, %v3922
        %v4025 = vadd.f32 %v414, %v3964
        %v4026 = vadd.f32 %v415, %v4006
        %s4027 = scalar_lea.vmem %s357, 2 [#allocation10]
        %v4028 = vld [vmem:[%s4027] ss:$8 sm:$0x7]
        %s4029 = scalar_lea.vmem %s357, 3 [#allocation10]
        %v4030 = vld [vmem:[%s4029] ss:$8 sm:$0x7]
        %v4031 = vadd.f32 %v4021, %v4022
        %v4032 = vadd.f32 %v4031, %v4023
        %4033 = vadd.xlane.f32.xlu0 %v4032
        %v4034 = vpop.xlane.xlu0 %4033
        %v4035 = vadd.f32 %v4024, %v4025
        %v4036 = vadd.f32 %v4035, %v4026
        %4037 = vadd.xlane.f32.xlu0 %v4036
        %v4038 = vpop.xlane.xlu0 %4037
        %v4039 = vmul.f32 %v4034, 0.0032051282
        %v4040 = vmul.f32 %v4038, 0.0032051282
        %v4041 = vsub.f32 %v4021, %v4039
        %v4042 = vsub.f32 %v4022, %v4039
        %v4043 = vsub.f32 %v4023, %v4039
        %v4044 = vsub.f32 %v4024, %v4040
        %v4045 = vsub.f32 %v4025, %v4040
        %v4046 = vsub.f32 %v4026, %v4040
        %v4047 = vmul.f32 %v4041, %v4018
        %v4048 = vmul.f32 %v4042, %v4019
        %v4049 = vmul.f32 %v4043, %v4020
        %v4050 = vmul.f32 %v4044, %v4018
        %v4051 = vmul.f32 %v4045, %v4019
        %v4052 = vmul.f32 %v4046, %v4020
        %v4053 = vmul.f32 %v4047, %v4047
        %v4054 = vmul.f32 %v4048, %v4048
        %v4055 = vmul.f32 %v4049, %v4049
        %v4056 = vmul.f32 %v4050, %v4050
        %v4057 = vmul.f32 %v4051, %v4051
        %v4058 = vmul.f32 %v4052, %v4052
        %v4059 = vadd.f32 %v4053, %v4054
        %v4060 = vadd.f32 %v4059, %v4055
        %4061 = vadd.xlane.f32.xlu0 %v4060
        %v4062 = vpop.xlane.xlu0 %4061
        %v4063 = vadd.f32 %v4056, %v4057
        %v4064 = vadd.f32 %v4063, %v4058
        %4065 = vadd.xlane.f32.xlu0 %v4064
        %v4066 = vpop.xlane.xlu0 %4065
        %v4067 = vmul.f32 %v4062, 0.0032051282
        %v4068 = vmul.f32 %v4066, 0.0032051282
        %v4069 = vadd.f32 %v4067, 1e-12
        %v4070 = vadd.f32 %v4068, 1e-12
        %v4071 = vrsqrt.pop %v4069
        %v4072 = vmul.f32 %v4071, %v4069
        %v4073 = vmul.f32 %v4072, %v4071
        %v4074 = vmul.f32 0.5, %v4073
        %v4075 = vsub.f32 1.5, %v4074
        %v4076 = vmul.f32 %v4071, %v4075
        %vm4077 = vweird.f32 %v4069
        %vm4078 = vweird.f32 %v4071
        %vm4079 = vmor %vm4077, %vm4078
        %v4080 = vsel %vm4079, %v4071, %v4076
        %v4081 = vrsqrt.pop %v4070
        %v4082 = vmul.f32 %v4081, %v4070
        %v4083 = vmul.f32 %v4082, %v4081
        %v4084 = vmul.f32 0.5, %v4083
        %v4085 = vsub.f32 1.5, %v4084
        %v4086 = vmul.f32 %v4081, %v4085
        %vm4087 = vweird.f32 %v4070
        %vm4088 = vweird.f32 %v4081
        %vm4089 = vmor %vm4087, %vm4088
        %v4090 = vsel %vm4089, %v4081, %v4086
        %v4091 = vmul.f32 %v4047, %v4080
        %v4092 = vmul.f32 %v4048, %v4080
        %v4093 = vmul.f32 %v4049, %v4080
        %v4094 = vmul.f32 %v4050, %v4090
        %v4095 = vmul.f32 %v4051, %v4090
        %v4096 = vmul.f32 %v4052, %v4090
        %v4098 = vperm.slane %v4028, 0
        %v4099 = vperm.slane %v4028, 1
        %v4100 = vperm.slane %v4028, 2
        %v4104 = vmul.f32 %v4091, %v4098
        %v4105 = vmul.f32 %v4092, %v4099
        %v4106 = vmul.f32 %v4093, %v4100
        %v4107 = vmul.f32 %v4094, %v4098
        %v4108 = vmul.f32 %v4095, %v4099
        %v4109 = vmul.f32 %v4096, %v4100
        %v4111 = vperm.slane %v4030, 0
        %v4112 = vperm.slane %v4030, 1
        %v4113 = vperm.slane %v4030, 2
        %v4117 = vadd.f32 %v4104, %v4111
        %v4118 = vadd.f32 %v4105, %v4112
        %v4119 = vadd.f32 %v4106, %v4113
        %v4120 = vadd.f32 %v4107, %v4111
        %v4121 = vadd.f32 %v4108, %v4112
        %v4122 = vadd.f32 %v4109, %v4113
        %v4123 = vpack.c.bf16 %v4120, %v4117
        %v4124 = vpack.c.bf16 %v4121, %v4118
        %v4125 = vpack.c.bf16 %v4122, %v4119
        %v4126 = vld [vmem:[%s337 + $0x30] sm:$0xff]
        %v4127 = vld [vmem:[%s337 + $0x38] sm:$0xff]
        %v4128 = vld [vmem:[%s337 + $0x40] sm:$0xf]
        %v4129 = vld [vmem:[%s337 + $0x74] sm:$0xff]
        %v4130 = vld [vmem:[%s337 + $0x7c] sm:$0xff]
        %v4131 = vld [vmem:[%s337 + $0x84] sm:$0xf]
        %v4132 = vld [vmem:[%s337 + $0xb8] sm:$0xff]
        %v4133 = vld [vmem:[%s337 + $0xc0] sm:$0xff]
        %v4134 = vld [vmem:[%s337 + $0xc8] sm:$0xf]
        %v4135 = vld [vmem:[%s337 + $0xfc] sm:$0xff]
        %v4136 = vld [vmem:[%s337 + $0x104] sm:$0xff]
        %v4137 = vld [vmem:[%s337 + $0x10c] sm:$0xf]
        %v4138 = vld [vmem:[%s337 + $0x140] sm:$0xff]
        %v4139 = vld [vmem:[%s337 + $0x148] sm:$0xff]
        %v4140 = vld [vmem:[%s337 + $0x150] sm:$0xf]
        %v4141 = vld [vmem:[%s337 + $0x184] sm:$0xff]
        %v4142 = vld [vmem:[%s337 + $0x18c] sm:$0xff]
        %v4143 = vld [vmem:[%s337 + $0x194] sm:$0xf]
        %v4144 = vld [vmem:[%s337 + $0x1c8] sm:$0xff]
        %v4145 = vld [vmem:[%s337 + $0x1d0] sm:$0xff]
        %v4146 = vld [vmem:[%s337 + $0x1d8] sm:$0xf]
        %v4147 = vld [vmem:[%s337 + $0x20c] sm:$0xff]
        %v4148 = vld [vmem:[%s337 + $0x214] sm:$0xff]
        %v4149 = vld [vmem:[%s337 + $0x21c] sm:$0xf]
        %v4150 = vld [vmem:[%s337 + $0x250] sm:$0xff]
        %v4151 = vld [vmem:[%s337 + $0x258] sm:$0xff]
        %v4152 = vld [vmem:[%s337 + $0x260] sm:$0xf]
        %v4153 = vld [vmem:[%s337 + $0x294] sm:$0xff]
        %v4154 = vld [vmem:[%s337 + $0x29c] sm:$0xff]
        %v4155 = vld [vmem:[%s337 + $0x2a4] sm:$0xf]
        %v4156 = vld [vmem:[%s337 + $0x2d8] sm:$0xff]
        %v4157 = vld [vmem:[%s337 + $0x2e0] sm:$0xff]
        %v4158 = vld [vmem:[%s337 + $0x2e8] sm:$0xf]
        %v4159 = vld [vmem:[%s337 + $0x31c] sm:$0xff]
        %v4160 = vld [vmem:[%s337 + $0x324] sm:$0xff]
        %v4161 = vld [vmem:[%s337 + $0x32c] sm:$0xf]
        %v4162 = vld [vmem:[%s337 + $0x360] sm:$0xff]
        %v4163 = vld [vmem:[%s337 + $0x368] sm:$0xff]
        %v4164 = vld [vmem:[%s337 + $0x370] sm:$0xf]
        %v4165 = vld [vmem:[%s337 + $0x3a4] sm:$0xff]
        %v4166 = vld [vmem:[%s337 + $0x3ac] sm:$0xff]
        %v4167 = vld [vmem:[%s337 + $0x3b4] sm:$0xf]
        %v4168 = vld [vmem:[%s337 + $0x3e8] sm:$0xff]
        %v4169 = vld [vmem:[%s337 + $0x3f0] sm:$0xff]
        %v4170 = vld [vmem:[%s337 + $0x3f8] sm:$0xf]
        %v4171 = vld [vmem:[%s337 + $0x42c] sm:$0xff]
        %v4172 = vld [vmem:[%s337 + $0x434] sm:$0xff]
        %v4173 = vld [vmem:[%s337 + $0x43c] sm:$0xf]
        %v4174 = vld [vmem:[%s337 + $0x470] sm:$0xff]
        %v4175 = vld [vmem:[%s337 + $0x478] sm:$0xff]
        %v4176 = vld [vmem:[%s337 + $0x480] sm:$0xf]
        %v4177 = vld [vmem:[%s337 + $0x4b4] sm:$0xff]
        %v4178 = vld [vmem:[%s337 + $0x4bc] sm:$0xff]
        %v4179 = vld [vmem:[%s337 + $0x4c4] sm:$0xf]
        %v4180 = vld [vmem:[%s337 + $0x4f8] sm:$0xff]
        %v4181 = vld [vmem:[%s337 + $0x500] sm:$0xff]
        %v4182 = vld [vmem:[%s337 + $0x508] sm:$0xf]
        %v4183 = vld [vmem:[%s337 + $0x53c] sm:$0xff]
        %v4184 = vld [vmem:[%s337 + $0x544] sm:$0xff]
        %v4185 = vld [vmem:[%s337 + $0x54c] sm:$0xf]
        %v4186 = vld [vmem:[%s337 + $0x580] sm:$0xff]
        %v4187 = vld [vmem:[%s337 + $0x588] sm:$0xff]
        %v4188 = vld [vmem:[%s337 + $0x590] sm:$0xf]
        %v4189 = vld [vmem:[%s337 + $0x5c4] sm:$0xff]
        %v4190 = vld [vmem:[%s337 + $0x5cc] sm:$0xff]
        %v4191 = vld [vmem:[%s337 + $0x5d4] sm:$0xf]
        %v4192 = vld [vmem:[%s337 + $0x608] sm:$0xff]
        %v4193 = vld [vmem:[%s337 + $0x610] sm:$0xff]
        %v4194 = vld [vmem:[%s337 + $0x618] sm:$0xf]
        %v4195 = vld [vmem:[%s337 + $0x64c] sm:$0xff]
        %v4196 = vld [vmem:[%s337 + $0x654] sm:$0xff]
        %v4197 = vld [vmem:[%s337 + $0x65c] sm:$0xf]
        %v4198 = vld [vmem:[%s337 + $0x690] sm:$0xff]
        %v4199 = vld [vmem:[%s337 + $0x698] sm:$0xff]
        %v4200 = vld [vmem:[%s337 + $0x6a0] sm:$0xf]
        %v4201 = vld [vmem:[%s337 + $0x6d4] sm:$0xff]
        %v4202 = vld [vmem:[%s337 + $0x6dc] sm:$0xff]
        %v4203 = vld [vmem:[%s337 + $0x6e4] sm:$0xf]
        %v4204 = vld [vmem:[%s337 + $0x718] sm:$0xff]
        %v4205 = vld [vmem:[%s337 + $0x720] sm:$0xff]
        %v4206 = vld [vmem:[%s337 + $0x728] sm:$0xf]
        %v4207 = vld [vmem:[%s337 + $0x75c] sm:$0xff]
        %v4208 = vld [vmem:[%s337 + $0x764] sm:$0xff]
        %v4209 = vld [vmem:[%s337 + $0x76c] sm:$0xf]
        %v4210 = vld [vmem:[%s337 + $0x7a0] sm:$0xff]
        %v4211 = vld [vmem:[%s337 + $0x7a8] sm:$0xff]
        %v4212 = vld [vmem:[%s337 + $0x7b0] sm:$0xf]
        %v4213 = vld [vmem:[%s337 + $0x7e4] sm:$0xff]
        %v4214 = vld [vmem:[%s337 + $0x7ec] sm:$0xff]
        %v4215 = vld [vmem:[%s337 + $0x7f4] sm:$0xf]
        %v4216 = vld [vmem:[%s337 + $0x828] sm:$0xff]
        %v4217 = vld [vmem:[%s337 + $0x830] sm:$0xff]
        %v4218 = vld [vmem:[%s337 + $0x838] sm:$0xf]
        %v4219 = vld [vmem:[%s337 + $0x86c] sm:$0xff]
        %v4220 = vld [vmem:[%s337 + $0x874] sm:$0xff]
        %v4221 = vld [vmem:[%s337 + $0x87c] sm:$0xf]
        %v4222 = vld [vmem:[%s337 + $0x8b0] sm:$0xff]
        %v4223 = vld [vmem:[%s337 + $0x8b8] sm:$0xff]
        %v4224 = vld [vmem:[%s337 + $0x8c0] sm:$0xf]
        %v4225 = vld [vmem:[%s337 + $0x8f4] sm:$0xff]
        %v4226 = vld [vmem:[%s337 + $0x8fc] sm:$0xff]
        %v4227 = vld [vmem:[%s337 + $0x904] sm:$0xf]
        %v4228 = vld [vmem:[%s337 + $0x938] sm:$0xff]
        %v4229 = vld [vmem:[%s337 + $0x940] sm:$0xff]
        %v4230 = vld [vmem:[%s337 + $0x948] sm:$0xf]
        %v4231 = vld [vmem:[%s337 + $0x97c] sm:$0xff]
        %v4232 = vld [vmem:[%s337 + $0x984] sm:$0xff]
        %v4233 = vld [vmem:[%s337 + $0x98c] sm:$0xf]
        %v4234 = vld [vmem:[%s337 + $0x9c0] sm:$0xff]
        %v4235 = vld [vmem:[%s337 + $0x9c8] sm:$0xff]
        %v4236 = vld [vmem:[%s337 + $0x9d0] sm:$0xf]
        %v4237 = vld [vmem:[%s337 + $0xa04] sm:$0xff]
        %v4238 = vld [vmem:[%s337 + $0xa0c] sm:$0xff]
        %v4239 = vld [vmem:[%s337 + $0xa14] sm:$0xf]
        %v4240 = vld [vmem:[%s337 + $0xa48] sm:$0xff]
        %v4241 = vld [vmem:[%s337 + $0xa50] sm:$0xff]
        %v4242 = vld [vmem:[%s337 + $0xa58] sm:$0xf]
        %v4243 = vld [vmem:[%s337 + $0xa8c] sm:$0xff]
        %v4244 = vld [vmem:[%s337 + $0xa94] sm:$0xff]
        %v4245 = vld [vmem:[%s337 + $0xa9c] sm:$0xf]
        %v4246 = vld [vmem:[%s337 + $0xad0] sm:$0xff]
        %v4247 = vld [vmem:[%s337 + $0xad8] sm:$0xff]
        %v4248 = vld [vmem:[%s337 + $0xae0] sm:$0xf]
        %v4249 = vld [vmem:[%s337 + $0xb14] sm:$0xff]
        %v4250 = vld [vmem:[%s337 + $0xb1c] sm:$0xff]
        %v4251 = vld [vmem:[%s337 + $0xb24] sm:$0xf]
        %v4252 = vld [vmem:[%s337 + $0xb58] sm:$0xff]
        %v4253 = vld [vmem:[%s337 + $0xb60] sm:$0xff]
        %v4254 = vld [vmem:[%s337 + $0xb68] sm:$0xf]
        %v4255 = vld [vmem:[%s337 + $0xb9c] sm:$0xff]
        %v4256 = vld [vmem:[%s337 + $0xba4] sm:$0xff]
        %v4257 = vld [vmem:[%s337 + $0xbac] sm:$0xf]
        %v4258 = vld [vmem:[%s337 + $0xbe0] sm:$0xff]
        %v4259 = vld [vmem:[%s337 + $0xbe8] sm:$0xff]
        %v4260 = vld [vmem:[%s337 + $0xbf0] sm:$0xf]
        %v4261 = vld [vmem:[%s337 + $0xc24] sm:$0xff]
        %v4262 = vld [vmem:[%s337 + $0xc2c] sm:$0xff]
        %v4263 = vld [vmem:[%s337 + $0xc34] sm:$0xf]
        %v4264 = vld [vmem:[%s337 + $0xc68] sm:$0xff]
        %v4265 = vld [vmem:[%s337 + $0xc70] sm:$0xff]
        %v4266 = vld [vmem:[%s337 + $0xc78] sm:$0xf]
        %v4267 = vld [vmem:[%s337 + $0xcac] sm:$0xff]
        %v4268 = vld [vmem:[%s337 + $0xcb4] sm:$0xff]
        %v4269 = vld [vmem:[%s337 + $0xcbc] sm:$0xf]
        %s4270 = scalar_lea.vmem %s357, 4 [#allocation10]
        %v4271 = vld [vmem:[%s4270] ss:$8 sm:$0xf]
        %v4272 = vld [vmem:[%s4270] ss:$8 sm:$0x10]
        %v4273 = vor.u32 %v4271, %v4272
        %v4275 = vperm.slane %v4273, 0
        %v4276 = vperm.slane %v4273, 1
        %v4277 = vperm.slane %v4273, 2
        %v4278 = vperm.slane %v4273, 3
        %v4279 = vperm.slane %v4273, 4
        %v4429 = vunpack.c.l.b16 %v4126
        %v4430 = vunpack.c.h.b16 %v4126
        %v4431 = vunpack.c.l.b16 %v4127
        %v4432 = vunpack.c.h.b16 %v4127
        %v4433 = vunpack.c.l.b16 %v4128
        %v4434 = vunpack.c.l.b16 %v4129
        %v4435 = vunpack.c.h.b16 %v4129
        %v4436 = vunpack.c.l.b16 %v4130
        %v4437 = vunpack.c.h.b16 %v4130
        %v4438 = vunpack.c.l.b16 %v4131
        %v4439 = vunpack.c.l.b16 %v4132
        %v4440 = vunpack.c.h.b16 %v4132
        %v4441 = vunpack.c.l.b16 %v4133
        %v4442 = vunpack.c.h.b16 %v4133
        %v4443 = vunpack.c.l.b16 %v4134
        %v4444 = vunpack.c.l.b16 %v4135
        %v4445 = vunpack.c.h.b16 %v4135
        %v4446 = vunpack.c.l.b16 %v4136
        %v4447 = vunpack.c.h.b16 %v4136
        %v4448 = vunpack.c.l.b16 %v4137
        %v4449 = vunpack.c.l.b16 %v4138
        %v4450 = vunpack.c.h.b16 %v4138
        %v4451 = vunpack.c.l.b16 %v4139
        %v4452 = vunpack.c.h.b16 %v4139
        %v4453 = vunpack.c.l.b16 %v4140
        %v4454 = vunpack.c.l.b16 %v4141
        %v4455 = vunpack.c.h.b16 %v4141
        %v4456 = vunpack.c.l.b16 %v4142
        %v4457 = vunpack.c.h.b16 %v4142
        %v4458 = vunpack.c.l.b16 %v4143
        %v4459 = vunpack.c.l.b16 %v4144
        %v4460 = vunpack.c.h.b16 %v4144
        %v4461 = vunpack.c.l.b16 %v4145
        %v4462 = vunpack.c.h.b16 %v4145
        %v4463 = vunpack.c.l.b16 %v4146
        %v4464 = vunpack.c.l.b16 %v4147
        %v4465 = vunpack.c.h.b16 %v4147
        %v4466 = vunpack.c.l.b16 %v4148
        %v4467 = vunpack.c.h.b16 %v4148
        %v4468 = vunpack.c.l.b16 %v4149
        %v4469 = vunpack.c.l.b16 %v4150
        %v4470 = vunpack.c.h.b16 %v4150
        %v4471 = vunpack.c.l.b16 %v4151
        %v4472 = vunpack.c.h.b16 %v4151
        %v4473 = vunpack.c.l.b16 %v4152
        %v4474 = vunpack.c.l.b16 %v4153
        %v4475 = vunpack.c.h.b16 %v4153
        %v4476 = vunpack.c.l.b16 %v4154
        %v4477 = vunpack.c.h.b16 %v4154
        %v4478 = vunpack.c.l.b16 %v4155
        %v4479 = vunpack.c.l.b16 %v4156
        %v4480 = vunpack.c.h.b16 %v4156
        %v4481 = vunpack.c.l.b16 %v4157
        %v4482 = vunpack.c.h.b16 %v4157
        %v4483 = vunpack.c.l.b16 %v4158
        %v4484 = vunpack.c.l.b16 %v4159
        %v4485 = vunpack.c.h.b16 %v4159
        %v4486 = vunpack.c.l.b16 %v4160
        %v4487 = vunpack.c.h.b16 %v4160
        %v4488 = vunpack.c.l.b16 %v4161
        %v4489 = vunpack.c.l.b16 %v4162
        %v4490 = vunpack.c.h.b16 %v4162
        %v4491 = vunpack.c.l.b16 %v4163
        %v4492 = vunpack.c.h.b16 %v4163
        %v4493 = vunpack.c.l.b16 %v4164
        %v4494 = vunpack.c.l.b16 %v4165
        %v4495 = vunpack.c.h.b16 %v4165
        %v4496 = vunpack.c.l.b16 %v4166
        %v4497 = vunpack.c.h.b16 %v4166
        %v4498 = vunpack.c.l.b16 %v4167
        %v4499 = vunpack.c.l.b16 %v4168
        %v4500 = vunpack.c.h.b16 %v4168
        %v4501 = vunpack.c.l.b16 %v4169
        %v4502 = vunpack.c.h.b16 %v4169
        %v4503 = vunpack.c.l.b16 %v4170
        %v4504 = vunpack.c.l.b16 %v4171
        %v4505 = vunpack.c.h.b16 %v4171
        %v4506 = vunpack.c.l.b16 %v4172
        %v4507 = vunpack.c.h.b16 %v4172
        %v4508 = vunpack.c.l.b16 %v4173
        %v4509 = vunpack.c.l.b16 %v4174
        %v4510 = vunpack.c.h.b16 %v4174
        %v4511 = vunpack.c.l.b16 %v4175
        %v4512 = vunpack.c.h.b16 %v4175
        %v4513 = vunpack.c.l.b16 %v4176
        %v4514 = vunpack.c.l.b16 %v4177
        %v4515 = vunpack.c.h.b16 %v4177
        %v4516 = vunpack.c.l.b16 %v4178
        %v4517 = vunpack.c.h.b16 %v4178
        %v4518 = vunpack.c.l.b16 %v4179
        %v4519 = vunpack.c.l.b16 %v4180
        %v4520 = vunpack.c.h.b16 %v4180
        %v4521 = vunpack.c.l.b16 %v4181
        %v4522 = vunpack.c.h.b16 %v4181
        %v4523 = vunpack.c.l.b16 %v4182
        %v4524 = vunpack.c.l.b16 %v4183
        %v4525 = vunpack.c.h.b16 %v4183
        %v4526 = vunpack.c.l.b16 %v4184
        %v4527 = vunpack.c.h.b16 %v4184
        %v4528 = vunpack.c.l.b16 %v4185
        %v4529 = vunpack.c.l.b16 %v4186
        %v4530 = vunpack.c.h.b16 %v4186
        %v4531 = vunpack.c.l.b16 %v4187
        %v4532 = vunpack.c.h.b16 %v4187
        %v4533 = vunpack.c.l.b16 %v4188
        %v4534 = vunpack.c.l.b16 %v4189
        %v4535 = vunpack.c.h.b16 %v4189
        %v4536 = vunpack.c.l.b16 %v4190
        %v4537 = vunpack.c.h.b16 %v4190
        %v4538 = vunpack.c.l.b16 %v4191
        %v4539 = vunpack.c.l.b16 %v4192
        %v4540 = vunpack.c.h.b16 %v4192
        %v4541 = vunpack.c.l.b16 %v4193
        %v4542 = vunpack.c.h.b16 %v4193
        %v4543 = vunpack.c.l.b16 %v4194
        %v4544 = vunpack.c.l.b16 %v4195
        %v4545 = vunpack.c.h.b16 %v4195
        %v4546 = vunpack.c.l.b16 %v4196
        %v4547 = vunpack.c.h.b16 %v4196
        %v4548 = vunpack.c.l.b16 %v4197
        %v4549 = vunpack.c.l.b16 %v4198
        %v4550 = vunpack.c.h.b16 %v4198
        %v4551 = vunpack.c.l.b16 %v4199
        %v4552 = vunpack.c.h.b16 %v4199
        %v4553 = vunpack.c.l.b16 %v4200
        %v4554 = vunpack.c.l.b16 %v4201
        %v4555 = vunpack.c.h.b16 %v4201
        %v4556 = vunpack.c.l.b16 %v4202
        %v4557 = vunpack.c.h.b16 %v4202
        %v4558 = vunpack.c.l.b16 %v4203
        %v4559 = vunpack.c.l.b16 %v4204
        %v4560 = vunpack.c.h.b16 %v4204
        %v4561 = vunpack.c.l.b16 %v4205
        %v4562 = vunpack.c.h.b16 %v4205
        %v4563 = vunpack.c.l.b16 %v4206
        %v4564 = vunpack.c.l.b16 %v4207
        %v4565 = vunpack.c.h.b16 %v4207
        %v4566 = vunpack.c.l.b16 %v4208
        %v4567 = vunpack.c.h.b16 %v4208
        %v4568 = vunpack.c.l.b16 %v4209
        %v4569 = vunpack.c.l.b16 %v4210
        %v4570 = vunpack.c.h.b16 %v4210
        %v4571 = vunpack.c.l.b16 %v4211
        %v4572 = vunpack.c.h.b16 %v4211
        %v4573 = vunpack.c.l.b16 %v4212
        %v4574 = vunpack.c.l.b16 %v4213
        %v4575 = vunpack.c.h.b16 %v4213
        %v4576 = vunpack.c.l.b16 %v4214
        %v4577 = vunpack.c.h.b16 %v4214
        %v4578 = vunpack.c.l.b16 %v4215
        %v4579 = vunpack.c.l.b16 %v4216
        %v4580 = vunpack.c.h.b16 %v4216
        %v4581 = vunpack.c.l.b16 %v4217
        %v4582 = vunpack.c.h.b16 %v4217
        %v4583 = vunpack.c.l.b16 %v4218
        %v4584 = vunpack.c.l.b16 %v4219
        %v4585 = vunpack.c.h.b16 %v4219
        %v4586 = vunpack.c.l.b16 %v4220
        %v4587 = vunpack.c.h.b16 %v4220
        %v4588 = vunpack.c.l.b16 %v4221
        %v4589 = vunpack.c.l.b16 %v4222
        %v4590 = vunpack.c.h.b16 %v4222
        %v4591 = vunpack.c.l.b16 %v4223
        %v4592 = vunpack.c.h.b16 %v4223
        %v4593 = vunpack.c.l.b16 %v4224
        %v4594 = vunpack.c.l.b16 %v4225
        %v4595 = vunpack.c.h.b16 %v4225
        %v4596 = vunpack.c.l.b16 %v4226
        %v4597 = vunpack.c.h.b16 %v4226
        %v4598 = vunpack.c.l.b16 %v4227
        %v4599 = vunpack.c.l.b16 %v4228
        %v4600 = vunpack.c.h.b16 %v4228
        %v4601 = vunpack.c.l.b16 %v4229
        %v4602 = vunpack.c.h.b16 %v4229
        %v4603 = vunpack.c.l.b16 %v4230
        %v4604 = vunpack.c.l.b16 %v4231
        %v4605 = vunpack.c.h.b16 %v4231
        %v4606 = vunpack.c.l.b16 %v4232
        %v4607 = vunpack.c.h.b16 %v4232
        %v4608 = vunpack.c.l.b16 %v4233
        %v4609 = vunpack.c.l.b16 %v4234
        %v4610 = vunpack.c.h.b16 %v4234
        %v4611 = vunpack.c.l.b16 %v4235
        %v4612 = vunpack.c.h.b16 %v4235
        %v4613 = vunpack.c.l.b16 %v4236
        %v4614 = vunpack.c.l.b16 %v4237
        %v4615 = vunpack.c.h.b16 %v4237
        %v4616 = vunpack.c.l.b16 %v4238
        %v4617 = vunpack.c.h.b16 %v4238
        %v4618 = vunpack.c.l.b16 %v4239
        %v4619 = vunpack.c.l.b16 %v4240
        %v4620 = vunpack.c.h.b16 %v4240
        %v4621 = vunpack.c.l.b16 %v4241
        %v4622 = vunpack.c.h.b16 %v4241
        %v4623 = vunpack.c.l.b16 %v4242
        %v4624 = vunpack.c.l.b16 %v4243
        %v4625 = vunpack.c.h.b16 %v4243
        %v4626 = vunpack.c.l.b16 %v4244
        %v4627 = vunpack.c.h.b16 %v4244
        %v4628 = vunpack.c.l.b16 %v4245
        %v4629 = vunpack.c.l.b16 %v4246
        %v4630 = vunpack.c.h.b16 %v4246
        %v4631 = vunpack.c.l.b16 %v4247
        %v4632 = vunpack.c.h.b16 %v4247
        %v4633 = vunpack.c.l.b16 %v4248
        %v4634 = vunpack.c.l.b16 %v4249
        %v4635 = vunpack.c.h.b16 %v4249
        %v4636 = vunpack.c.l.b16 %v4250
        %v4637 = vunpack.c.h.b16 %v4250
        %v4638 = vunpack.c.l.b16 %v4251
        %v4639 = vunpack.c.l.b16 %v4252
        %v4640 = vunpack.c.h.b16 %v4252
        %v4641 = vunpack.c.l.b16 %v4253
        %v4642 = vunpack.c.h.b16 %v4253
        %v4643 = vunpack.c.l.b16 %v4254
        %v4644 = vunpack.c.l.b16 %v4255
        %v4645 = vunpack.c.h.b16 %v4255
        %v4646 = vunpack.c.l.b16 %v4256
        %v4647 = vunpack.c.h.b16 %v4256
        %v4648 = vunpack.c.l.b16 %v4257
        %v4649 = vunpack.c.l.b16 %v4258
        %v4650 = vunpack.c.h.b16 %v4258
        %v4651 = vunpack.c.l.b16 %v4259
        %v4652 = vunpack.c.h.b16 %v4259
        %v4653 = vunpack.c.l.b16 %v4260
        %v4654 = vunpack.c.l.b16 %v4261
        %v4655 = vunpack.c.h.b16 %v4261
        %v4656 = vunpack.c.l.b16 %v4262
        %v4657 = vunpack.c.h.b16 %v4262
        %v4658 = vunpack.c.l.b16 %v4263
        %v4659 = vunpack.c.l.b16 %v4264
        %v4660 = vunpack.c.h.b16 %v4264
        %v4661 = vunpack.c.l.b16 %v4265
        %v4662 = vunpack.c.h.b16 %v4265
        %v4663 = vunpack.c.l.b16 %v4266
        %v4664 = vunpack.c.l.b16 %v4267
        %v4665 = vunpack.c.h.b16 %v4267
        %v4666 = vunpack.c.l.b16 %v4268
        %v4667 = vunpack.c.h.b16 %v4268
        %v4668 = vunpack.c.l.b16 %v4269
        %v4669 = vpack.c.b16 %v4434, %v4429
        %v4670 = vpack.c.b16 %v4435, %v4430
        %v4671 = vpack.c.b16 %v4436, %v4431
        %v4672 = vpack.c.b16 %v4437, %v4432
        %v4673 = vpack.c.b16 %v4438, %v4433
        %v4674 = vpack.c.b16 %v4444, %v4439
        %v4675 = vpack.c.b16 %v4445, %v4440
        %v4676 = vpack.c.b16 %v4446, %v4441
        %v4677 = vpack.c.b16 %v4447, %v4442
        %v4678 = vpack.c.b16 %v4448, %v4443
        %v4679 = vpack.c.b16 %v4454, %v4449
        %v4680 = vpack.c.b16 %v4455, %v4450
        %v4681 = vpack.c.b16 %v4456, %v4451
        %v4682 = vpack.c.b16 %v4457, %v4452
        %v4683 = vpack.c.b16 %v4458, %v4453
        %v4684 = vpack.c.b16 %v4464, %v4459
        %v4685 = vpack.c.b16 %v4465, %v4460
        %v4686 = vpack.c.b16 %v4466, %v4461
        %v4687 = vpack.c.b16 %v4467, %v4462
        %v4688 = vpack.c.b16 %v4468, %v4463
        %v4689 = vpack.c.b16 %v4474, %v4469
        %v4690 = vpack.c.b16 %v4475, %v4470
        %v4691 = vpack.c.b16 %v4476, %v4471
        %v4692 = vpack.c.b16 %v4477, %v4472
        %v4693 = vpack.c.b16 %v4478, %v4473
        %v4694 = vpack.c.b16 %v4484, %v4479
        %v4695 = vpack.c.b16 %v4485, %v4480
        %v4696 = vpack.c.b16 %v4486, %v4481
        %v4697 = vpack.c.b16 %v4487, %v4482
        %v4698 = vpack.c.b16 %v4488, %v4483
        %v4699 = vpack.c.b16 %v4494, %v4489
        %v4700 = vpack.c.b16 %v4495, %v4490
        %v4701 = vpack.c.b16 %v4496, %v4491
        %v4702 = vpack.c.b16 %v4497, %v4492
        %v4703 = vpack.c.b16 %v4498, %v4493
        %v4704 = vpack.c.b16 %v4504, %v4499
        %v4705 = vpack.c.b16 %v4505, %v4500
        %v4706 = vpack.c.b16 %v4506, %v4501
        %v4707 = vpack.c.b16 %v4507, %v4502
        %v4708 = vpack.c.b16 %v4508, %v4503
        %v4709 = vpack.c.b16 %v4514, %v4509
        %v4710 = vpack.c.b16 %v4515, %v4510
        %v4711 = vpack.c.b16 %v4516, %v4511
        %v4712 = vpack.c.b16 %v4517, %v4512
        %v4713 = vpack.c.b16 %v4518, %v4513
        %v4714 = vpack.c.b16 %v4524, %v4519
        %v4715 = vpack.c.b16 %v4525, %v4520
        %v4716 = vpack.c.b16 %v4526, %v4521
        %v4717 = vpack.c.b16 %v4527, %v4522
        %v4718 = vpack.c.b16 %v4528, %v4523
        %v4719 = vpack.c.b16 %v4534, %v4529
        %v4720 = vpack.c.b16 %v4535, %v4530
        %v4721 = vpack.c.b16 %v4536, %v4531
        %v4722 = vpack.c.b16 %v4537, %v4532
        %v4723 = vpack.c.b16 %v4538, %v4533
        %v4724 = vpack.c.b16 %v4544, %v4539
        %v4725 = vpack.c.b16 %v4545, %v4540
        %v4726 = vpack.c.b16 %v4546, %v4541
        %v4727 = vpack.c.b16 %v4547, %v4542
        %v4728 = vpack.c.b16 %v4548, %v4543
        %v4729 = vpack.c.b16 %v4554, %v4549
        %v4730 = vpack.c.b16 %v4555, %v4550
        %v4731 = vpack.c.b16 %v4556, %v4551
        %v4732 = vpack.c.b16 %v4557, %v4552
        %v4733 = vpack.c.b16 %v4558, %v4553
        %v4734 = vpack.c.b16 %v4564, %v4559
        %v4735 = vpack.c.b16 %v4565, %v4560
        %v4736 = vpack.c.b16 %v4566, %v4561
        %v4737 = vpack.c.b16 %v4567, %v4562
        %v4738 = vpack.c.b16 %v4568, %v4563
        %v4739 = vpack.c.b16 %v4574, %v4569
        %v4740 = vpack.c.b16 %v4575, %v4570
        %v4741 = vpack.c.b16 %v4576, %v4571
        %v4742 = vpack.c.b16 %v4577, %v4572
        %v4743 = vpack.c.b16 %v4578, %v4573
        %v4744 = vpack.c.b16 %v4584, %v4579
        %v4745 = vpack.c.b16 %v4585, %v4580
        %v4746 = vpack.c.b16 %v4586, %v4581
        %v4747 = vpack.c.b16 %v4587, %v4582
        %v4748 = vpack.c.b16 %v4588, %v4583
        %v4749 = vpack.c.b16 %v4594, %v4589
        %v4750 = vpack.c.b16 %v4595, %v4590
        %v4751 = vpack.c.b16 %v4596, %v4591
        %v4752 = vpack.c.b16 %v4597, %v4592
        %v4753 = vpack.c.b16 %v4598, %v4593
        %v4754 = vpack.c.b16 %v4604, %v4599
        %v4755 = vpack.c.b16 %v4605, %v4600
        %v4756 = vpack.c.b16 %v4606, %v4601
        %v4757 = vpack.c.b16 %v4607, %v4602
        %v4758 = vpack.c.b16 %v4608, %v4603
        %v4759 = vpack.c.b16 %v4614, %v4609
        %v4760 = vpack.c.b16 %v4615, %v4610
        %v4761 = vpack.c.b16 %v4616, %v4611
        %v4762 = vpack.c.b16 %v4617, %v4612
        %v4763 = vpack.c.b16 %v4618, %v4613
        %v4764 = vpack.c.b16 %v4624, %v4619
        %v4765 = vpack.c.b16 %v4625, %v4620
        %v4766 = vpack.c.b16 %v4626, %v4621
        %v4767 = vpack.c.b16 %v4627, %v4622
        %v4768 = vpack.c.b16 %v4628, %v4623
        %v4769 = vpack.c.b16 %v4634, %v4629
        %v4770 = vpack.c.b16 %v4635, %v4630
        %v4771 = vpack.c.b16 %v4636, %v4631
        %v4772 = vpack.c.b16 %v4637, %v4632
        %v4773 = vpack.c.b16 %v4638, %v4633
        %v4774 = vpack.c.b16 %v4644, %v4639
        %v4775 = vpack.c.b16 %v4645, %v4640
        %v4776 = vpack.c.b16 %v4646, %v4641
        %v4777 = vpack.c.b16 %v4647, %v4642
        %v4778 = vpack.c.b16 %v4648, %v4643
        %v4779 = vpack.c.b16 %v4654, %v4649
        %v4780 = vpack.c.b16 %v4655, %v4650
        %v4781 = vpack.c.b16 %v4656, %v4651
        %v4782 = vpack.c.b16 %v4657, %v4652
        %v4783 = vpack.c.b16 %v4658, %v4653
        %v4784 = vpack.c.b16 %v4664, %v4659
        %v4785 = vpack.c.b16 %v4665, %v4660
        %v4786 = vpack.c.b16 %v4666, %v4661
        %v4787 = vpack.c.b16 %v4667, %v4662
        %v4788 = vpack.c.b16 %v4668, %v4663
        %4909 = vmatpush.bf16.msra.mxu0 %v4704
        %4910 = vmatpush.bf16.msra.mxu0 %v4699
        %4911 = vmatpush.bf16.msra.mxu0 %v4694
        %4912 = vmatpush.bf16.msra.mxu0 %v4689
        %4913 = vmatpush.bf16.msra.mxu0 %v4684
        %4914 = vmatpush.bf16.msra.mxu0 %v4679
        %4915 = vmatpush.bf16.msra.mxu0 %v4674
        %4916 = vmatpush.bf16.msra.mxu0 %v4669
        %4917 = vmatmul.bf16.gmra.mxu0 %v4123
        %v4918 = vpop.f32.mrf.mxu0
        %v4919 = vadd.f32 %v4275, %v4918
        %v4920 = vpop.f32.mrf.mxu0
        %v4921 = vadd.f32 %v4275, %v4920
        %4922 = vdwg.mxu0
        %4923 = vmatpush.bf16.msra.mxu0 %v4744
        %4924 = vmatpush.bf16.msra.mxu0 %v4739
        %4925 = vmatpush.bf16.msra.mxu0 %v4734
        %4926 = vmatpush.bf16.msra.mxu0 %v4729
        %4927 = vmatpush.bf16.msra.mxu0 %v4724
        %4928 = vmatpush.bf16.msra.mxu0 %v4719
        %4929 = vmatpush.bf16.msra.mxu0 %v4714
        %4930 = vmatpush.bf16.msra.mxu0 %v4709
        %4931 = vmatmul.bf16.gmra.mxu0 %v4124
        %v4932 = vpop.f32.mrf.mxu0
        %v4933 = vadd.f32 %v4919, %v4932
        %v4934 = vpop.f32.mrf.mxu0
        %v4935 = vadd.f32 %v4921, %v4934
        %4936 = vdwg.mxu0
        %4937 = vmatpush.bf16.msra.mxu0 %v4784
        %4938 = vmatpush.bf16.msra.mxu0 %v4779
        %4939 = vmatpush.bf16.msra.mxu0 %v4774
        %4940 = vmatpush.bf16.msra.mxu0 %v4769
        %4941 = vmatpush.bf16.msra.mxu0 %v4764
        %4942 = vmatpush.bf16.msra.mxu0 %v4759
        %4943 = vmatpush.bf16.msra.mxu0 %v4754
        %4944 = vmatpush.bf16.msra.mxu0 %v4749
        %4945 = vmatmul.bf16.gmra.mxu0 %v4125
        %v4946 = vpop.f32.mrf.mxu0
        %v4947 = vadd.f32 %v4933, %v4946
        %v4948 = vpop.f32.mrf.mxu0
        %v4949 = vadd.f32 %v4935, %v4948
        %4950 = vdwg.mxu0
        %4951 = vmatpush.bf16.msra.mxu0 %v4705
        %4952 = vmatpush.bf16.msra.mxu0 %v4700
        %4953 = vmatpush.bf16.msra.mxu0 %v4695
        %4954 = vmatpush.bf16.msra.mxu0 %v4690
        %4955 = vmatpush.bf16.msra.mxu0 %v4685
        %4956 = vmatpush.bf16.msra.mxu0 %v4680
        %4957 = vmatpush.bf16.msra.mxu0 %v4675
        %4958 = vmatpush.bf16.msra.mxu0 %v4670
        %4959 = vmatmul.bf16.gmra.mxu0 %v4123
        %v4960 = vpop.f32.mrf.mxu0
        %v4961 = vadd.f32 %v4276, %v4960
        %v4962 = vpop.f32.mrf.mxu0
        %v4963 = vadd.f32 %v4276, %v4962
        %4964 = vdwg.mxu0
        %4965 = vmatpush.bf16.msra.mxu0 %v4745
        %4966 = vmatpush.bf16.msra.mxu0 %v4740
        %4967 = vmatpush.bf16.msra.mxu0 %v4735
        %4968 = vmatpush.bf16.msra.mxu0 %v4730
        %4969 = vmatpush.bf16.msra.mxu0 %v4725
        %4970 = vmatpush.bf16.msra.mxu0 %v4720
        %4971 = vmatpush.bf16.msra.mxu0 %v4715
        %4972 = vmatpush.bf16.msra.mxu0 %v4710
        %4973 = vmatmul.bf16.gmra.mxu0 %v4124
        %v4974 = vpop.f32.mrf.mxu0
        %v4975 = vadd.f32 %v4961, %v4974
        %v4976 = vpop.f32.mrf.mxu0
        %v4977 = vadd.f32 %v4963, %v4976
        %4978 = vdwg.mxu0
        %4979 = vmatpush.bf16.msra.mxu0 %v4785
        %4980 = vmatpush.bf16.msra.mxu0 %v4780
        %4981 = vmatpush.bf16.msra.mxu0 %v4775
        %4982 = vmatpush.bf16.msra.mxu0 %v4770
        %4983 = vmatpush.bf16.msra.mxu0 %v4765
        %4984 = vmatpush.bf16.msra.mxu0 %v4760
        %4985 = vmatpush.bf16.msra.mxu0 %v4755
        %4986 = vmatpush.bf16.msra.mxu0 %v4750
        %4987 = vmatmul.bf16.gmra.mxu0 %v4125
        %v4988 = vpop.f32.mrf.mxu0
        %v4989 = vadd.f32 %v4975, %v4988
        %v4990 = vpop.f32.mrf.mxu0
        %v4991 = vadd.f32 %v4977, %v4990
        %4992 = vdwg.mxu0
        %4993 = vmatpush.bf16.msra.mxu0 %v4706
        %4994 = vmatpush.bf16.msra.mxu0 %v4701
        %4995 = vmatpush.bf16.msra.mxu0 %v4696
        %4996 = vmatpush.bf16.msra.mxu0 %v4691
        %4997 = vmatpush.bf16.msra.mxu0 %v4686
        %4998 = vmatpush.bf16.msra.mxu0 %v4681
        %4999 = vmatpush.bf16.msra.mxu0 %v4676
        %5000 = vmatpush.bf16.msra.mxu0 %v4671
        %5001 = vmatmul.bf16.gmra.mxu0 %v4123
        %v5002 = vpop.f32.mrf.mxu0
        %v5003 = vadd.f32 %v4277, %v5002
        %v5004 = vpop.f32.mrf.mxu0
        %v5005 = vadd.f32 %v4277, %v5004
        %5006 = vdwg.mxu0
        %5007 = vmatpush.bf16.msra.mxu0 %v4746
        %5008 = vmatpush.bf16.msra.mxu0 %v4741
        %5009 = vmatpush.bf16.msra.mxu0 %v4736
        %5010 = vmatpush.bf16.msra.mxu0 %v4731
        %5011 = vmatpush.bf16.msra.mxu0 %v4726
        %5012 = vmatpush.bf16.msra.mxu0 %v4721
        %5013 = vmatpush.bf16.msra.mxu0 %v4716
        %5014 = vmatpush.bf16.msra.mxu0 %v4711
        %5015 = vmatmul.bf16.gmra.mxu0 %v4124
        %v5016 = vpop.f32.mrf.mxu0
        %v5017 = vadd.f32 %v5003, %v5016
        %v5018 = vpop.f32.mrf.mxu0
        %v5019 = vadd.f32 %v5005, %v5018
        %5020 = vdwg.mxu0
        %5021 = vmatpush.bf16.msra.mxu0 %v4786
        %5022 = vmatpush.bf16.msra.mxu0 %v4781
        %5023 = vmatpush.bf16.msra.mxu0 %v4776
        %5024 = vmatpush.bf16.msra.mxu0 %v4771
        %5025 = vmatpush.bf16.msra.mxu0 %v4766
        %5026 = vmatpush.bf16.msra.mxu0 %v4761
        %5027 = vmatpush.bf16.msra.mxu0 %v4756
        %5028 = vmatpush.bf16.msra.mxu0 %v4751
        %5029 = vmatmul.bf16.gmra.mxu0 %v4125
        %v5030 = vpop.f32.mrf.mxu0
        %v5031 = vadd.f32 %v5017, %v5030
        %v5032 = vpop.f32.mrf.mxu0
        %v5033 = vadd.f32 %v5019, %v5032
        %5034 = vdwg.mxu0
        %5035 = vmatpush.bf16.msra.mxu0 %v4707
        %5036 = vmatpush.bf16.msra.mxu0 %v4702
        %5037 = vmatpush.bf16.msra.mxu0 %v4697
        %5038 = vmatpush.bf16.msra.mxu0 %v4692
        %5039 = vmatpush.bf16.msra.mxu0 %v4687
        %5040 = vmatpush.bf16.msra.mxu0 %v4682
        %5041 = vmatpush.bf16.msra.mxu0 %v4677
        %5042 = vmatpush.bf16.msra.mxu0 %v4672
        %5043 = vmatmul.bf16.gmra.mxu0 %v4123
        %v5044 = vpop.f32.mrf.mxu0
        %v5045 = vadd.f32 %v4278, %v5044
        %v5046 = vpop.f32.mrf.mxu0
        %v5047 = vadd.f32 %v4278, %v5046
        %5048 = vdwg.mxu0
        %5049 = vmatpush.bf16.msra.mxu0 %v4747
        %5050 = vmatpush.bf16.msra.mxu0 %v4742
        %5051 = vmatpush.bf16.msra.mxu0 %v4737
        %5052 = vmatpush.bf16.msra.mxu0 %v4732
        %5053 = vmatpush.bf16.msra.mxu0 %v4727
        %5054 = vmatpush.bf16.msra.mxu0 %v4722
        %5055 = vmatpush.bf16.msra.mxu0 %v4717
        %5056 = vmatpush.bf16.msra.mxu0 %v4712
        %5057 = vmatmul.bf16.gmra.mxu0 %v4124
        %v5058 = vpop.f32.mrf.mxu0
        %v5059 = vadd.f32 %v5045, %v5058
        %v5060 = vpop.f32.mrf.mxu0
        %v5061 = vadd.f32 %v5047, %v5060
        %5062 = vdwg.mxu0
        %5063 = vmatpush.bf16.msra.mxu0 %v4787
        %5064 = vmatpush.bf16.msra.mxu0 %v4782
        %5065 = vmatpush.bf16.msra.mxu0 %v4777
        %5066 = vmatpush.bf16.msra.mxu0 %v4772
        %5067 = vmatpush.bf16.msra.mxu0 %v4767
        %5068 = vmatpush.bf16.msra.mxu0 %v4762
        %5069 = vmatpush.bf16.msra.mxu0 %v4757
        %5070 = vmatpush.bf16.msra.mxu0 %v4752
        %5071 = vmatmul.bf16.gmra.mxu0 %v4125
        %v5072 = vpop.f32.mrf.mxu0
        %v5073 = vadd.f32 %v5059, %v5072
        %v5074 = vpop.f32.mrf.mxu0
        %v5075 = vadd.f32 %v5061, %v5074
        %5076 = vdwg.mxu0
        %5077 = vmatpush.bf16.msra.mxu0 %v4708
        %5078 = vmatpush.bf16.msra.mxu0 %v4703
        %5079 = vmatpush.bf16.msra.mxu0 %v4698
        %5080 = vmatpush.bf16.msra.mxu0 %v4693
        %5081 = vmatpush.bf16.msra.mxu0 %v4688
        %5082 = vmatpush.bf16.msra.mxu0 %v4683
        %5083 = vmatpush.bf16.msra.mxu0 %v4678
        %5084 = vmatpush.bf16.msra.mxu0 %v4673
        %5085 = vmatmul.bf16.gmra.mxu0 %v4123
        %v5086 = vpop.f32.mrf.mxu0
        %v5087 = vadd.f32 %v4279, %v5086
        %v5088 = vpop.f32.mrf.mxu0
        %v5089 = vadd.f32 %v4279, %v5088
        %5090 = vdwg.mxu0
        %5091 = vmatpush.bf16.msra.mxu0 %v4748
        %5092 = vmatpush.bf16.msra.mxu0 %v4743
        %5093 = vmatpush.bf16.msra.mxu0 %v4738
        %5094 = vmatpush.bf16.msra.mxu0 %v4733
        %5095 = vmatpush.bf16.msra.mxu0 %v4728
        %5096 = vmatpush.bf16.msra.mxu0 %v4723
        %5097 = vmatpush.bf16.msra.mxu0 %v4718
        %5098 = vmatpush.bf16.msra.mxu0 %v4713
        %5099 = vmatmul.bf16.gmra.mxu0 %v4124
        %v5100 = vpop.f32.mrf.mxu0
        %v5101 = vadd.f32 %v5087, %v5100
        %v5102 = vpop.f32.mrf.mxu0
        %v5103 = vadd.f32 %v5089, %v5102
        %5104 = vdwg.mxu0
        %5105 = vmatpush.bf16.msra.mxu0 %v4788
        %5106 = vmatpush.bf16.msra.mxu0 %v4783
        %5107 = vmatpush.bf16.msra.mxu0 %v4778
        %5108 = vmatpush.bf16.msra.mxu0 %v4773
        %5109 = vmatpush.bf16.msra.mxu0 %v4768
        %5110 = vmatpush.bf16.msra.mxu0 %v4763
        %5111 = vmatpush.bf16.msra.mxu0 %v4758
        %5112 = vmatpush.bf16.msra.mxu0 %v4753
        %5113 = vmatmul.bf16.gmra.mxu0 %v4125
        %v5114 = vpop.f32.mrf.mxu0
        %v5115 = vadd.f32 %v5101, %v5114
        %v5116 = vpop.f32.mrf.mxu0
        %v5117 = vadd.f32 %v5103, %v5116
        %5118 = vdwg.mxu0
        %v5119 = vmul.f32 %v4947, 0.5
        %v5120 = vmul.f32 %v4989, 0.5
        %v5121 = vmul.f32 %v5031, 0.5
        %v5122 = vmul.f32 %v5073, 0.5
        %v5123 = vmul.f32 %v5115, 0.5
        %v5124 = vmul.f32 %v4949, 0.5
        %v5125 = vmul.f32 %v4991, 0.5
        %v5126 = vmul.f32 %v5033, 0.5
        %v5127 = vmul.f32 %v5075, 0.5
        %v5128 = vmul.f32 %v5117, 0.5
        %v5129 = vmul.f32 %v4947, 0.044715
        %v5130 = vmul.f32 %v4989, 0.044715
        %v5131 = vmul.f32 %v5031, 0.044715
        %v5132 = vmul.f32 %v5073, 0.044715
        %v5133 = vmul.f32 %v5115, 0.044715
        %v5134 = vmul.f32 %v4949, 0.044715
        %v5135 = vmul.f32 %v4991, 0.044715
        %v5136 = vmul.f32 %v5033, 0.044715
        %v5137 = vmul.f32 %v5075, 0.044715
        %v5138 = vmul.f32 %v5117, 0.044715
        %v5139 = vmul.f32 %v5129, %v4947
        %v5140 = vmul.f32 %v5130, %v4989
        %v5141 = vmul.f32 %v5131, %v5031
        %v5142 = vmul.f32 %v5132, %v5073
        %v5143 = vmul.f32 %v5133, %v5115
        %v5144 = vmul.f32 %v5134, %v4949
        %v5145 = vmul.f32 %v5135, %v4991
        %v5146 = vmul.f32 %v5136, %v5033
        %v5147 = vmul.f32 %v5137, %v5075
        %v5148 = vmul.f32 %v5138, %v5117
        %v5149 = vmul.f32 %v5139, %v4947
        %v5150 = vmul.f32 %v5140, %v4989
        %v5151 = vmul.f32 %v5141, %v5031
        %v5152 = vmul.f32 %v5142, %v5073
        %v5153 = vmul.f32 %v5143, %v5115
        %v5154 = vmul.f32 %v5144, %v4949
        %v5155 = vmul.f32 %v5145, %v4991
        %v5156 = vmul.f32 %v5146, %v5033
        %v5157 = vmul.f32 %v5147, %v5075
        %v5158 = vmul.f32 %v5148, %v5117
        %v5159 = vadd.f32 %v4947, %v5149
        %v5160 = vadd.f32 %v4989, %v5150
        %v5161 = vadd.f32 %v5031, %v5151
        %v5162 = vadd.f32 %v5073, %v5152
        %v5163 = vadd.f32 %v5115, %v5153
        %v5164 = vadd.f32 %v4949, %v5154
        %v5165 = vadd.f32 %v4991, %v5155
        %v5166 = vadd.f32 %v5033, %v5156
        %v5167 = vadd.f32 %v5075, %v5157
        %v5168 = vadd.f32 %v5117, %v5158
        %v5169 = vmul.f32 %v5159, 0.7978846
        %v5170 = vmul.f32 %v5160, 0.7978846
        %v5171 = vmul.f32 %v5161, 0.7978846
        %v5172 = vmul.f32 %v5162, 0.7978846
        %v5173 = vmul.f32 %v5163, 0.7978846
        %v5174 = vmul.f32 %v5164, 0.7978846
        %v5175 = vmul.f32 %v5165, 0.7978846
        %v5176 = vmul.f32 %v5166, 0.7978846
        %v5177 = vmul.f32 %v5167, 0.7978846
        %v5178 = vmul.f32 %v5168, 0.7978846
        %v5179 = vtanh.pop %v5169
        %v5180 = vtanh.pop %v5170
        %v5181 = vtanh.pop %v5171
        %v5182 = vtanh.pop %v5172
        %v5183 = vtanh.pop %v5173
        %v5184 = vtanh.pop %v5174
        %v5185 = vtanh.pop %v5175
        %v5186 = vtanh.pop %v5176
        %v5187 = vtanh.pop %v5177
        %v5188 = vtanh.pop %v5178
        %v5189 = vadd.f32 %v5179, 1.0
        %v5190 = vadd.f32 %v5180, 1.0
        %v5191 = vadd.f32 %v5181, 1.0
        %v5192 = vadd.f32 %v5182, 1.0
        %v5193 = vadd.f32 %v5183, 1.0
        %v5194 = vadd.f32 %v5184, 1.0
        %v5195 = vadd.f32 %v5185, 1.0
        %v5196 = vadd.f32 %v5186, 1.0
        %v5197 = vadd.f32 %v5187, 1.0
        %v5198 = vadd.f32 %v5188, 1.0
        %v5199 = vmul.f32 %v5119, %v5189
        %v5200 = vmul.f32 %v5120, %v5190
        %v5201 = vmul.f32 %v5121, %v5191
        %v5202 = vmul.f32 %v5122, %v5192
        %v5203 = vmul.f32 %v5123, %v5193
        %v5204 = vmul.f32 %v5124, %v5194
        %v5205 = vmul.f32 %v5125, %v5195
        %v5206 = vmul.f32 %v5126, %v5196
        %v5207 = vmul.f32 %v5127, %v5197
        %v5208 = vmul.f32 %v5128, %v5198
        %v5209 = vpack.c.bf16 %v5204, %v5199
        %v5210 = vpack.c.bf16 %v5205, %v5200
        %v5211 = vpack.c.bf16 %v5206, %v5201
        %v5212 = vpack.c.bf16 %v5207, %v5202
        %v5213 = vpack.c.bf16 %v5208, %v5203
        %v5214 = vld [vmem:[%s347] sm:$0xff]
        %v5215 = vld [vmem:[%s347 + $0x8] sm:$0xf]
        %v5216 = vld [vmem:[%s347 + $0xc] sm:$0xff]
        %v5217 = vld [vmem:[%s347 + $0x14] sm:$0xf]
        %v5218 = vld [vmem:[%s347 + $0x18] sm:$0xff]
        %v5219 = vld [vmem:[%s347 + $0x20] sm:$0xf]
        %v5220 = vld [vmem:[%s347 + $0x24] sm:$0xff]
        %v5221 = vld [vmem:[%s347 + $0x2c] sm:$0xf]
        %v5222 = vld [vmem:[%s347 + $0x30] sm:$0xff]
        %v5223 = vld [vmem:[%s347 + $0x38] sm:$0xf]
        %v5224 = vld [vmem:[%s347 + $0x3c] sm:$0xff]
        %v5225 = vld [vmem:[%s347 + $0x44] sm:$0xf]
        %v5226 = vld [vmem:[%s347 + $0x48] sm:$0xff]
        %v5227 = vld [vmem:[%s347 + $0x50] sm:$0xf]
        %v5228 = vld [vmem:[%s347 + $0x54] sm:$0xff]
        %v5229 = vld [vmem:[%s347 + $0x5c] sm:$0xf]
        %v5230 = vld [vmem:[%s347 + $0x60] sm:$0xff]
        %v5231 = vld [vmem:[%s347 + $0x68] sm:$0xf]
        %v5232 = vld [vmem:[%s347 + $0x6c] sm:$0xff]
        %v5233 = vld [vmem:[%s347 + $0x74] sm:$0xf]
        %v5234 = vld [vmem:[%s347 + $0x78] sm:$0xff]
        %v5235 = vld [vmem:[%s347 + $0x80] sm:$0xf]
        %v5236 = vld [vmem:[%s347 + $0x84] sm:$0xff]
        %v5237 = vld [vmem:[%s347 + $0x8c] sm:$0xf]
        %v5238 = vld [vmem:[%s347 + $0x90] sm:$0xff]
        %v5239 = vld [vmem:[%s347 + $0x98] sm:$0xf]
        %v5240 = vld [vmem:[%s347 + $0x9c] sm:$0xff]
        %v5241 = vld [vmem:[%s347 + $0xa4] sm:$0xf]
        %v5242 = vld [vmem:[%s347 + $0xa8] sm:$0xff]
        %v5243 = vld [vmem:[%s347 + $0xb0] sm:$0xf]
        %v5244 = vld [vmem:[%s347 + $0xb4] sm:$0xff]
        %v5245 = vld [vmem:[%s347 + $0xbc] sm:$0xf]
        %v5246 = vld [vmem:[%s347 + $0xc0] sm:$0xff]
        %v5247 = vld [vmem:[%s347 + $0xc8] sm:$0xf]
        %v5248 = vld [vmem:[%s347 + $0xcc] sm:$0xff]
        %v5249 = vld [vmem:[%s347 + $0xd4] sm:$0xf]
        %v5250 = vld [vmem:[%s347 + $0xd8] sm:$0xff]
        %v5251 = vld [vmem:[%s347 + $0xe0] sm:$0xf]
        %v5252 = vld [vmem:[%s347 + $0xe4] sm:$0xff]
        %v5253 = vld [vmem:[%s347 + $0xec] sm:$0xf]
        %v5254 = vld [vmem:[%s347 + $0xf0] sm:$0xff]
        %v5255 = vld [vmem:[%s347 + $0xf8] sm:$0xf]
        %v5256 = vld [vmem:[%s347 + $0xfc] sm:$0xff]
        %v5257 = vld [vmem:[%s347 + $0x104] sm:$0xf]
        %v5258 = vld [vmem:[%s347 + $0x108] sm:$0xff]
        %v5259 = vld [vmem:[%s347 + $0x110] sm:$0xf]
        %v5260 = vld [vmem:[%s347 + $0x114] sm:$0xff]
        %v5261 = vld [vmem:[%s347 + $0x11c] sm:$0xf]
        %v5262 = vld [vmem:[%s347 + $0x120] sm:$0xff]
        %v5263 = vld [vmem:[%s347 + $0x128] sm:$0xf]
        %v5264 = vld [vmem:[%s347 + $0x12c] sm:$0xff]
        %v5265 = vld [vmem:[%s347 + $0x134] sm:$0xf]
        %v5266 = vld [vmem:[%s347 + $0x138] sm:$0xff]
        %v5267 = vld [vmem:[%s347 + $0x140] sm:$0xf]
        %v5268 = vld [vmem:[%s347 + $0x144] sm:$0xff]
        %v5269 = vld [vmem:[%s347 + $0x14c] sm:$0xf]
        %v5270 = vld [vmem:[%s347 + $0x150] sm:$0xff]
        %v5271 = vld [vmem:[%s347 + $0x158] sm:$0xf]
        %v5272 = vld [vmem:[%s347 + $0x15c] sm:$0xff]
        %v5273 = vld [vmem:[%s347 + $0x164] sm:$0xf]
        %v5274 = vld [vmem:[%s347 + $0x168] sm:$0xff]
        %v5275 = vld [vmem:[%s347 + $0x170] sm:$0xf]
        %v5276 = vld [vmem:[%s347 + $0x174] sm:$0xff]
        %v5277 = vld [vmem:[%s347 + $0x17c] sm:$0xf]
        %v5278 = vld [vmem:[%s347 + $0x180] sm:$0xff]
        %v5279 = vld [vmem:[%s347 + $0x188] sm:$0xf]
        %v5280 = vld [vmem:[%s347 + $0x18c] sm:$0xff]
        %v5281 = vld [vmem:[%s347 + $0x194] sm:$0xf]
        %v5282 = vld [vmem:[%s347 + $0x198] sm:$0xff]
        %v5283 = vld [vmem:[%s347 + $0x1a0] sm:$0xf]
        %v5284 = vld [vmem:[%s347 + $0x1a4] sm:$0xff]
        %v5285 = vld [vmem:[%s347 + $0x1ac] sm:$0xf]
        %v5286 = vld [vmem:[%s347 + $0x1b0] sm:$0xff]
        %v5287 = vld [vmem:[%s347 + $0x1b8] sm:$0xf]
        %v5288 = vld [vmem:[%s347 + $0x1bc] sm:$0xff]
        %v5289 = vld [vmem:[%s347 + $0x1c4] sm:$0xf]
        %v5290 = vld [vmem:[%s347 + $0x1c8] sm:$0xff]
        %v5291 = vld [vmem:[%s347 + $0x1d0] sm:$0xf]
        %v5292 = vld [vmem:[%s347 + $0x1d4] sm:$0xff]
        %v5293 = vld [vmem:[%s347 + $0x1dc] sm:$0xf]
        %v5294 = vld [vmem:[%s347 + $0x1e0] sm:$0xff]
        %v5295 = vld [vmem:[%s347 + $0x1e8] sm:$0xf]
        %v5296 = vld [vmem:[%s347 + $0x1ec] sm:$0xff]
        %v5297 = vld [vmem:[%s347 + $0x1f4] sm:$0xf]
        %v5298 = vld [vmem:[%s347 + $0x1f8] sm:$0xff]
        %v5299 = vld [vmem:[%s347 + $0x200] sm:$0xf]
        %v5300 = vld [vmem:[%s347 + $0x204] sm:$0xff]
        %v5301 = vld [vmem:[%s347 + $0x20c] sm:$0xf]
        %v5302 = vld [vmem:[%s347 + $0x210] sm:$0xff]
        %v5303 = vld [vmem:[%s347 + $0x218] sm:$0xf]
        %v5304 = vld [vmem:[%s347 + $0x21c] sm:$0xff]
        %v5305 = vld [vmem:[%s347 + $0x224] sm:$0xf]
        %v5306 = vld [vmem:[%s347 + $0x228] sm:$0xff]
        %v5307 = vld [vmem:[%s347 + $0x230] sm:$0xf]
        %v5308 = vld [vmem:[%s347 + $0x234] sm:$0xff]
        %v5309 = vld [vmem:[%s347 + $0x23c] sm:$0xf]
        %v5310 = vld [vmem:[%s347 + $0x240] sm:$0xff]
        %v5311 = vld [vmem:[%s347 + $0x248] sm:$0xf]
        %v5312 = vld [vmem:[%s347 + $0x24c] sm:$0xff]
        %v5313 = vld [vmem:[%s347 + $0x254] sm:$0xf]
        %v5314 = vld [vmem:[%s347 + $0x258] sm:$0xff]
        %v5315 = vld [vmem:[%s347 + $0x260] sm:$0xf]
        %v5316 = vld [vmem:[%s347 + $0x264] sm:$0xff]
        %v5317 = vld [vmem:[%s347 + $0x26c] sm:$0xf]
        %v5318 = vld [vmem:[%s347 + $0x270] sm:$0xff]
        %v5319 = vld [vmem:[%s347 + $0x278] sm:$0xf]
        %v5320 = vld [vmem:[%s347 + $0x27c] sm:$0xff]
        %v5321 = vld [vmem:[%s347 + $0x284] sm:$0xf]
        %v5322 = vld [vmem:[%s347 + $0x288] sm:$0xff]
        %v5323 = vld [vmem:[%s347 + $0x290] sm:$0xf]
        %v5324 = vld [vmem:[%s347 + $0x294] sm:$0xff]
        %v5325 = vld [vmem:[%s347 + $0x29c] sm:$0xf]
        %v5326 = vld [vmem:[%s347 + $0x2a0] sm:$0xff]
        %v5327 = vld [vmem:[%s347 + $0x2a8] sm:$0xf]
        %v5328 = vld [vmem:[%s347 + $0x2ac] sm:$0xff]
        %v5329 = vld [vmem:[%s347 + $0x2b4] sm:$0xf]
        %v5330 = vld [vmem:[%s347 + $0x2b8] sm:$0xff]
        %v5331 = vld [vmem:[%s347 + $0x2c0] sm:$0xf]
        %v5332 = vld [vmem:[%s347 + $0x2c4] sm:$0xff]
        %v5333 = vld [vmem:[%s347 + $0x2cc] sm:$0xf]
        %v5334 = vld [vmem:[%s347 + $0x2d0] sm:$0xff]
        %v5335 = vld [vmem:[%s347 + $0x2d8] sm:$0xf]
        %v5336 = vld [vmem:[%s347 + $0x2dc] sm:$0xff]
        %v5337 = vld [vmem:[%s347 + $0x2e4] sm:$0xf]
        %v5338 = vld [vmem:[%s347 + $0x2e8] sm:$0xff]
        %v5339 = vld [vmem:[%s347 + $0x2f0] sm:$0xf]
        %v5340 = vld [vmem:[%s347 + $0x2f4] sm:$0xff]
        %v5341 = vld [vmem:[%s347 + $0x2fc] sm:$0xf]
        %v5342 = vld [vmem:[%s347 + $0x300] sm:$0xff]
        %v5343 = vld [vmem:[%s347 + $0x308] sm:$0xf]
        %v5344 = vld [vmem:[%s347 + $0x30c] sm:$0xff]
        %v5345 = vld [vmem:[%s347 + $0x314] sm:$0xf]
        %v5346 = vld [vmem:[%s347 + $0x318] sm:$0xff]
        %v5347 = vld [vmem:[%s347 + $0x320] sm:$0xf]
        %v5348 = vld [vmem:[%s347 + $0x324] sm:$0xff]
        %v5349 = vld [vmem:[%s347 + $0x32c] sm:$0xf]
        %v5350 = vld [vmem:[%s347 + $0x330] sm:$0xff]
        %v5351 = vld [vmem:[%s347 + $0x338] sm:$0xf]
        %v5352 = vld [vmem:[%s347 + $0x33c] sm:$0xff]
        %v5353 = vld [vmem:[%s347 + $0x344] sm:$0xf]
        %v5354 = vld [vmem:[%s347 + $0x348] sm:$0xff]
        %v5355 = vld [vmem:[%s347 + $0x350] sm:$0xf]
        %v5356 = vld [vmem:[%s347 + $0x354] sm:$0xff]
        %v5357 = vld [vmem:[%s347 + $0x35c] sm:$0xf]
        %v5358 = vld [vmem:[%s347 + $0x360] sm:$0xff]
        %v5359 = vld [vmem:[%s347 + $0x368] sm:$0xf]
        %v5360 = vld [vmem:[%s347 + $0x36c] sm:$0xff]
        %v5361 = vld [vmem:[%s347 + $0x374] sm:$0xf]
        %v5362 = vld [vmem:[%s347 + $0x378] sm:$0xff]
        %v5363 = vld [vmem:[%s347 + $0x380] sm:$0xf]
        %v5364 = vld [vmem:[%s347 + $0x384] sm:$0xff]
        %v5365 = vld [vmem:[%s347 + $0x38c] sm:$0xf]
        %v5366 = vld [vmem:[%s347 + $0x390] sm:$0xff]
        %v5367 = vld [vmem:[%s347 + $0x398] sm:$0xf]
        %v5368 = vld [vmem:[%s347 + $0x39c] sm:$0xff]
        %v5369 = vld [vmem:[%s347 + $0x3a4] sm:$0xf]
        %v5370 = vld [vmem:[%s347 + $0x3a8] sm:$0xff]
        %v5371 = vld [vmem:[%s347 + $0x3b0] sm:$0xf]
        %v5372 = vld [vmem:[%s347 + $0x3b4] sm:$0xff]
        %v5373 = vld [vmem:[%s347 + $0x3bc] sm:$0xf]
        %s5374 = scalar_lea.vmem %s357, 5 [#allocation10]
        %v5375 = vld [vmem:[%s5374] ss:$8 sm:$0x7]
        %v5377 = vperm.slane %v5375, 0
        %v5378 = vperm.slane %v5375, 1
        %v5379 = vperm.slane %v5375, 2
        %v5543 = vunpack.c.l.b16 %v5214
        %v5544 = vunpack.c.h.b16 %v5214
        %v5545 = vunpack.c.l.b16 %v5215
        %v5546 = vunpack.c.l.b16 %v5216
        %v5547 = vunpack.c.h.b16 %v5216
        %v5548 = vunpack.c.l.b16 %v5217
        %v5549 = vunpack.c.l.b16 %v5218
        %v5550 = vunpack.c.h.b16 %v5218
        %v5551 = vunpack.c.l.b16 %v5219
        %v5552 = vunpack.c.l.b16 %v5220
        %v5553 = vunpack.c.h.b16 %v5220
        %v5554 = vunpack.c.l.b16 %v5221
        %v5555 = vunpack.c.l.b16 %v5222
        %v5556 = vunpack.c.h.b16 %v5222
        %v5557 = vunpack.c.l.b16 %v5223
        %v5558 = vunpack.c.l.b16 %v5224
        %v5559 = vunpack.c.h.b16 %v5224
        %v5560 = vunpack.c.l.b16 %v5225
        %v5561 = vunpack.c.l.b16 %v5226
        %v5562 = vunpack.c.h.b16 %v5226
        %v5563 = vunpack.c.l.b16 %v5227
        %v5564 = vunpack.c.l.b16 %v5228
        %v5565 = vunpack.c.h.b16 %v5228
        %v5566 = vunpack.c.l.b16 %v5229
        %v5567 = vunpack.c.l.b16 %v5230
        %v5568 = vunpack.c.h.b16 %v5230
        %v5569 = vunpack.c.l.b16 %v5231
        %v5570 = vunpack.c.l.b16 %v5232
        %v5571 = vunpack.c.h.b16 %v5232
        %v5572 = vunpack.c.l.b16 %v5233
        %v5573 = vunpack.c.l.b16 %v5234
        %v5574 = vunpack.c.h.b16 %v5234
        %v5575 = vunpack.c.l.b16 %v5235
        %v5576 = vunpack.c.l.b16 %v5236
        %v5577 = vunpack.c.h.b16 %v5236
        %v5578 = vunpack.c.l.b16 %v5237
        %v5579 = vunpack.c.l.b16 %v5238
        %v5580 = vunpack.c.h.b16 %v5238
        %v5581 = vunpack.c.l.b16 %v5239
        %v5582 = vunpack.c.l.b16 %v5240
        %v5583 = vunpack.c.h.b16 %v5240
        %v5584 = vunpack.c.l.b16 %v5241
        %v5585 = vunpack.c.l.b16 %v5242
        %v5586 = vunpack.c.h.b16 %v5242
        %v5587 = vunpack.c.l.b16 %v5243
        %v5588 = vunpack.c.l.b16 %v5244
        %v5589 = vunpack.c.h.b16 %v5244
        %v5590 = vunpack.c.l.b16 %v5245
        %v5591 = vunpack.c.l.b16 %v5246
        %v5592 = vunpack.c.h.b16 %v5246
        %v5593 = vunpack.c.l.b16 %v5247
        %v5594 = vunpack.c.l.b16 %v5248
        %v5595 = vunpack.c.h.b16 %v5248
        %v5596 = vunpack.c.l.b16 %v5249
        %v5597 = vunpack.c.l.b16 %v5250
        %v5598 = vunpack.c.h.b16 %v5250
        %v5599 = vunpack.c.l.b16 %v5251
        %v5600 = vunpack.c.l.b16 %v5252
        %v5601 = vunpack.c.h.b16 %v5252
        %v5602 = vunpack.c.l.b16 %v5253
        %v5603 = vunpack.c.l.b16 %v5254
        %v5604 = vunpack.c.h.b16 %v5254
        %v5605 = vunpack.c.l.b16 %v5255
        %v5606 = vunpack.c.l.b16 %v5256
        %v5607 = vunpack.c.h.b16 %v5256
        %v5608 = vunpack.c.l.b16 %v5257
        %v5609 = vunpack.c.l.b16 %v5258
        %v5610 = vunpack.c.h.b16 %v5258
        %v5611 = vunpack.c.l.b16 %v5259
        %v5612 = vunpack.c.l.b16 %v5260
        %v5613 = vunpack.c.h.b16 %v5260
        %v5614 = vunpack.c.l.b16 %v5261
        %v5615 = vunpack.c.l.b16 %v5262
        %v5616 = vunpack.c.h.b16 %v5262
        %v5617 = vunpack.c.l.b16 %v5263
        %v5618 = vunpack.c.l.b16 %v5264
        %v5619 = vunpack.c.h.b16 %v5264
        %v5620 = vunpack.c.l.b16 %v5265
        %v5621 = vunpack.c.l.b16 %v5266
        %v5622 = vunpack.c.h.b16 %v5266
        %v5623 = vunpack.c.l.b16 %v5267
        %v5624 = vunpack.c.l.b16 %v5268
        %v5625 = vunpack.c.h.b16 %v5268
        %v5626 = vunpack.c.l.b16 %v5269
        %v5627 = vunpack.c.l.b16 %v5270
        %v5628 = vunpack.c.h.b16 %v5270
        %v5629 = vunpack.c.l.b16 %v5271
        %v5630 = vunpack.c.l.b16 %v5272
        %v5631 = vunpack.c.h.b16 %v5272
        %v5632 = vunpack.c.l.b16 %v5273
        %v5633 = vunpack.c.l.b16 %v5274
        %v5634 = vunpack.c.h.b16 %v5274
        %v5635 = vunpack.c.l.b16 %v5275
        %v5636 = vunpack.c.l.b16 %v5276
        %v5637 = vunpack.c.h.b16 %v5276
        %v5638 = vunpack.c.l.b16 %v5277
        %v5639 = vunpack.c.l.b16 %v5278
        %v5640 = vunpack.c.h.b16 %v5278
        %v5641 = vunpack.c.l.b16 %v5279
        %v5642 = vunpack.c.l.b16 %v5280
        %v5643 = vunpack.c.h.b16 %v5280
        %v5644 = vunpack.c.l.b16 %v5281
        %v5645 = vunpack.c.l.b16 %v5282
        %v5646 = vunpack.c.h.b16 %v5282
        %v5647 = vunpack.c.l.b16 %v5283
        %v5648 = vunpack.c.l.b16 %v5284
        %v5649 = vunpack.c.h.b16 %v5284
        %v5650 = vunpack.c.l.b16 %v5285
        %v5651 = vunpack.c.l.b16 %v5286
        %v5652 = vunpack.c.h.b16 %v5286
        %v5653 = vunpack.c.l.b16 %v5287
        %v5654 = vunpack.c.l.b16 %v5288
        %v5655 = vunpack.c.h.b16 %v5288
        %v5656 = vunpack.c.l.b16 %v5289
        %v5657 = vunpack.c.l.b16 %v5290
        %v5658 = vunpack.c.h.b16 %v5290
        %v5659 = vunpack.c.l.b16 %v5291
        %v5660 = vunpack.c.l.b16 %v5292
        %v5661 = vunpack.c.h.b16 %v5292
        %v5662 = vunpack.c.l.b16 %v5293
        %v5663 = vunpack.c.l.b16 %v5294
        %v5664 = vunpack.c.h.b16 %v5294
        %v5665 = vunpack.c.l.b16 %v5295
        %v5666 = vunpack.c.l.b16 %v5296
        %v5667 = vunpack.c.h.b16 %v5296
        %v5668 = vunpack.c.l.b16 %v5297
        %v5669 = vunpack.c.l.b16 %v5298
        %v5670 = vunpack.c.h.b16 %v5298
        %v5671 = vunpack.c.l.b16 %v5299
        %v5672 = vunpack.c.l.b16 %v5300
        %v5673 = vunpack.c.h.b16 %v5300
        %v5674 = vunpack.c.l.b16 %v5301
        %v5675 = vunpack.c.l.b16 %v5302
        %v5676 = vunpack.c.h.b16 %v5302
        %v5677 = vunpack.c.l.b16 %v5303
        %v5678 = vunpack.c.l.b16 %v5304
        %v5679 = vunpack.c.h.b16 %v5304
        %v5680 = vunpack.c.l.b16 %v5305
        %v5681 = vunpack.c.l.b16 %v5306
        %v5682 = vunpack.c.h.b16 %v5306
        %v5683 = vunpack.c.l.b16 %v5307
        %v5684 = vunpack.c.l.b16 %v5308
        %v5685 = vunpack.c.h.b16 %v5308
        %v5686 = vunpack.c.l.b16 %v5309
        %v5687 = vunpack.c.l.b16 %v5310
        %v5688 = vunpack.c.h.b16 %v5310
        %v5689 = vunpack.c.l.b16 %v5311
        %v5690 = vunpack.c.l.b16 %v5312
        %v5691 = vunpack.c.h.b16 %v5312
        %v5692 = vunpack.c.l.b16 %v5313
        %v5693 = vunpack.c.l.b16 %v5314
        %v5694 = vunpack.c.h.b16 %v5314
        %v5695 = vunpack.c.l.b16 %v5315
        %v5696 = vunpack.c.l.b16 %v5316
        %v5697 = vunpack.c.h.b16 %v5316
        %v5698 = vunpack.c.l.b16 %v5317
        %v5699 = vunpack.c.l.b16 %v5318
        %v5700 = vunpack.c.h.b16 %v5318
        %v5701 = vunpack.c.l.b16 %v5319
        %v5702 = vunpack.c.l.b16 %v5320
        %v5703 = vunpack.c.h.b16 %v5320
        %v5704 = vunpack.c.l.b16 %v5321
        %v5705 = vunpack.c.l.b16 %v5322
        %v5706 = vunpack.c.h.b16 %v5322
        %v5707 = vunpack.c.l.b16 %v5323
        %v5708 = vunpack.c.l.b16 %v5324
        %v5709 = vunpack.c.h.b16 %v5324
        %v5710 = vunpack.c.l.b16 %v5325
        %v5711 = vunpack.c.l.b16 %v5326
        %v5712 = vunpack.c.h.b16 %v5326
        %v5713 = vunpack.c.l.b16 %v5327
        %v5714 = vunpack.c.l.b16 %v5328
        %v5715 = vunpack.c.h.b16 %v5328
        %v5716 = vunpack.c.l.b16 %v5329
        %v5717 = vunpack.c.l.b16 %v5330
        %v5718 = vunpack.c.h.b16 %v5330
        %v5719 = vunpack.c.l.b16 %v5331
        %v5720 = vunpack.c.l.b16 %v5332
        %v5721 = vunpack.c.h.b16 %v5332
        %v5722 = vunpack.c.l.b16 %v5333
        %v5723 = vunpack.c.l.b16 %v5334
        %v5724 = vunpack.c.h.b16 %v5334
        %v5725 = vunpack.c.l.b16 %v5335
        %v5726 = vunpack.c.l.b16 %v5336
        %v5727 = vunpack.c.h.b16 %v5336
        %v5728 = vunpack.c.l.b16 %v5337
        %v5729 = vunpack.c.l.b16 %v5338
        %v5730 = vunpack.c.h.b16 %v5338
        %v5731 = vunpack.c.l.b16 %v5339
        %v5732 = vunpack.c.l.b16 %v5340
        %v5733 = vunpack.c.h.b16 %v5340
        %v5734 = vunpack.c.l.b16 %v5341
        %v5735 = vunpack.c.l.b16 %v5342
        %v5736 = vunpack.c.h.b16 %v5342
        %v5737 = vunpack.c.l.b16 %v5343
        %v5738 = vunpack.c.l.b16 %v5344
        %v5739 = vunpack.c.h.b16 %v5344
        %v5740 = vunpack.c.l.b16 %v5345
        %v5741 = vunpack.c.l.b16 %v5346
        %v5742 = vunpack.c.h.b16 %v5346
        %v5743 = vunpack.c.l.b16 %v5347
        %v5744 = vunpack.c.l.b16 %v5348
        %v5745 = vunpack.c.h.b16 %v5348
        %v5746 = vunpack.c.l.b16 %v5349
        %v5747 = vunpack.c.l.b16 %v5350
        %v5748 = vunpack.c.h.b16 %v5350
        %v5749 = vunpack.c.l.b16 %v5351
        %v5750 = vunpack.c.l.b16 %v5352
        %v5751 = vunpack.c.h.b16 %v5352
        %v5752 = vunpack.c.l.b16 %v5353
        %v5753 = vunpack.c.l.b16 %v5354
        %v5754 = vunpack.c.h.b16 %v5354
        %v5755 = vunpack.c.l.b16 %v5355
        %v5756 = vunpack.c.l.b16 %v5356
        %v5757 = vunpack.c.h.b16 %v5356
        %v5758 = vunpack.c.l.b16 %v5357
        %v5759 = vunpack.c.l.b16 %v5358
        %v5760 = vunpack.c.h.b16 %v5358
        %v5761 = vunpack.c.l.b16 %v5359
        %v5762 = vunpack.c.l.b16 %v5360
        %v5763 = vunpack.c.h.b16 %v5360
        %v5764 = vunpack.c.l.b16 %v5361
        %v5765 = vunpack.c.l.b16 %v5362
        %v5766 = vunpack.c.h.b16 %v5362
        %v5767 = vunpack.c.l.b16 %v5363
        %v5768 = vunpack.c.l.b16 %v5364
        %v5769 = vunpack.c.h.b16 %v5364
        %v5770 = vunpack.c.l.b16 %v5365
        %v5771 = vunpack.c.l.b16 %v5366
        %v5772 = vunpack.c.h.b16 %v5366
        %v5773 = vunpack.c.l.b16 %v5367
        %v5774 = vunpack.c.l.b16 %v5368
        %v5775 = vunpack.c.h.b16 %v5368
        %v5776 = vunpack.c.l.b16 %v5369
        %v5777 = vunpack.c.l.b16 %v5370
        %v5778 = vunpack.c.h.b16 %v5370
        %v5779 = vunpack.c.l.b16 %v5371
        %v5780 = vunpack.c.l.b16 %v5372
        %v5781 = vunpack.c.h.b16 %v5372
        %v5782 = vunpack.c.l.b16 %v5373
        %v5783 = vpack.c.b16 %v5546, %v5543
        %v5784 = vpack.c.b16 %v5547, %v5544
        %v5785 = vpack.c.b16 %v5548, %v5545
        %v5786 = vpack.c.b16 %v5552, %v5549
        %v5787 = vpack.c.b16 %v5553, %v5550
        %v5788 = vpack.c.b16 %v5554, %v5551
        %v5789 = vpack.c.b16 %v5558, %v5555
        %v5790 = vpack.c.b16 %v5559, %v5556
        %v5791 = vpack.c.b16 %v5560, %v5557
        %v5792 = vpack.c.b16 %v5564, %v5561
        %v5793 = vpack.c.b16 %v5565, %v5562
        %v5794 = vpack.c.b16 %v5566, %v5563
        %v5795 = vpack.c.b16 %v5570, %v5567
        %v5796 = vpack.c.b16 %v5571, %v5568
        %v5797 = vpack.c.b16 %v5572, %v5569
        %v5798 = vpack.c.b16 %v5576, %v5573
        %v5799 = vpack.c.b16 %v5577, %v5574
        %v5800 = vpack.c.b16 %v5578, %v5575
        %v5801 = vpack.c.b16 %v5582, %v5579
        %v5802 = vpack.c.b16 %v5583, %v5580
        %v5803 = vpack.c.b16 %v5584, %v5581
        %v5804 = vpack.c.b16 %v5588, %v5585
        %v5805 = vpack.c.b16 %v5589, %v5586
        %v5806 = vpack.c.b16 %v5590, %v5587
        %v5807 = vpack.c.b16 %v5594, %v5591
        %v5808 = vpack.c.b16 %v5595, %v5592
        %v5809 = vpack.c.b16 %v5596, %v5593
        %v5810 = vpack.c.b16 %v5600, %v5597
        %v5811 = vpack.c.b16 %v5601, %v5598
        %v5812 = vpack.c.b16 %v5602, %v5599
        %v5813 = vpack.c.b16 %v5606, %v5603
        %v5814 = vpack.c.b16 %v5607, %v5604
        %v5815 = vpack.c.b16 %v5608, %v5605
        %v5816 = vpack.c.b16 %v5612, %v5609
        %v5817 = vpack.c.b16 %v5613, %v5610
        %v5818 = vpack.c.b16 %v5614, %v5611
        %v5819 = vpack.c.b16 %v5618, %v5615
        %v5820 = vpack.c.b16 %v5619, %v5616
        %v5821 = vpack.c.b16 %v5620, %v5617
        %v5822 = vpack.c.b16 %v5624, %v5621
        %v5823 = vpack.c.b16 %v5625, %v5622
        %v5824 = vpack.c.b16 %v5626, %v5623
        %v5825 = vpack.c.b16 %v5630, %v5627
        %v5826 = vpack.c.b16 %v5631, %v5628
        %v5827 = vpack.c.b16 %v5632, %v5629
        %v5828 = vpack.c.b16 %v5636, %v5633
        %v5829 = vpack.c.b16 %v5637, %v5634
        %v5830 = vpack.c.b16 %v5638, %v5635
        %v5831 = vpack.c.b16 %v5642, %v5639
        %v5832 = vpack.c.b16 %v5643, %v5640
        %v5833 = vpack.c.b16 %v5644, %v5641
        %v5834 = vpack.c.b16 %v5648, %v5645
        %v5835 = vpack.c.b16 %v5649, %v5646
        %v5836 = vpack.c.b16 %v5650, %v5647
        %v5837 = vpack.c.b16 %v5654, %v5651
        %v5838 = vpack.c.b16 %v5655, %v5652
        %v5839 = vpack.c.b16 %v5656, %v5653
        %v5840 = vpack.c.b16 %v5660, %v5657
        %v5841 = vpack.c.b16 %v5661, %v5658
        %v5842 = vpack.c.b16 %v5662, %v5659
        %v5843 = vpack.c.b16 %v5666, %v5663
        %v5844 = vpack.c.b16 %v5667, %v5664
        %v5845 = vpack.c.b16 %v5668, %v5665
        %v5846 = vpack.c.b16 %v5672, %v5669
        %v5847 = vpack.c.b16 %v5673, %v5670
        %v5848 = vpack.c.b16 %v5674, %v5671
        %v5849 = vpack.c.b16 %v5678, %v5675
        %v5850 = vpack.c.b16 %v5679, %v5676
        %v5851 = vpack.c.b16 %v5680, %v5677
        %v5852 = vpack.c.b16 %v5684, %v5681
        %v5853 = vpack.c.b16 %v5685, %v5682
        %v5854 = vpack.c.b16 %v5686, %v5683
        %v5855 = vpack.c.b16 %v5690, %v5687
        %v5856 = vpack.c.b16 %v5691, %v5688
        %v5857 = vpack.c.b16 %v5692, %v5689
        %v5858 = vpack.c.b16 %v5696, %v5693
        %v5859 = vpack.c.b16 %v5697, %v5694
        %v5860 = vpack.c.b16 %v5698, %v5695
        %v5861 = vpack.c.b16 %v5702, %v5699
        %v5862 = vpack.c.b16 %v5703, %v5700
        %v5863 = vpack.c.b16 %v5704, %v5701
        %v5864 = vpack.c.b16 %v5708, %v5705
        %v5865 = vpack.c.b16 %v5709, %v5706
        %v5866 = vpack.c.b16 %v5710, %v5707
        %v5867 = vpack.c.b16 %v5714, %v5711
        %v5868 = vpack.c.b16 %v5715, %v5712
        %v5869 = vpack.c.b16 %v5716, %v5713
        %v5870 = vpack.c.b16 %v5720, %v5717
        %v5871 = vpack.c.b16 %v5721, %v5718
        %v5872 = vpack.c.b16 %v5722, %v5719
        %v5873 = vpack.c.b16 %v5726, %v5723
        %v5874 = vpack.c.b16 %v5727, %v5724
        %v5875 = vpack.c.b16 %v5728, %v5725
        %v5876 = vpack.c.b16 %v5732, %v5729
        %v5877 = vpack.c.b16 %v5733, %v5730
        %v5878 = vpack.c.b16 %v5734, %v5731
        %v5879 = vpack.c.b16 %v5738, %v5735
        %v5880 = vpack.c.b16 %v5739, %v5736
        %v5881 = vpack.c.b16 %v5740, %v5737
        %v5882 = vpack.c.b16 %v5744, %v5741
        %v5883 = vpack.c.b16 %v5745, %v5742
        %v5884 = vpack.c.b16 %v5746, %v5743
        %v5885 = vpack.c.b16 %v5750, %v5747
        %v5886 = vpack.c.b16 %v5751, %v5748
        %v5887 = vpack.c.b16 %v5752, %v5749
        %v5888 = vpack.c.b16 %v5756, %v5753
        %v5889 = vpack.c.b16 %v5757, %v5754
        %v5890 = vpack.c.b16 %v5758, %v5755
        %v5891 = vpack.c.b16 %v5762, %v5759
        %v5892 = vpack.c.b16 %v5763, %v5760
        %v5893 = vpack.c.b16 %v5764, %v5761
        %v5894 = vpack.c.b16 %v5768, %v5765
        %v5895 = vpack.c.b16 %v5769, %v5766
        %v5896 = vpack.c.b16 %v5770, %v5767
        %v5897 = vpack.c.b16 %v5774, %v5771
        %v5898 = vpack.c.b16 %v5775, %v5772
        %v5899 = vpack.c.b16 %v5776, %v5773
        %v5900 = vpack.c.b16 %v5780, %v5777
        %v5901 = vpack.c.b16 %v5781, %v5778
        %v5902 = vpack.c.b16 %v5782, %v5779
        %6023 = vmatpush.bf16.msra.mxu0 %v5804
        %6024 = vmatpush.bf16.msra.mxu0 %v5801
        %6025 = vmatpush.bf16.msra.mxu0 %v5798
        %6026 = vmatpush.bf16.msra.mxu0 %v5795
        %6027 = vmatpush.bf16.msra.mxu0 %v5792
        %6028 = vmatpush.bf16.msra.mxu0 %v5789
        %6029 = vmatpush.bf16.msra.mxu0 %v5786
        %6030 = vmatpush.bf16.msra.mxu0 %v5783
        %6031 = vmatmul.bf16.gmra.mxu0 %v5209
        %v6032 = vpop.f32.mrf.mxu0
        %v6033 = vadd.f32 %v5377, %v6032
        %v6034 = vpop.f32.mrf.mxu0
        %v6035 = vadd.f32 %v5377, %v6034
        %6036 = vdwg.mxu0
        %6037 = vmatpush.bf16.msra.mxu0 %v5828
        %6038 = vmatpush.bf16.msra.mxu0 %v5825
        %6039 = vmatpush.bf16.msra.mxu0 %v5822
        %6040 = vmatpush.bf16.msra.mxu0 %v5819
        %6041 = vmatpush.bf16.msra.mxu0 %v5816
        %6042 = vmatpush.bf16.msra.mxu0 %v5813
        %6043 = vmatpush.bf16.msra.mxu0 %v5810
        %6044 = vmatpush.bf16.msra.mxu0 %v5807
        %6045 = vmatmul.bf16.gmra.mxu0 %v5210
        %v6046 = vpop.f32.mrf.mxu0
        %v6047 = vadd.f32 %v6033, %v6046
        %v6048 = vpop.f32.mrf.mxu0
        %v6049 = vadd.f32 %v6035, %v6048
        %6050 = vdwg.mxu0
        %6051 = vmatpush.bf16.msra.mxu0 %v5852
        %6052 = vmatpush.bf16.msra.mxu0 %v5849
        %6053 = vmatpush.bf16.msra.mxu0 %v5846
        %6054 = vmatpush.bf16.msra.mxu0 %v5843
        %6055 = vmatpush.bf16.msra.mxu0 %v5840
        %6056 = vmatpush.bf16.msra.mxu0 %v5837
        %6057 = vmatpush.bf16.msra.mxu0 %v5834
        %6058 = vmatpush.bf16.msra.mxu0 %v5831
        %6059 = vmatmul.bf16.gmra.mxu0 %v5211
        %v6060 = vpop.f32.mrf.mxu0
        %v6061 = vadd.f32 %v6047, %v6060
        %v6062 = vpop.f32.mrf.mxu0
        %v6063 = vadd.f32 %v6049, %v6062
        %6064 = vdwg.mxu0
        %6065 = vmatpush.bf16.msra.mxu0 %v5876
        %6066 = vmatpush.bf16.msra.mxu0 %v5873
        %6067 = vmatpush.bf16.msra.mxu0 %v5870
        %6068 = vmatpush.bf16.msra.mxu0 %v5867
        %6069 = vmatpush.bf16.msra.mxu0 %v5864
        %6070 = vmatpush.bf16.msra.mxu0 %v5861
        %6071 = vmatpush.bf16.msra.mxu0 %v5858
        %6072 = vmatpush.bf16.msra.mxu0 %v5855
        %6073 = vmatmul.bf16.gmra.mxu0 %v5212
        %v6074 = vpop.f32.mrf.mxu0
        %v6075 = vadd.f32 %v6061, %v6074
        %v6076 = vpop.f32.mrf.mxu0
        %v6077 = vadd.f32 %v6063, %v6076
        %6078 = vdwg.mxu0
        %6079 = vmatpush.bf16.msra.mxu0 %v5900
        %6080 = vmatpush.bf16.msra.mxu0 %v5897
        %6081 = vmatpush.bf16.msra.mxu0 %v5894
        %6082 = vmatpush.bf16.msra.mxu0 %v5891
        %6083 = vmatpush.bf16.msra.mxu0 %v5888
        %6084 = vmatpush.bf16.msra.mxu0 %v5885
        %6085 = vmatpush.bf16.msra.mxu0 %v5882
        %6086 = vmatpush.bf16.msra.mxu0 %v5879
        %6087 = vmatmul.bf16.gmra.mxu0 %v5213
        %v6088 = vpop.f32.mrf.mxu0
        %v6089 = vadd.f32 %v6075, %v6088
        %v6090 = vpop.f32.mrf.mxu0
        %v6091 = vadd.f32 %v6077, %v6090
        %6092 = vdwg.mxu0
        %6093 = vmatpush.bf16.msra.mxu0 %v5805
        %6094 = vmatpush.bf16.msra.mxu0 %v5802
        %6095 = vmatpush.bf16.msra.mxu0 %v5799
        %6096 = vmatpush.bf16.msra.mxu0 %v5796
        %6097 = vmatpush.bf16.msra.mxu0 %v5793
        %6098 = vmatpush.bf16.msra.mxu0 %v5790
        %6099 = vmatpush.bf16.msra.mxu0 %v5787
        %6100 = vmatpush.bf16.msra.mxu0 %v5784
        %6101 = vmatmul.bf16.gmra.mxu0 %v5209
        %v6102 = vpop.f32.mrf.mxu0
        %v6103 = vadd.f32 %v5378, %v6102
        %v6104 = vpop.f32.mrf.mxu0
        %v6105 = vadd.f32 %v5378, %v6104
        %6106 = vdwg.mxu0
        %6107 = vmatpush.bf16.msra.mxu0 %v5829
        %6108 = vmatpush.bf16.msra.mxu0 %v5826
        %6109 = vmatpush.bf16.msra.mxu0 %v5823
        %6110 = vmatpush.bf16.msra.mxu0 %v5820
        %6111 = vmatpush.bf16.msra.mxu0 %v5817
        %6112 = vmatpush.bf16.msra.mxu0 %v5814
        %6113 = vmatpush.bf16.msra.mxu0 %v5811
        %6114 = vmatpush.bf16.msra.mxu0 %v5808
        %6115 = vmatmul.bf16.gmra.mxu0 %v5210
        %v6116 = vpop.f32.mrf.mxu0
        %v6117 = vadd.f32 %v6103, %v6116
        %v6118 = vpop.f32.mrf.mxu0
        %v6119 = vadd.f32 %v6105, %v6118
        %6120 = vdwg.mxu0
        %6121 = vmatpush.bf16.msra.mxu0 %v5853
        %6122 = vmatpush.bf16.msra.mxu0 %v5850
        %6123 = vmatpush.bf16.msra.mxu0 %v5847
        %6124 = vmatpush.bf16.msra.mxu0 %v5844
        %6125 = vmatpush.bf16.msra.mxu0 %v5841
        %6126 = vmatpush.bf16.msra.mxu0 %v5838
        %6127 = vmatpush.bf16.msra.mxu0 %v5835
        %6128 = vmatpush.bf16.msra.mxu0 %v5832
        %6129 = vmatmul.bf16.gmra.mxu0 %v5211
        %v6130 = vpop.f32.mrf.mxu0
        %v6131 = vadd.f32 %v6117, %v6130
        %v6132 = vpop.f32.mrf.mxu0
        %v6133 = vadd.f32 %v6119, %v6132
        %6134 = vdwg.mxu0
        %6135 = vmatpush.bf16.msra.mxu0 %v5877
        %6136 = vmatpush.bf16.msra.mxu0 %v5874
        %6137 = vmatpush.bf16.msra.mxu0 %v5871
        %6138 = vmatpush.bf16.msra.mxu0 %v5868
        %6139 = vmatpush.bf16.msra.mxu0 %v5865
        %6140 = vmatpush.bf16.msra.mxu0 %v5862
        %6141 = vmatpush.bf16.msra.mxu0 %v5859
        %6142 = vmatpush.bf16.msra.mxu0 %v5856
        %6143 = vmatmul.bf16.gmra.mxu0 %v5212
        %v6144 = vpop.f32.mrf.mxu0
        %v6145 = vadd.f32 %v6131, %v6144
        %v6146 = vpop.f32.mrf.mxu0
        %v6147 = vadd.f32 %v6133, %v6146
        %6148 = vdwg.mxu0
        %6149 = vmatpush.bf16.msra.mxu0 %v5901
        %6150 = vmatpush.bf16.msra.mxu0 %v5898
        %6151 = vmatpush.bf16.msra.mxu0 %v5895
        %6152 = vmatpush.bf16.msra.mxu0 %v5892
        %6153 = vmatpush.bf16.msra.mxu0 %v5889
        %6154 = vmatpush.bf16.msra.mxu0 %v5886
        %6155 = vmatpush.bf16.msra.mxu0 %v5883
        %6156 = vmatpush.bf16.msra.mxu0 %v5880
        %6157 = vmatmul.bf16.gmra.mxu0 %v5213
        %v6158 = vpop.f32.mrf.mxu0
        %v6159 = vadd.f32 %v6145, %v6158
        %v6160 = vpop.f32.mrf.mxu0
        %v6161 = vadd.f32 %v6147, %v6160
        %6162 = vdwg.mxu0
        %6163 = vmatpush.bf16.msra.mxu0 %v5806
        %6164 = vmatpush.bf16.msra.mxu0 %v5803
        %6165 = vmatpush.bf16.msra.mxu0 %v5800
        %6166 = vmatpush.bf16.msra.mxu0 %v5797
        %6167 = vmatpush.bf16.msra.mxu0 %v5794
        %6168 = vmatpush.bf16.msra.mxu0 %v5791
        %6169 = vmatpush.bf16.msra.mxu0 %v5788
        %6170 = vmatpush.bf16.msra.mxu0 %v5785
        %6171 = vmatmul.bf16.gmra.mxu0 %v5209
        %v6172 = vpop.f32.mrf.mxu0
        %v6173 = vadd.f32 %v5379, %v6172
        %v6174 = vpop.f32.mrf.mxu0
        %v6175 = vadd.f32 %v5379, %v6174
        %6176 = vdwg.mxu0
        %6177 = vmatpush.bf16.msra.mxu0 %v5830
        %6178 = vmatpush.bf16.msra.mxu0 %v5827
        %6179 = vmatpush.bf16.msra.mxu0 %v5824
        %6180 = vmatpush.bf16.msra.mxu0 %v5821
        %6181 = vmatpush.bf16.msra.mxu0 %v5818
        %6182 = vmatpush.bf16.msra.mxu0 %v5815
        %6183 = vmatpush.bf16.msra.mxu0 %v5812
        %6184 = vmatpush.bf16.msra.mxu0 %v5809
        %6185 = vmatmul.bf16.gmra.mxu0 %v5210
        %v6186 = vpop.f32.mrf.mxu0
        %v6187 = vadd.f32 %v6173, %v6186
        %v6188 = vpop.f32.mrf.mxu0
        %v6189 = vadd.f32 %v6175, %v6188
        %6190 = vdwg.mxu0
        %6191 = vmatpush.bf16.msra.mxu0 %v5854
        %6192 = vmatpush.bf16.msra.mxu0 %v5851
        %6193 = vmatpush.bf16.msra.mxu0 %v5848
        %6194 = vmatpush.bf16.msra.mxu0 %v5845
        %6195 = vmatpush.bf16.msra.mxu0 %v5842
        %6196 = vmatpush.bf16.msra.mxu0 %v5839
        %6197 = vmatpush.bf16.msra.mxu0 %v5836
        %6198 = vmatpush.bf16.msra.mxu0 %v5833
        %6199 = vmatmul.bf16.gmra.mxu0 %v5211
        %v6200 = vpop.f32.mrf.mxu0
        %v6201 = vadd.f32 %v6187, %v6200
        %v6202 = vpop.f32.mrf.mxu0
        %v6203 = vadd.f32 %v6189, %v6202
        %6204 = vdwg.mxu0
        %6205 = vmatpush.bf16.msra.mxu0 %v5878
        %6206 = vmatpush.bf16.msra.mxu0 %v5875
        %6207 = vmatpush.bf16.msra.mxu0 %v5872
        %6208 = vmatpush.bf16.msra.mxu0 %v5869
        %6209 = vmatpush.bf16.msra.mxu0 %v5866
        %6210 = vmatpush.bf16.msra.mxu0 %v5863
        %6211 = vmatpush.bf16.msra.mxu0 %v5860
        %6212 = vmatpush.bf16.msra.mxu0 %v5857
        %6213 = vmatmul.bf16.gmra.mxu0 %v5212
        %v6214 = vpop.f32.mrf.mxu0
        %v6215 = vadd.f32 %v6201, %v6214
        %v6216 = vpop.f32.mrf.mxu0
        %v6217 = vadd.f32 %v6203, %v6216
        %6218 = vdwg.mxu0
        %6219 = vmatpush.bf16.msra.mxu0 %v5902
        %6220 = vmatpush.bf16.msra.mxu0 %v5899
        %6221 = vmatpush.bf16.msra.mxu0 %v5896
        %6222 = vmatpush.bf16.msra.mxu0 %v5893
        %6223 = vmatpush.bf16.msra.mxu0 %v5890
        %6224 = vmatpush.bf16.msra.mxu0 %v5887
        %6225 = vmatpush.bf16.msra.mxu0 %v5884
        %6226 = vmatpush.bf16.msra.mxu0 %v5881
        %6227 = vmatmul.bf16.gmra.mxu0 %v5213
        %v6228 = vpop.f32.mrf.mxu0
        %v6229 = vadd.f32 %v6215, %v6228
        %v6230 = vpop.f32.mrf.mxu0
        %v6231 = vadd.f32 %v6217, %v6230
        %6232 = vdwg.mxu0
        %v6233 = vadd.f32 %v4117, %v6089
        %v6234 = vadd.f32 %v4118, %v6159
        %v6235 = vadd.f32 %v4119, %v6229
        %v6236 = vadd.f32 %v4120, %v6091
        %v6237 = vadd.f32 %v4121, %v6161
        %v6238 = vadd.f32 %v4122, %v6231
        %s6239 = scalar_lea.vmem %s357, 6 [#allocation10]
        %v6240 = vld [vmem:[%s6239] ss:$8 sm:$0x7]
        %s6241 = scalar_lea.vmem %s357, 7 [#allocation10]
        %v6242 = vld [vmem:[%s6241] ss:$8 sm:$0x7]
        %v6243 = vadd.f32 %v6233, %v6234
        %v6244 = vadd.f32 %v6243, %v6235
        %6245 = vadd.xlane.f32.xlu0 %v6244
        %v6246 = vpop.xlane.xlu0 %6245
        %v6247 = vadd.f32 %v6236, %v6237
        %v6248 = vadd.f32 %v6247, %v6238
        %6249 = vadd.xlane.f32.xlu0 %v6248
        %v6250 = vpop.xlane.xlu0 %6249
        %v6251 = vmul.f32 %v6246, 0.0032051282
        %v6252 = vmul.f32 %v6250, 0.0032051282
        %v6253 = vsub.f32 %v6233, %v6251
        %v6254 = vsub.f32 %v6234, %v6251
        %v6255 = vsub.f32 %v6235, %v6251
        %v6256 = vsub.f32 %v6236, %v6252
        %v6257 = vsub.f32 %v6237, %v6252
        %v6258 = vsub.f32 %v6238, %v6252
        %v6259 = vmul.f32 %v6253, %v4018
        %v6260 = vmul.f32 %v6254, %v4019
        %v6261 = vmul.f32 %v6255, %v4020
        %v6262 = vmul.f32 %v6256, %v4018
        %v6263 = vmul.f32 %v6257, %v4019
        %v6264 = vmul.f32 %v6258, %v4020
        %v6265 = vmul.f32 %v6259, %v6259
        %v6266 = vmul.f32 %v6260, %v6260
        %v6267 = vmul.f32 %v6261, %v6261
        %v6268 = vmul.f32 %v6262, %v6262
        %v6269 = vmul.f32 %v6263, %v6263
        %v6270 = vmul.f32 %v6264, %v6264
        %v6271 = vadd.f32 %v6265, %v6266
        %v6272 = vadd.f32 %v6271, %v6267
        %6273 = vadd.xlane.f32.xlu0 %v6272
        %v6274 = vpop.xlane.xlu0 %6273
        %v6275 = vadd.f32 %v6268, %v6269
        %v6276 = vadd.f32 %v6275, %v6270
        %6277 = vadd.xlane.f32.xlu0 %v6276
        %v6278 = vpop.xlane.xlu0 %6277
        %v6279 = vmul.f32 %v6274, 0.0032051282
        %v6280 = vmul.f32 %v6278, 0.0032051282
        %v6281 = vadd.f32 %v6279, 1e-12
        %v6282 = vadd.f32 %v6280, 1e-12
        %v6283 = vrsqrt.pop %v6281
        %v6284 = vmul.f32 %v6283, %v6281
        %v6285 = vmul.f32 %v6284, %v6283
        %v6286 = vmul.f32 0.5, %v6285
        %v6287 = vsub.f32 1.5, %v6286
        %v6288 = vmul.f32 %v6283, %v6287
        %vm6289 = vweird.f32 %v6281
        %vm6290 = vweird.f32 %v6283
        %vm6291 = vmor %vm6289, %vm6290
        %v6292 = vsel %vm6291, %v6283, %v6288
        %v6293 = vrsqrt.pop %v6282
        %v6294 = vmul.f32 %v6293, %v6282
        %v6295 = vmul.f32 %v6294, %v6293
        %v6296 = vmul.f32 0.5, %v6295
        %v6297 = vsub.f32 1.5, %v6296
        %v6298 = vmul.f32 %v6293, %v6297
        %vm6299 = vweird.f32 %v6282
        %vm6300 = vweird.f32 %v6293
        %vm6301 = vmor %vm6299, %vm6300
        %v6302 = vsel %vm6301, %v6293, %v6298
        %v6303 = vmul.f32 %v6259, %v6292
        %v6304 = vmul.f32 %v6260, %v6292
        %v6305 = vmul.f32 %v6261, %v6292
        %v6306 = vmul.f32 %v6262, %v6302
        %v6307 = vmul.f32 %v6263, %v6302
        %v6308 = vmul.f32 %v6264, %v6302
        %v6310 = vperm.slane %v6240, 0
        %v6311 = vperm.slane %v6240, 1
        %v6312 = vperm.slane %v6240, 2
        %v6316 = vmul.f32 %v6303, %v6310
        %v6317 = vmul.f32 %v6304, %v6311
        %v6318 = vmul.f32 %v6305, %v6312
        %v6319 = vmul.f32 %v6306, %v6310
        %v6320 = vmul.f32 %v6307, %v6311
        %v6321 = vmul.f32 %v6308, %v6312
        %v6323 = vperm.slane %v6242, 0
        %v6324 = vperm.slane %v6242, 1
        %v6325 = vperm.slane %v6242, 2
        %v6329 = vadd.f32 %v6316, %v6323
        %v6330 = vadd.f32 %v6317, %v6324
        %v6331 = vadd.f32 %v6318, %v6325
        %v6332 = vadd.f32 %v6319, %v6323
        %v6333 = vadd.f32 %v6320, %v6324
        %v6334 = vadd.f32 %v6321, %v6325
        %6335 = vst [vmem:[#allocation2] sm:$0xff] %v6329
        %6336 = vst [vmem:[#allocation2 + $0x8] sm:$0xff] %v6330
        %6337 = vst [vmem:[#allocation2 + $0x10] sm:$0xff] %v6331
        %6338 = vst [vmem:[#allocation2 + $0x18] sm:$0xff] %v6332
        %6339 = vst [vmem:[#allocation2 + $0x20] sm:$0xff] %v6333
        %6340 = vst [vmem:[#allocation2 + $0x28] sm:$0xff] %v6334
        %p6341 = scmp.eq.s32.totalorder %s21, 2
        // Predicated region
        $region73: #{tpu_custom_call.1} parent=47 // pred_check
          %p6342 = pneg %p6341
        $region74: #{tpu_custom_call.1} parent=47 // pred_check_branch
          %6344 = sbr.rel (%p6342) target = $region76
        $region75: #{tpu_custom_call.1} parent=47 // pred_region
          %v6345 = vld [vmem:[%s5] sm:$0xff]
          %v6346 = vld [vmem:[%s5 + $0x8] sm:$0xff]
          %v6347 = vld [vmem:[%s5 + $0x10] sm:$0xff]
          %v6348 = vld [vmem:[%s5 + $0x18] sm:$0xff]
          %v6349 = vld [vmem:[%s5 + $0x20] sm:$0xff]
          %v6350 = vld [vmem:[%s5 + $0x28] sm:$0xff]
          %v6351 = vld [vmem:[%s5 + $0x30] sm:$0xff]
          %v6352 = vld [vmem:[%s5 + $0x38] sm:$0xff]
          %v6353 = vld [vmem:[%s5 + $0x40] sm:$0xff]
          %v6354 = vld [vmem:[%s5 + $0x48] sm:$0xff]
          %v6355 = vld [vmem:[%s5 + $0x50] sm:$0xff]
          %v6356 = vld [vmem:[%s5 + $0x58] sm:$0xff]
          %v6357 = vld [vmem:[%s5 + $0x60] sm:$0xff]
          %v6358 = vld [vmem:[%s5 + $0x68] sm:$0xff]
          %v6359 = vld [vmem:[%s5 + $0x70] sm:$0xff]
          %v6360 = vld [vmem:[%s5 + $0x78] sm:$0xff]
          %v6361 = vld [vmem:[%s5 + $0x80] sm:$0xff]
          %v6362 = vld [vmem:[%s5 + $0x88] sm:$0xff]
          %v6363 = vld [vmem:[%s5 + $0x90] sm:$0xff]
          %v6364 = vld [vmem:[%s5 + $0x98] sm:$0xff]
          %v6365 = vld [vmem:[%s5 + $0xa0] sm:$0xff]
          %v6366 = vld [vmem:[%s5 + $0xa8] sm:$0xff]
          %v6367 = vld [vmem:[%s5 + $0xb0] sm:$0xff]
          %v6368 = vld [vmem:[%s5 + $0xb8] sm:$0xff]
          %v6369 = vld [vmem:[%s5 + $0xc0] sm:$0xff]
          %v6370 = vld [vmem:[%s5 + $0xc8] sm:$0xff]
          %v6371 = vld [vmem:[%s5 + $0xd0] sm:$0xff]
          %v6372 = vld [vmem:[%s5 + $0xd8] sm:$0xff]
          %v6373 = vld [vmem:[%s5 + $0xe0] sm:$0xff]
          %v6374 = vld [vmem:[%s5 + $0xe8] sm:$0xff]
          %v6375 = vld [vmem:[%s5 + $0xf0] sm:$0xff]
          %v6376 = vld [vmem:[%s5 + $0xf8] sm:$0xff]
          %v6377 = vld [vmem:[%s5 + $0x100] sm:$0xff]
          %v6378 = vld [vmem:[%s5 + $0x108] sm:$0xff]
          %v6379 = vld [vmem:[%s5 + $0x110] sm:$0xff]
          %v6380 = vld [vmem:[%s5 + $0x118] sm:$0xff]
          %v6381 = vld [vmem:[%s5 + $0x120] sm:$0xff]
          %v6382 = vld [vmem:[%s5 + $0x128] sm:$0xff]
          %v6383 = vld [vmem:[%s5 + $0x130] sm:$0xff]
          %v6384 = vld [vmem:[%s5 + $0x138] sm:$0xff]
          %v6385 = vld [vmem:[%s5 + $0x140] sm:$0xff]
          %v6386 = vld [vmem:[%s5 + $0x148] sm:$0xff]
          %v6387 = vld [vmem:[%s5 + $0x150] sm:$0xff]
          %v6388 = vld [vmem:[%s5 + $0x158] sm:$0xff]
          %v6389 = vld [vmem:[%s5 + $0x160] sm:$0xff]
          %v6390 = vld [vmem:[%s5 + $0x168] sm:$0xff]
          %v6391 = vld [vmem:[%s5 + $0x170] sm:$0xff]
          %v6392 = vld [vmem:[%s5 + $0x178] sm:$0xff]
          %v6393 = vld [vmem:[%s5 + $0x180] sm:$0x1]
          %v6394 = vperm.slane %v6393, 0
          %v6401 = vrot.slane %v6332, 7
          %vm6402 = vcmask 1041409
          %v6403 = vsel %vm6402, %v6401, %v6329
          %v6404 = vrot.slane %v6333, 7
          %v6405 = vsel %vm6402, %v6404, %v6330
          %v6406 = vrot.slane %v6334, 7
          %v6407 = vsel %vm6402, %v6406, %v6331
          %6411 = vmatpush.msra.mxu0 %v6360
          %6412 = vmatpush.msra.mxu0 %v6359
          %6413 = vmatpush.msra.mxu0 %v6358
          %6414 = vmatpush.msra.mxu0 %v6357
          %6415 = vmatpush.msra.mxu0 %v6356
          %6416 = vmatpush.msra.mxu0 %v6355
          %6417 = vmatpush.msra.mxu0 %v6354
          %6418 = vmatpush.msra.mxu0 %v6353
          %6419 = vmatpush.msra.mxu0 %v6352
          %6420 = vmatpush.msra.mxu0 %v6351
          %6421 = vmatpush.msra.mxu0 %v6350
          %6422 = vmatpush.msra.mxu0 %v6349
          %6423 = vmatpush.msra.mxu0 %v6348
          %6424 = vmatpush.msra.mxu0 %v6347
          %6425 = vmatpush.msra.mxu0 %v6346
          %6426 = vmatpush.msra.mxu0 %v6345
          %6427 = vmatmul.f32.gmra.mxu0 %v6403
          %v6428 = vpop.f32.mrf.mxu0
          %v6429 = vadd.f32 %v6394, %v6428
          %6430 = vdwg.mxu0
          %6431 = vmatpush.msra.mxu0 %v6376
          %6432 = vmatpush.msra.mxu0 %v6375
          %6433 = vmatpush.msra.mxu0 %v6374
          %6434 = vmatpush.msra.mxu0 %v6373
          %6435 = vmatpush.msra.mxu0 %v6372
          %6436 = vmatpush.msra.mxu0 %v6371
          %6437 = vmatpush.msra.mxu0 %v6370
          %6438 = vmatpush.msra.mxu0 %v6369
          %6439 = vmatpush.msra.mxu0 %v6368
          %6440 = vmatpush.msra.mxu0 %v6367
          %6441 = vmatpush.msra.mxu0 %v6366
          %6442 = vmatpush.msra.mxu0 %v6365
          %6443 = vmatpush.msra.mxu0 %v6364
          %6444 = vmatpush.msra.mxu0 %v6363
          %6445 = vmatpush.msra.mxu0 %v6362
          %6446 = vmatpush.msra.mxu0 %v6361
          %6447 = vmatmul.f32.gmra.mxu0 %v6405
          %v6448 = vpop.f32.mrf.mxu0
          %v6449 = vadd.f32 %v6429, %v6448
          %6450 = vdwg.mxu0
          %6451 = vmatpush.msra.mxu0 %v6392
          %6452 = vmatpush.msra.mxu0 %v6391
          %6453 = vmatpush.msra.mxu0 %v6390
          %6454 = vmatpush.msra.mxu0 %v6389
          %6455 = vmatpush.msra.mxu0 %v6388
          %6456 = vmatpush.msra.mxu0 %v6387
          %6457 = vmatpush.msra.mxu0 %v6386
          %6458 = vmatpush.msra.mxu0 %v6385
          %6459 = vmatpush.msra.mxu0 %v6384
          %6460 = vmatpush.msra.mxu0 %v6383
          %6461 = vmatpush.msra.mxu0 %v6382
          %6462 = vmatpush.msra.mxu0 %v6381
          %6463 = vmatpush.msra.mxu0 %v6380
          %6464 = vmatpush.msra.mxu0 %v6379
          %6465 = vmatpush.msra.mxu0 %v6378
          %6466 = vmatpush.msra.mxu0 %v6377
          %6467 = vmatmul.f32.gmra.mxu0 %v6407
          %v6468 = vpop.f32.mrf.mxu0
          %v6469 = vadd.f32 %v6449, %v6468
          %6470 = vdwg.mxu0
          %v6471 = vmax.f32 %v6469, 0.0
          %v6472 = vld [vmem:[%s6] sm:$0xff]
          %v6473 = vld [vmem:[%s6 + $0x8] sm:$0xff]
          %v6474 = vld [vmem:[%s6 + $0x10] sm:$0xff]
          %v6475 = vld [vmem:[%s6 + $0x18] sm:$0xff]
          %v6476 = vld [vmem:[%s6 + $0x20] sm:$0x1]
          %v6477 = vperm.slane %v6476, 0
          %v6479 = vsel %vm2312, %v6471, 0
          %6481 = vmatpush.msra.mxu0 0.0
          %6482 = vmatpush.msra.mxu0 0.0
          %6483 = vmatpush.msra.mxu0 0.0
          %6484 = vmatpush.msra.mxu0 0.0
          %6485 = vmatpush.msra.mxu0 0.0
          %6486 = vmatpush.msra.mxu0 0.0
          %6487 = vmatpush.msra.mxu0 0.0
          %6488 = vmatpush.msra.mxu0 0.0
          %6489 = vmatpush.msra.mxu0 0.0
          %6490 = vmatpush.msra.mxu0 0.0
          %6491 = vmatpush.msra.mxu0 0.0
          %6492 = vmatpush.msra.mxu0 0.0
          %6493 = vmatpush.msra.mxu0 %v6475
          %6494 = vmatpush.msra.mxu0 %v6474
          %6495 = vmatpush.msra.mxu0 %v6473
          %6496 = vmatpush.msra.mxu0 %v6472
          %6497 = vmatmul.f32.gmra.mxu0 %v6479
          %v6498 = vpop.f32.mrf.mxu0
          %v6499 = vadd.f32 %v6477, %v6498
          %6500 = vdwg.mxu0
          %vm6501 = vcmask 9216
          %6502 = vst.msk [vmem:[#allocation11] sm:$0x3] %vm6501, %v6499
        $region76: #{tpu_custom_call.1} parent=47 // pred_fallthru
          _
        // Predicated region
        $region77: #{tpu_custom_call.1} parent=47 // pred_check
          %p6503 = pneg %p196
        $region78: #{tpu_custom_call.1} parent=47 // pred_check_branch
          %6505 = sbr.rel (%p6503) target = $region80
        $region79: #{tpu_custom_call.1} parent=47 // pred_region
          %6507 = vsyncadd [#allocation5], 0
          %s6509 = sshll.u32 [#allocation11], 4
          %s6510 = int_to_ptr.vmem [resolvable:$true] %s6509
          %s6511 = sshll.u32 %s7, 4
          %s6512 = int_to_ptr.hbm [resolvable:$true] %s6511
          %6514 = dma.vmem_to_hbm [thread:$0]  %s6510, 32, %s6512, [#allocation5]
        $region80: #{tpu_custom_call.1} parent=47 // pred_fallthru
          _
        // Predicated region
        $region81: #{tpu_custom_call.1} parent=47 // pred_check
          %p6515 = pneg %p196
        $region82: #{tpu_custom_call.1} parent=47 // pred_check_branch
          %6517 = sbr.rel (%p6515) target = $region84
        $region83: #{tpu_custom_call.1} parent=47 // pred_region
          %6519 = dma.done [#allocation5], 32
        $region84: #{tpu_custom_call.1} parent=47 // pred_fallthru
          _
      $region48: #{tpu_custom_call.1} parent=5 // pred_fallthru
        _
      %p6520 = scmp.le.s32.totalorder 2, %s16
      // Predicated region
      $region85: #{tpu_custom_call.1} parent=5 // pred_check
        %p6521 = pneg %p6520
      $region86: #{tpu_custom_call.1} parent=5 // pred_check_branch
        %6523 = sbr.rel (%p6521) target = $region88
      $region87: #{tpu_custom_call.1} parent=5 // pred_region
        %s6524 = ssub.s32 %s16, 2
      $region88: #{tpu_custom_call.1} parent=5 // pred_fallthru
        _
    $region6: #{tpu_custom_call.1} parent=1 // loop_footer
      %s20 = sadd.s32 1, %s16
    $region7: #{tpu_custom_call.1} parent=1 // loop_footer_branch
      %15 = sbr.rel target = $region3
    $region8: #{tpu_custom_call.1} parent=1 // loop_exit
      _
    %6525 = vsyncpa [#allocation4], 1
    %s6526 = scalar_lea.sflag [#allocation4], 1
    %6527 = vsyncpa %s6526, 1
    %6528 = vsyncpa [#allocation7], 1
    %6529 = vsyncpa [#allocation5], 1
    %s6530 = scalar_lea.sflag [#allocation5], 1
    %6531 = vsyncpa %s6530, 1

</llo_original>
